<compile_context>
chip_gen: v7x
topology: tpu7x:2x2x1
jax: 0.10.0
libtpu: 0.0.40
codegen_flags: <defaults>
</compile_context>

<pallas_src>
import functools

import jax
import jax.numpy as jnp
import numpy as np
from jax import lax
from jax.experimental import pallas as pl
from jax.experimental.pallas import tpu as pltpu

EPS = 1e-3


def _round_up(x, m):
    return ((x + m - 1) // m) * m


# --------------------------------------------------------------------------
# Pallas kernels
# --------------------------------------------------------------------------
def _mm_stats_kernel(apply_relu, x_ref, w_ref, o_ref, sum_ref, sq_ref):
    # x_ref : (Kc, TM)   lane-dense activation / im2col-patch tile
    # w_ref : (Co, Kc)   fused (depthwise x pointwise) weight
    # o_ref : (Co, TM)   lane-dense output tile
    # sum_ref/sq_ref : (1, Co, 1) per-tile partial BN statistics
    x = x_ref[...]
    if apply_relu:
        x = jnp.maximum(x, 0.0)
    y = jnp.dot(w_ref[...], x, preferred_element_type=jnp.float32)
    o_ref[...] = y
    sum_ref[...] = jnp.sum(y, axis=1, keepdims=True).reshape(1, -1, 1)
    sq_ref[...] = jnp.sum(y * y, axis=1, keepdims=True).reshape(1, -1, 1)


def matmul_relu_stats(x, w, *, apply_relu, tm=512):
    """y = w @ relu(x) plus per-channel (sum, sum_sq) of y.

    x: (Kc, M) f32, w: (Co, Kc) f32 -> y (Co, M), sum (Co,), sumsq (Co,).
    Zero-padded tail columns contribute 0 to both the output and the stats.
    """
    kc, m = x.shape
    co = w.shape[0]
    tm = min(tm, _round_up(m, 128))
    mp = _round_up(m, tm)
    if mp != m:
        x = jnp.pad(x, ((0, 0), (0, mp - m)))
    g = mp // tm
    y, psum, psq = pl.pallas_call(
        functools.partial(_mm_stats_kernel, apply_relu),
        out_shape=(jax.ShapeDtypeStruct((co, mp), jnp.float32),
                   jax.ShapeDtypeStruct((g, co, 1), jnp.float32),
                   jax.ShapeDtypeStruct((g, co, 1), jnp.float32)),
        grid=(g,),
        in_specs=[pl.BlockSpec((kc, tm), lambda i: (0, i)),
                  pl.BlockSpec((co, kc), lambda i: (0, 0))],
        out_specs=(pl.BlockSpec((co, tm), lambda i: (0, i)),
                   pl.BlockSpec((1, co, 1), lambda i: (i, 0, 0)),
                   pl.BlockSpec((1, co, 1), lambda i: (i, 0, 0))),
        compiler_params=pltpu.CompilerParams(dimension_semantics=("parallel",)),
    )(x.astype(jnp.float32), w.astype(jnp.float32))
    return y[:, :m], psum.sum(axis=(0, 2)), psq.sum(axis=(0, 2))


def _affine_kernel(apply_relu, x_ref, s_ref, b_ref, o_ref):
    y = x_ref[...] * s_ref[...] + b_ref[...]
    if apply_relu:
        y = jnp.maximum(y, 0.0)
    o_ref[...] = y


def _affine_add_kernel(apply_relu, x_ref, s_ref, b_ref, a_ref, o_ref):
    y = x_ref[...] * s_ref[...] + b_ref[...]
    if apply_relu:
        y = jnp.maximum(y, 0.0)
    o_ref[...] = y + a_ref[...]


def _affine2_kernel(x_ref, sx_ref, bx_ref, y_ref, sy_ref, by_ref, o_ref):
    o_ref[...] = (x_ref[...] * sx_ref[...] + bx_ref[...]
                  + y_ref[...] * sy_ref[...] + by_ref[...])


def bn_affine(x, scale, bias, *, relu=False, add=None, tm=512):
    """Per-channel y = x*scale + bias (+relu) (+add).  x: (C, M) CM layout."""
    c, m = x.shape
    tm = min(tm, _round_up(m, 128))
    mp = _round_up(m, tm)
    pad = lambda a: a if mp == m else jnp.pad(a, ((0, 0), (0, mp - m)))
    g = mp // tm
    cm_spec = pl.BlockSpec((c, tm), lambda i: (0, i))
    vec_spec = pl.BlockSpec((c, 1), lambda i: (0, 0))
    args = [pad(x.astype(jnp.float32)),
            scale.reshape(c, 1).astype(jnp.float32),
            bias.reshape(c, 1).astype(jnp.float32)]
    in_specs = [cm_spec, vec_spec, vec_spec]
    if add is None:
        kernel = functools.partial(_affine_kernel, relu)
    else:
        kernel = functools.partial(_affine_add_kernel, relu)
        args.append(pad(add.astype(jnp.float32)))
        in_specs.append(cm_spec)
    out = pl.pallas_call(
        kernel,
        out_shape=jax.ShapeDtypeStruct((c, mp), jnp.float32),
        grid=(g,),
        in_specs=in_specs,
        out_specs=cm_spec,
        compiler_params=pltpu.CompilerParams(dimension_semantics=("parallel",)),
    )(*args)
    return out[:, :m]


def bn_affine2(x, sx, bx, y, sy, by, *, tm=512):
    """(x*sx+bx) + (y*sy+by); x, y: (C, M) CM layout."""
    c, m = x.shape
    tm = min(tm, _round_up(m, 128))
    mp = _round_up(m, tm)
    pad = lambda a: a if mp == m else jnp.pad(a, ((0, 0), (0, mp - m)))
    g = mp // tm
    cm_spec = pl.BlockSpec((c, tm), lambda i: (0, i))
    vec_spec = pl.BlockSpec((c, 1), lambda i: (0, 0))
    out = pl.pallas_call(
        _affine2_kernel,
        out_shape=jax.ShapeDtypeStruct((c, mp), jnp.float32),
        grid=(g,),
        in_specs=[cm_spec, vec_spec, vec_spec, cm_spec, vec_spec, vec_spec],
        out_specs=cm_spec,
        compiler_params=pltpu.CompilerParams(dimension_semantics=("parallel",)),
    )(pad(x.astype(jnp.float32)),
      sx.reshape(c, 1).astype(jnp.float32), bx.reshape(c, 1).astype(jnp.float32),
      pad(y.astype(jnp.float32)),
      sy.reshape(c, 1).astype(jnp.float32), by.reshape(c, 1).astype(jnp.float32))
    return out[:, :m]


# --------------------------------------------------------------------------
# Glue: BN scale/bias from fused stats, im2col, pooling
# --------------------------------------------------------------------------
def bn_scale_bias(ssum, ssq, count, gamma, beta, eps=EPS):
    mean = ssum / count
    var = jnp.maximum(ssq / count - mean * mean, 0.0)   # biased (training mode)
    scale = gamma / jnp.sqrt(var + eps)
    return scale, beta - mean * scale


def im2col_cm(x_sp, k, s, p):
    """x_sp: (C, N, H, W) -> patches (k*k*C, N*Ho*Wo), Ho, Wo.

    Row index is t*C + c with tap t = i*k + j, matching fuse_dw_pw().
    """
    c, n, h, w = x_sp.shape
    xp = jnp.pad(x_sp, ((0, 0), (0, 0), (p, p), (p, p)))
    ho = (h + 2 * p - k) // s + 1
    wo = (w + 2 * p - k) // s + 1
    taps = [xp[:, :, i:i + s * (ho - 1) + 1:s, j:j + s * (wo - 1) + 1:s]
            for i in range(k) for j in range(k)]
    pat = jnp.stack(taps, axis=0)                        # (k2, C, N, Ho, Wo)
    return pat.reshape(k * k * c, n * ho * wo), ho, wo


def max_pool_cm(x_sp, k, s, p):
    return lax.reduce_window(x_sp, jnp.float32(-jnp.inf), lax.max,
                             (1, 1, k, k), (1, 1, s, s),
                             ((0, 0), (0, 0), (p, p), (p, p)))


def avg_pool_cm(x_sp, k, s, p):
    # count_include_pad=False
    tot = lax.reduce_window(x_sp, jnp.float32(0), lax.add,
                            (1, 1, k, k), (1, 1, s, s),
                            ((0, 0), (0, 0), (p, p), (p, p)))
    cnt = lax.reduce_window(jnp.ones_like(x_sp[:1, :1]), jnp.float32(0), lax.add,
                            (1, 1, k, k), (1, 1, s, s),
                            ((0, 0), (0, 0), (p, p), (p, p)))
    return tot / cnt


# --------------------------------------------------------------------------
# Branch and cell forward
# --------------------------------------------------------------------------
def sep_branch(x_sp, prm, *, k, s, p):
    """BranchSeparables / BranchSeparablesStem minus the final bn2 apply.

    relu -> sepconv1(stride s) -> bn1 -> relu -> sepconv2(stride 1).
    Returns (y2 (Cout, N, Ho, Wo) pre-bn2, scale2, bias2) so the caller can
    fuse bn2 with the branch-combination add.
    """
    c, n, _, _ = x_sp.shape
    cmid = prm["g1"].shape[0]
    cout = prm["g2"].shape[0]
    # separable_1 (ReLU is applied in-kernel: relu(0)=0 so it commutes with
    # the spatial zero padding and the im2col gather)
    p1, ho, wo = im2col_cm(x_sp, k, s, p)
    y1, s1, q1 = matmul_relu_stats(p1, prm["wf1"], apply_relu=True)
    sc1, bi1 = bn_scale_bias(s1, q1, n * ho * wo, prm["g1"], prm["b1"])
    z1 = bn_affine(y1, sc1, bi1, relu=True).reshape(cmid, n, ho, wo)
    # separable_2 (stride 1, same padding -> same spatial dims; input already
    # ReLU'd, padded zeros already valid -> no in-kernel ReLU)
    p2, ho2, wo2 = im2col_cm(z1, k, 1, p)
    y2, s2, q2 = matmul_relu_stats(p2, prm["wf2"], apply_relu=False)
    sc2, bi2 = bn_scale_bias(s2, q2, n * ho2 * wo2, prm["g2"], prm["b2"])
    return y2.reshape(cout, n, ho2, wo2), sc2, bi2


def cell_stem0_forward(x_nchw, params):
    n, c, h, w = x_nchw.shape
    f = params["conv1_g"].shape[0]
    x_sp = jnp.transpose(x_nchw, (1, 0, 2, 3)).astype(jnp.float32)   # (C, N, H, W)

    # conv_1x1 : relu -> 1x1 conv -> bn (batch stats)
    y, s0, q0 = matmul_relu_stats(x_sp.reshape(c, n * h * w),
                                  params["conv1_w"], apply_relu=True)
    sc0, bi0 = bn_scale_bias(s0, q0, n * h * w, params["conv1_g"], params["conv1_b"])
    x1_sp = bn_affine(y, sc0, bi0, relu=False).reshape(f, n, h, w)

    # separable branches (their bn2 is fused into the combination adds below)
    y0l, s0l, b0l = sep_branch(x1_sp, params["b0L"], k=5, s=2, p=2)
    y0r, s0r, b0r = sep_branch(x_sp, params["b0R"], k=7, s=2, p=3)
    y1r, s1r, b1r = sep_branch(x_sp, params["b1R"], k=7, s=2, p=3)
    y2r, s2r, b2r = sep_branch(x_sp, params["b2R"], k=5, s=2, p=2)

    ho, wo = y0l.shape[2], y0l.shape[3]
    mo = n * ho * wo
    flat = lambda t: t.reshape(t.shape[0], mo)

    # x_comb_iter_0 = bn(sep(x1)) + bn(sep(x))
    comb0 = bn_affine2(flat(y0l), s0l, b0l, flat(y0r), s0r, b0r)
    comb0_sp = comb0.reshape(f, n, ho, wo)

    maxp_x1 = flat(max_pool_cm(x1_sp, 3, 2, 1))     # comb_iter_1_left == comb_iter_4_right
    avgp_x1 = flat(avg_pool_cm(x1_sp, 3, 2, 1))

    comb1 = bn_affine(flat(y1r), s1r, b1r, add=maxp_x1)
    comb2 = bn_affine(flat(y2r), s2r, b2r, add=avgp_x1)
    comb3 = flat(avg_pool_cm(comb0_sp, 3, 1, 1)) + comb1

    y4l, s4l, b4l = sep_branch(comb0_sp, params["b4L"], k=3, s=1, p=1)
    comb4 = bn_affine(flat(y4l), s4l, b4l, add=maxp_x1)

    out_cm = jnp.concatenate([comb1, comb2, comb3, comb4], axis=0)   # (4F, M)
    return jnp.transpose(out_cm.reshape(4 * f, n, ho, wo), (1, 0, 2, 3))


# --------------------------------------------------------------------------
# Parameter construction (PyTorch layouts -> fused kernel layouts)
# --------------------------------------------------------------------------
def fuse_dw_pw(dw, pw):
    """dw: (Cin,1,k,k), pw: (Co,Cin,1,1) -> (Co, k*k*Cin), col index t*Cin + c."""
    cin, _, k, _ = dw.shape
    dwr = jnp.transpose(dw[:, 0], (1, 2, 0)).reshape(k * k, cin)   # [t, c] = dw[c,0,i,j]
    pwm = pw[:, :, 0, 0]                                            # (Co, Cin)
    return (pwm[:, None, :] * dwr[None, :, :]).reshape(pw.shape[0], k * k * cin)


def make_branch_params(key, cin, cmid, cout, k, wscale=0.3):
    ks = jax.random.split(key, 8)
    dw1 = wscale * jax.random.normal(ks[0], (cin, 1, k, k), jnp.float32)
    pw1 = wscale * jax.random.normal(ks[1], (cmid, cin, 1, 1), jnp.float32)
    dw2 = wscale * jax.random.normal(ks[2], (cmid, 1, k, k), jnp.float32)
    pw2 = wscale * jax.random.normal(ks[3], (cout, cmid, 1, 1), jnp.float32)
    g1 = 1.0 + 0.1 * jax.random.normal(ks[4], (cmid,), jnp.float32)
    b1 = 0.1 * jax.random.normal(ks[5], (cmid,), jnp.float32)
    g2 = 1.0 + 0.1 * jax.random.normal(ks[6], (cout,), jnp.float32)
    b2 = 0.1 * jax.random.normal(ks[7], (cout,), jnp.float32)
    ref = dict(dw1=dw1, pw1=pw1, dw2=dw2, pw2=pw2, g1=g1, b1=b1, g2=g2, b2=b2)
    ker = dict(wf1=fuse_dw_pw(dw1, pw1), wf2=fuse_dw_pw(dw2, pw2),
               g1=g1, b1=b1, g2=g2, b2=b2)
    return ref, ker


# --------------------------------------------------------------------------
# Pure-JAX reference (mirrors the PyTorch CellStem0 forward, NCHW)
# --------------------------------------------------------------------------
def reference_cell_stem0(x, rp):
    hp = lax.Precision.HIGHEST

    def dwconv(t, wgt, st, pd):
        return lax.conv_general_dilated(
            t, wgt, (st, st), ((pd, pd), (pd, pd)),
            dimension_numbers=("NCHW", "OIHW", "NCHW"),
            feature_group_count=t.shape[1], precision=hp)

    def pwconv(t, wgt):
        return lax.conv_general_dilated(
            t, wgt, (1, 1), ((0, 0), (0, 0)),
            dimension_numbers=("NCHW", "OIHW", "NCHW"), precision=hp)

    def bn(t, g, b):
        mu = t.mean(axis=(0, 2, 3), keepdims=True)
        var = t.var(axis=(0, 2, 3), keepdims=True)
        return ((t - mu) / jnp.sqrt(var + EPS) * g.reshape(1, -1, 1, 1)
                + b.reshape(1, -1, 1, 1))

    def branch(t, p, s, pd):
        t = jax.nn.relu(t)
        t = pwconv(dwconv(t, p["dw1"], s, pd), p["pw1"])
        t = jax.nn.relu(bn(t, p["g1"], p["b1"]))
        t = pwconv(dwconv(t, p["dw2"], 1, pd), p["pw2"])
        return bn(t, p["g2"], p["b2"])

    def maxpool(t, k, s, pd):
        return lax.reduce_window(t, jnp.float32(-jnp.inf), lax.max,
                                 (1, 1, k, k), (1, 1, s, s),
                                 ((0, 0), (0, 0), (pd, pd), (pd, pd)))

    def avgpool(t, k, s, pd):
        tot = lax.reduce_window(t, jnp.float32(0), lax.add, (1, 1, k, k),
                                (1, 1, s, s), ((0, 0), (0, 0), (pd, pd), (pd, pd)))
        cnt = lax.reduce_window(jnp.ones_like(t), jnp.float32(0), lax.add,
                                (1, 1, k, k), (1, 1, s, s),
                                ((0, 0), (0, 0), (pd, pd), (pd, pd)))
        return tot / cnt

    x1 = bn(pwconv(jax.nn.relu(x), rp["conv1_w4"]), rp["conv1_g"], rp["conv1_b"])
    c0 = branch(x1, rp["b0L"], 2, 2) + branch(x, rp["b0R"], 2, 3)
    c1 = maxpool(x1, 3, 2, 1) + branch(x, rp["b1R"], 2, 3)
    c2 = avgpool(x1, 3, 2, 1) + branch(x, rp["b2R"], 2, 2)
    c3 = avgpool(c0, 3, 1, 1) + c1
    c4 = branch(c0, rp["b4L"], 1, 1) + maxpool(x1, 3, 2, 1)
    return jnp.concatenate([c1, c2, c3, c4], axis=1)


# --------------------------------------------------------------------------
if __name__ == "__main__":
    N, C, H, W = 2, 8, 16, 16      # batch, stem_filters, spatial
    F = 16                         # num_filters

    root = jax.random.PRNGKey(0)
    kx, kcw, kcg, kcb, k0l, k0r, k1r, k2r, k4l = jax.random.split(root, 9)
    x = jax.random.normal(kx, (N, C, H, W), jnp.float32)

    conv1_w4 = 0.3 * jax.random.normal(kcw, (F, C, 1, 1), jnp.float32)
    conv1_g = 1.0 + 0.1 * jax.random.normal(kcg, (F,), jnp.float32)
    conv1_b = 0.1 * jax.random.normal(kcb, (F,), jnp.float32)

    # branch params:                cin cmid cout  k
    r0l, p0l = make_branch_params(k0l, F, F, F, 5)   # comb_iter_0_left  (5,2,2) on x1
    r0r, p0r = make_branch_params(k0r, C, F, F, 7)   # comb_iter_0_right (7,2,3) on x
    r1r, p1r = make_branch_params(k1r, C, F, F, 7)   # comb_iter_1_right (7,2,3) on x
    r2r, p2r = make_branch_params(k2r, C, F, F, 5)   # comb_iter_2_right (5,2,2) on x
    r4l, p4l = make_branch_params(k4l, F, F, F, 3)   # comb_iter_4_left  (3,1,1) on comb0

    kparams = dict(conv1_w=conv1_w4[:, :, 0, 0], conv1_g=conv1_g, conv1_b=conv1_b,
                   b0L=p0l, b0R=p0r, b1R=p1r, b2R=p2r, b4L=p4l)
    rparams = dict(conv1_w4=conv1_w4, conv1_g=conv1_g, conv1_b=conv1_b,
                   b0L=r0l, b0R=r0r, b1R=r1r, b2R=r2r, b4L=r4l)

    fwd = jax.jit(cell_stem0_forward)
    out = jax.block_until_ready(fwd(x, kparams))
    assert out.shape == (N, 4 * F, H // 2, W // 2), out.shape

    ref = reference_cell_stem0(x, rparams)
    err = float(np.max(np.abs(np.asarray(out) - np.asarray(ref))))
    assert np.allclose(np.asarray(out), np.asarray(ref), rtol=2e-3, atol=2e-3), err
    print("KERNEL_OK")
</pallas_src>

<mosaic_0001>
module attributes {stable_mosaic.version = 11 : i64} {
  func.func @_mm_stats_kernel(%arg0: i32, %arg1: memref<200x128xf32, #tpu.memory_space<vmem>>, %arg2: memref<16x200xf32, #tpu.memory_space<vmem>>, %arg3: memref<16x128xf32, #tpu.memory_space<vmem>>, %arg4: memref<1x16x1xf32, #tpu.memory_space<vmem>>, %arg5: memref<1x16x1xf32, #tpu.memory_space<vmem>>) attributes {dimension_semantics = [#tpu.dimension_semantics<parallel>], iteration_bounds = array<i64: 1>, scalar_prefetch = 0 : i64, scratch_operands = 0 : i64, tpu.core_type = #tpu.core_type<tc>, window_params = [{transform_indices = @transform_0, window_bounds = array<i64: 200, 128>}, {pipeline_mode = #tpu.pipeline_mode<synchronous>, transform_indices = @transform_1, window_bounds = array<i64: 16, 200>}, {transform_indices = @transform_2, window_bounds = array<i64: 16, 128>}, {transform_indices = @transform_3, window_bounds = array<i64: 1, 16, 1>}, {transform_indices = @transform_4, window_bounds = array<i64: 1, 16, 1>}]} {
    %c0 = arith.constant 0 : index
    %c0_0 = arith.constant 0 : index
    %0 = vector.load %arg1[%c0, %c0_0] : memref<200x128xf32, #tpu.memory_space<vmem>>, vector<200x128xf32>
    %cst = arith.constant 0.000000e+00 : f32
    %1 = vector.broadcast %cst : f32 to vector<200x128xf32>
    %2 = arith.maximumf %0, %1 : vector<200x128xf32>
    %c0_1 = arith.constant 0 : index
    %c0_2 = arith.constant 0 : index
    %3 = vector.load %arg2[%c0_1, %c0_2] : memref<16x200xf32, #tpu.memory_space<vmem>>, vector<16x200xf32>
    %cst_3 = arith.constant dense<0.000000e+00> : vector<16x128xf32>
    %4 = tpu.matmul %3, %2, %cst_3 {dimension_numbers = #tpu.dot_dimension_numbers<[1], [0], [0], [1], [0, 0, 1, 1], [], []>} : vector<16x200xf32>, vector<200x128xf32>, vector<16x128xf32> -> vector<16x128xf32>
    %c0_4 = arith.constant 0 : index
    %c0_5 = arith.constant 0 : index
    %5 = vector.load %arg3[%c0_4, %c0_5] : memref<16x128xf32, #tpu.memory_space<vmem>>, vector<16x128xf32>
    tpu.vector_store %arg3[%c0_4, %c0_5], %4 {strides = array<i32>} : memref<16x128xf32, #tpu.memory_space<vmem>>, vector<16x128xf32>,
    %cst_6 = arith.constant dense<0.000000e+00> : vector<16xf32>
    %6 = vector.multi_reduction <add>, %4, %cst_6 [1] : vector<16x128xf32> to vector<16xf32>
    %7 = vector.shape_cast %6 : vector<16xf32> to vector<16x1xf32>
    %8 = vector.shape_cast %7 : vector<16x1xf32> to vector<1x16x1xf32>
    %c0_7 = arith.constant 0 : index
    %c0_8 = arith.constant 0 : index
    %c0_9 = arith.constant 0 : index
    %9 = vector.load %arg4[%c0_7, %c0_8, %c0_9] : memref<1x16x1xf32, #tpu.memory_space<vmem>>, vector<1x16x1xf32>
    tpu.vector_store %arg4[%c0_7, %c0_8, %c0_9], %8 {strides = array<i32>} : memref<1x16x1xf32, #tpu.memory_space<vmem>>, vector<1x16x1xf32>,
    %10 = arith.mulf %4, %4 : vector<16x128xf32>
    %cst_10 = arith.constant dense<0.000000e+00> : vector<16xf32>
    %11 = vector.multi_reduction <add>, %10, %cst_10 [1] : vector<16x128xf32> to vector<16xf32>
    %12 = vector.shape_cast %11 : vector<16xf32> to vector<16x1xf32>
    %13 = vector.shape_cast %12 : vector<16x1xf32> to vector<1x16x1xf32>
    %c0_11 = arith.constant 0 : index
    %c0_12 = arith.constant 0 : index
    %c0_13 = arith.constant 0 : index
    %14 = vector.load %arg5[%c0_11, %c0_12, %c0_13] : memref<1x16x1xf32, #tpu.memory_space<vmem>>, vector<1x16x1xf32>
    tpu.vector_store %arg5[%c0_11, %c0_12, %c0_13], %13 {strides = array<i32>} : memref<1x16x1xf32, #tpu.memory_space<vmem>>, vector<1x16x1xf32>,
    return
  }
  func.func @transform_0(%arg0: i32) -> (i32, i32) {
    %c0_i32 = arith.constant 0 : i32
    %c0_i32_0 = arith.constant 0 : i32
    return %c0_i32, %arg0 : i32, i32
  }
  func.func @transform_1(%arg0: i32) -> (i32, i32) {
    %c0_i32 = arith.constant 0 : i32
    %c0_i32_0 = arith.constant 0 : i32
    %c0_i32_1 = arith.constant 0 : i32
    return %c0_i32, %c0_i32_0 : i32, i32
  }
  func.func @transform_2(%arg0: i32) -> (i32, i32) {
    %c0_i32 = arith.constant 0 : i32
    %c0_i32_0 = arith.constant 0 : i32
    return %c0_i32, %arg0 : i32, i32
  }
  func.func @transform_3(%arg0: i32) -> (i32, i32, i32) {
    %c0_i32 = arith.constant 0 : i32
    %c0_i32_0 = arith.constant 0 : i32
    %c0_i32_1 = arith.constant 0 : i32
    return %arg0, %c0_i32, %c0_i32_0 : i32, i32, i32
  }
  func.func @transform_4(%arg0: i32) -> (i32, i32, i32) {
    %c0_i32 = arith.constant 0 : i32
    %c0_i32_0 = arith.constant 0 : i32
    %c0_i32_1 = arith.constant 0 : i32
    return %arg0, %c0_i32, %c0_i32_0 : i32, i32, i32
  }
}

module attributes {stable_mosaic.version = 11 : i64} {
  func.func @_affine_kernel(%arg0: i32, %arg1: memref<16x128xf32, #tpu.memory_space<vmem>>, %arg2: memref<16x1xf32, #tpu.memory_space<vmem>>, %arg3: memref<16x1xf32, #tpu.memory_space<vmem>>, %arg4: memref<16x128xf32, #tpu.memory_space<vmem>>) attributes {dimension_semantics = [#tpu.dimension_semantics<parallel>], iteration_bounds = array<i64: 1>, scalar_prefetch = 0 : i64, scratch_operands = 0 : i64, tpu.core_type = #tpu.core_type<tc>, window_params = [{transform_indices = @transform_0, window_bounds = array<i64: 16, 128>}, {pipeline_mode = #tpu.pipeline_mode<synchronous>, transform_indices = @transform_1, window_bounds = array<i64: 16, 1>}, {pipeline_mode = #tpu.pipeline_mode<synchronous>, transform_indices = @transform_2, window_bounds = array<i64: 16, 1>}, {transform_indices = @transform_3, window_bounds = array<i64: 16, 128>}]} {
    %c0 = arith.constant 0 : index
    %c0_0 = arith.constant 0 : index
    %0 = vector.load %arg1[%c0, %c0_0] : memref<16x128xf32, #tpu.memory_space<vmem>>, vector<16x128xf32>
    %c0_1 = arith.constant 0 : index
    %c0_2 = arith.constant 0 : index
    %1 = vector.load %arg2[%c0_1, %c0_2] : memref<16x1xf32, #tpu.memory_space<vmem>>, vector<16x1xf32>
    %2 = vector.broadcast %1 : vector<16x1xf32> to vector<16x128xf32>
    %3 = arith.mulf %0, %2 : vector<16x128xf32>
    %c0_3 = arith.constant 0 : index
    %c0_4 = arith.constant 0 : index
    %4 = vector.load %arg3[%c0_3, %c0_4] : memref<16x1xf32, #tpu.memory_space<vmem>>, vector<16x1xf32>
    %5 = vector.broadcast %4 : vector<16x1xf32> to vector<16x128xf32>
    %6 = arith.addf %3, %5 : vector<16x128xf32>
    %cst = arith.constant 0.000000e+00 : f32
    %7 = vector.broadcast %cst : f32 to vector<16x128xf32>
    %8 = arith.maximumf %6, %7 : vector<16x128xf32>
    %c0_5 = arith.constant 0 : index
    %c0_6 = arith.constant 0 : index
    %9 = vector.load %arg4[%c0_5, %c0_6] : memref<16x128xf32, #tpu.memory_space<vmem>>, vector<16x128xf32>
    tpu.vector_store %arg4[%c0_5, %c0_6], %8 {strides = array<i32>} : memref<16x128xf32, #tpu.memory_space<vmem>>, vector<16x128xf32>,
    return
  }
  func.func @transform_0(%arg0: i32) -> (i32, i32) {
    %c0_i32 = arith.constant 0 : i32
    %c0_i32_0 = arith.constant 0 : i32
    return %c0_i32, %arg0 : i32, i32
  }
  func.func @transform_1(%arg0: i32) -> (i32, i32) {
    %c0_i32 = arith.constant 0 : i32
    %c0_i32_0 = arith.constant 0 : i32
    %c0_i32_1 = arith.constant 0 : i32
    return %c0_i32, %c0_i32_0 : i32, i32
  }
  func.func @transform_2(%arg0: i32) -> (i32, i32) {
    %c0_i32 = arith.constant 0 : i32
    %c0_i32_0 = arith.constant 0 : i32
    %c0_i32_1 = arith.constant 0 : i32
    return %c0_i32, %c0_i32_0 : i32, i32
  }
  func.func @transform_3(%arg0: i32) -> (i32, i32) {
    %c0_i32 = arith.constant 0 : i32
    %c0_i32_0 = arith.constant 0 : i32
    return %c0_i32, %arg0 : i32, i32
  }
}

module attributes {stable_mosaic.version = 11 : i64} {
  func.func @_mm_stats_kernel(%arg0: i32, %arg1: memref<400x128xf32, #tpu.memory_space<vmem>>, %arg2: memref<16x400xf32, #tpu.memory_space<vmem>>, %arg3: memref<16x128xf32, #tpu.memory_space<vmem>>, %arg4: memref<1x16x1xf32, #tpu.memory_space<vmem>>, %arg5: memref<1x16x1xf32, #tpu.memory_space<vmem>>) attributes {dimension_semantics = [#tpu.dimension_semantics<parallel>], iteration_bounds = array<i64: 1>, scalar_prefetch = 0 : i64, scratch_operands = 0 : i64, tpu.core_type = #tpu.core_type<tc>, window_params = [{transform_indices = @transform_0, window_bounds = array<i64: 400, 128>}, {pipeline_mode = #tpu.pipeline_mode<synchronous>, transform_indices = @transform_1, window_bounds = array<i64: 16, 400>}, {transform_indices = @transform_2, window_bounds = array<i64: 16, 128>}, {transform_indices = @transform_3, window_bounds = array<i64: 1, 16, 1>}, {transform_indices = @transform_4, window_bounds = array<i64: 1, 16, 1>}]} {
    %c0 = arith.constant 0 : index
    %c0_0 = arith.constant 0 : index
    %0 = vector.load %arg1[%c0, %c0_0] : memref<400x128xf32, #tpu.memory_space<vmem>>, vector<400x128xf32>
    %c0_1 = arith.constant 0 : index
    %c0_2 = arith.constant 0 : index
    %1 = vector.load %arg2[%c0_1, %c0_2] : memref<16x400xf32, #tpu.memory_space<vmem>>, vector<16x400xf32>
    %cst = arith.constant dense<0.000000e+00> : vector<16x128xf32>
    %2 = tpu.matmul %1, %0, %cst {dimension_numbers = #tpu.dot_dimension_numbers<[1], [0], [0], [1], [0, 0, 1, 1], [], []>} : vector<16x400xf32>, vector<400x128xf32>, vector<16x128xf32> -> vector<16x128xf32>
    %c0_3 = arith.constant 0 : index
    %c0_4 = arith.constant 0 : index
    %3 = vector.load %arg3[%c0_3, %c0_4] : memref<16x128xf32, #tpu.memory_space<vmem>>, vector<16x128xf32>
    tpu.vector_store %arg3[%c0_3, %c0_4], %2 {strides = array<i32>} : memref<16x128xf32, #tpu.memory_space<vmem>>, vector<16x128xf32>,
    %cst_5 = arith.constant dense<0.000000e+00> : vector<16xf32>
    %4 = vector.multi_reduction <add>, %2, %cst_5 [1] : vector<16x128xf32> to vector<16xf32>
    %5 = vector.shape_cast %4 : vector<16xf32> to vector<16x1xf32>
    %6 = vector.shape_cast %5 : vector<16x1xf32> to vector<1x16x1xf32>
    %c0_6 = arith.constant 0 : index
    %c0_7 = arith.constant 0 : index
    %c0_8 = arith.constant 0 : index
    %7 = vector.load %arg4[%c0_6, %c0_7, %c0_8] : memref<1x16x1xf32, #tpu.memory_space<vmem>>, vector<1x16x1xf32>
    tpu.vector_store %arg4[%c0_6, %c0_7, %c0_8], %6 {strides = array<i32>} : memref<1x16x1xf32, #tpu.memory_space<vmem>>, vector<1x16x1xf32>,
    %8 = arith.mulf %2, %2 : vector<16x128xf32>
    %cst_9 = arith.constant dense<0.000000e+00> : vector<16xf32>
    %9 = vector.multi_reduction <add>, %8, %cst_9 [1] : vector<16x128xf32> to vector<16xf32>
    %10 = vector.shape_cast %9 : vector<16xf32> to vector<16x1xf32>
    %11 = vector.shape_cast %10 : vector<16x1xf32> to vector<1x16x1xf32>
    %c0_10 = arith.constant 0 : index
    %c0_11 = arith.constant 0 : index
    %c0_12 = arith.constant 0 : index
    %12 = vector.load %arg5[%c0_10, %c0_11, %c0_12] : memref<1x16x1xf32, #tpu.memory_space<vmem>>, vector<1x16x1xf32>
    tpu.vector_store %arg5[%c0_10, %c0_11, %c0_12], %11 {strides = array<i32>} : memref<1x16x1xf32, #tpu.memory_space<vmem>>, vector<1x16x1xf32>,
    return
  }
  func.func @transform_0(%arg0: i32) -> (i32, i32) {
    %c0_i32 = arith.constant 0 : i32
    %c0_i32_0 = arith.constant 0 : i32
    return %c0_i32, %arg0 : i32, i32
  }
  func.func @transform_1(%arg0: i32) -> (i32, i32) {
    %c0_i32 = arith.constant 0 : i32
    %c0_i32_0 = arith.constant 0 : i32
    %c0_i32_1 = arith.constant 0 : i32
    return %c0_i32, %c0_i32_0 : i32, i32
  }
  func.func @transform_2(%arg0: i32) -> (i32, i32) {
    %c0_i32 = arith.constant 0 : i32
    %c0_i32_0 = arith.constant 0 : i32
    return %c0_i32, %arg0 : i32, i32
  }
  func.func @transform_3(%arg0: i32) -> (i32, i32, i32) {
    %c0_i32 = arith.constant 0 : i32
    %c0_i32_0 = arith.constant 0 : i32
    %c0_i32_1 = arith.constant 0 : i32
    return %arg0, %c0_i32, %c0_i32_0 : i32, i32, i32
  }
  func.func @transform_4(%arg0: i32) -> (i32, i32, i32) {
    %c0_i32 = arith.constant 0 : i32
    %c0_i32_0 = arith.constant 0 : i32
    %c0_i32_1 = arith.constant 0 : i32
    return %arg0, %c0_i32, %c0_i32_0 : i32, i32, i32
  }
}

module attributes {stable_mosaic.version = 11 : i64} {
  func.func @_mm_stats_kernel(%arg0: i32, %arg1: memref<8x512xf32, #tpu.memory_space<vmem>>, %arg2: memref<16x8xf32, #tpu.memory_space<vmem>>, %arg3: memref<16x512xf32, #tpu.memory_space<vmem>>, %arg4: memref<1x16x1xf32, #tpu.memory_space<vmem>>, %arg5: memref<1x16x1xf32, #tpu.memory_space<vmem>>) attributes {dimension_semantics = [#tpu.dimension_semantics<parallel>], iteration_bounds = array<i64: 1>, scalar_prefetch = 0 : i64, scratch_operands = 0 : i64, tpu.core_type = #tpu.core_type<tc>, window_params = [{transform_indices = @transform_0, window_bounds = array<i64: 8, 512>}, {pipeline_mode = #tpu.pipeline_mode<synchronous>, transform_indices = @transform_1, window_bounds = array<i64: 16, 8>}, {transform_indices = @transform_2, window_bounds = array<i64: 16, 512>}, {transform_indices = @transform_3, window_bounds = array<i64: 1, 16, 1>}, {transform_indices = @transform_4, window_bounds = array<i64: 1, 16, 1>}]} {
    %c0 = arith.constant 0 : index
    %c0_0 = arith.constant 0 : index
    %0 = vector.load %arg1[%c0, %c0_0] : memref<8x512xf32, #tpu.memory_space<vmem>>, vector<8x512xf32>
    %cst = arith.constant 0.000000e+00 : f32
    %1 = vector.broadcast %cst : f32 to vector<8x512xf32>
    %2 = arith.maximumf %0, %1 : vector<8x512xf32>
    %c0_1 = arith.constant 0 : index
    %c0_2 = arith.constant 0 : index
    %3 = vector.load %arg2[%c0_1, %c0_2] : memref<16x8xf32, #tpu.memory_space<vmem>>, vector<16x8xf32>
    %cst_3 = arith.constant dense<0.000000e+00> : vector<16x512xf32>
    %4 = tpu.matmul %3, %2, %cst_3 {dimension_numbers = #tpu.dot_dimension_numbers<[1], [0], [0], [1], [0, 0, 1, 1], [], []>} : vector<16x8xf32>, vector<8x512xf32>, vector<16x512xf32> -> vector<16x512xf32>
    %c0_4 = arith.constant 0 : index
    %c0_5 = arith.constant 0 : index
    %5 = vector.load %arg3[%c0_4, %c0_5] : memref<16x512xf32, #tpu.memory_space<vmem>>, vector<16x512xf32>
    tpu.vector_store %arg3[%c0_4, %c0_5], %4 {strides = array<i32>} : memref<16x512xf32, #tpu.memory_space<vmem>>, vector<16x512xf32>,
    %cst_6 = arith.constant dense<0.000000e+00> : vector<16xf32>
    %6 = vector.multi_reduction <add>, %4, %cst_6 [1] : vector<16x512xf32> to vector<16xf32>
    %7 = vector.shape_cast %6 : vector<16xf32> to vector<16x1xf32>
    %8 = vector.shape_cast %7 : vector<16x1xf32> to vector<1x16x1xf32>
    %c0_7 = arith.constant 0 : index
    %c0_8 = arith.constant 0 : index
    %c0_9 = arith.constant 0 : index
    %9 = vector.load %arg4[%c0_7, %c0_8, %c0_9] : memref<1x16x1xf32, #tpu.memory_space<vmem>>, vector<1x16x1xf32>
    tpu.vector_store %arg4[%c0_7, %c0_8, %c0_9], %8 {strides = array<i32>} : memref<1x16x1xf32, #tpu.memory_space<vmem>>, vector<1x16x1xf32>,
    %10 = arith.mulf %4, %4 : vector<16x512xf32>
    %cst_10 = arith.constant dense<0.000000e+00> : vector<16xf32>
    %11 = vector.multi_reduction <add>, %10, %cst_10 [1] : vector<16x512xf32> to vector<16xf32>
    %12 = vector.shape_cast %11 : vector<16xf32> to vector<16x1xf32>
    %13 = vector.shape_cast %12 : vector<16x1xf32> to vector<1x16x1xf32>
    %c0_11 = arith.constant 0 : index
    %c0_12 = arith.constant 0 : index
    %c0_13 = arith.constant 0 : index
    %14 = vector.load %arg5[%c0_11, %c0_12, %c0_13] : memref<1x16x1xf32, #tpu.memory_space<vmem>>, vector<1x16x1xf32>
    tpu.vector_store %arg5[%c0_11, %c0_12, %c0_13], %13 {strides = array<i32>} : memref<1x16x1xf32, #tpu.memory_space<vmem>>, vector<1x16x1xf32>,
    return
  }
  func.func @transform_0(%arg0: i32) -> (i32, i32) {
    %c0_i32 = arith.constant 0 : i32
    %c0_i32_0 = arith.constant 0 : i32
    return %c0_i32, %arg0 : i32, i32
  }
  func.func @transform_1(%arg0: i32) -> (i32, i32) {
    %c0_i32 = arith.constant 0 : i32
    %c0_i32_0 = arith.constant 0 : i32
    %c0_i32_1 = arith.constant 0 : i32
    return %c0_i32, %c0_i32_0 : i32, i32
  }
  func.func @transform_2(%arg0: i32) -> (i32, i32) {
    %c0_i32 = arith.constant 0 : i32
    %c0_i32_0 = arith.constant 0 : i32
    return %c0_i32, %arg0 : i32, i32
  }
  func.func @transform_3(%arg0: i32) -> (i32, i32, i32) {
    %c0_i32 = arith.constant 0 : i32
    %c0_i32_0 = arith.constant 0 : i32
    %c0_i32_1 = arith.constant 0 : i32
    return %arg0, %c0_i32, %c0_i32_0 : i32, i32, i32
  }
  func.func @transform_4(%arg0: i32) -> (i32, i32, i32) {
    %c0_i32 = arith.constant 0 : i32
    %c0_i32_0 = arith.constant 0 : i32
    %c0_i32_1 = arith.constant 0 : i32
    return %arg0, %c0_i32, %c0_i32_0 : i32, i32, i32
  }
}

module attributes {stable_mosaic.version = 11 : i64} {
  func.func @_affine_kernel(%arg0: i32, %arg1: memref<16x512xf32, #tpu.memory_space<vmem>>, %arg2: memref<16x1xf32, #tpu.memory_space<vmem>>, %arg3: memref<16x1xf32, #tpu.memory_space<vmem>>, %arg4: memref<16x512xf32, #tpu.memory_space<vmem>>) attributes {dimension_semantics = [#tpu.dimension_semantics<parallel>], iteration_bounds = array<i64: 1>, scalar_prefetch = 0 : i64, scratch_operands = 0 : i64, tpu.core_type = #tpu.core_type<tc>, window_params = [{transform_indices = @transform_0, window_bounds = array<i64: 16, 512>}, {pipeline_mode = #tpu.pipeline_mode<synchronous>, transform_indices = @transform_1, window_bounds = array<i64: 16, 1>}, {pipeline_mode = #tpu.pipeline_mode<synchronous>, transform_indices = @transform_2, window_bounds = array<i64: 16, 1>}, {transform_indices = @transform_3, window_bounds = array<i64: 16, 512>}]} {
    %c0 = arith.constant 0 : index
    %c0_0 = arith.constant 0 : index
    %0 = vector.load %arg1[%c0, %c0_0] : memref<16x512xf32, #tpu.memory_space<vmem>>, vector<16x512xf32>
    %c0_1 = arith.constant 0 : index
    %c0_2 = arith.constant 0 : index
    %1 = vector.load %arg2[%c0_1, %c0_2] : memref<16x1xf32, #tpu.memory_space<vmem>>, vector<16x1xf32>
    %2 = vector.broadcast %1 : vector<16x1xf32> to vector<16x512xf32>
    %3 = arith.mulf %0, %2 : vector<16x512xf32>
    %c0_3 = arith.constant 0 : index
    %c0_4 = arith.constant 0 : index
    %4 = vector.load %arg3[%c0_3, %c0_4] : memref<16x1xf32, #tpu.memory_space<vmem>>, vector<16x1xf32>
    %5 = vector.broadcast %4 : vector<16x1xf32> to vector<16x512xf32>
    %6 = arith.addf %3, %5 : vector<16x512xf32>
    %c0_5 = arith.constant 0 : index
    %c0_6 = arith.constant 0 : index
    %7 = vector.load %arg4[%c0_5, %c0_6] : memref<16x512xf32, #tpu.memory_space<vmem>>, vector<16x512xf32>
    tpu.vector_store %arg4[%c0_5, %c0_6], %6 {strides = array<i32>} : memref<16x512xf32, #tpu.memory_space<vmem>>, vector<16x512xf32>,
    return
  }
  func.func @transform_0(%arg0: i32) -> (i32, i32) {
    %c0_i32 = arith.constant 0 : i32
    %c0_i32_0 = arith.constant 0 : i32
    return %c0_i32, %arg0 : i32, i32
  }
  func.func @transform_1(%arg0: i32) -> (i32, i32) {
    %c0_i32 = arith.constant 0 : i32
    %c0_i32_0 = arith.constant 0 : i32
    %c0_i32_1 = arith.constant 0 : i32
    return %c0_i32, %c0_i32_0 : i32, i32
  }
  func.func @transform_2(%arg0: i32) -> (i32, i32) {
    %c0_i32 = arith.constant 0 : i32
    %c0_i32_0 = arith.constant 0 : i32
    %c0_i32_1 = arith.constant 0 : i32
    return %c0_i32, %c0_i32_0 : i32, i32
  }
  func.func @transform_3(%arg0: i32) -> (i32, i32) {
    %c0_i32 = arith.constant 0 : i32
    %c0_i32_0 = arith.constant 0 : i32
    return %c0_i32, %arg0 : i32, i32
  }
}

module attributes {stable_mosaic.version = 11 : i64} {
  func.func @_affine_add_kernel(%arg0: i32, %arg1: memref<16x128xf32, #tpu.memory_space<vmem>>, %arg2: memref<16x1xf32, #tpu.memory_space<vmem>>, %arg3: memref<16x1xf32, #tpu.memory_space<vmem>>, %arg4: memref<16x128xf32, #tpu.memory_space<vmem>>, %arg5: memref<16x128xf32, #tpu.memory_space<vmem>>) attributes {dimension_semantics = [#tpu.dimension_semantics<parallel>], iteration_bounds = array<i64: 1>, scalar_prefetch = 0 : i64, scratch_operands = 0 : i64, tpu.core_type = #tpu.core_type<tc>, window_params = [{transform_indices = @transform_0, window_bounds = array<i64: 16, 128>}, {pipeline_mode = #tpu.pipeline_mode<synchronous>, transform_indices = @transform_1, window_bounds = array<i64: 16, 1>}, {pipeline_mode = #tpu.pipeline_mode<synchronous>, transform_indices = @transform_2, window_bounds = array<i64: 16, 1>}, {transform_indices = @transform_3, window_bounds = array<i64: 16, 128>}, {transform_indices = @transform_4, window_bounds = array<i64: 16, 128>}]} {
    %c0 = arith.constant 0 : index
    %c0_0 = arith.constant 0 : index
    %0 = vector.load %arg1[%c0, %c0_0] : memref<16x128xf32, #tpu.memory_space<vmem>>, vector<16x128xf32>
    %c0_1 = arith.constant 0 : index
    %c0_2 = arith.constant 0 : index
    %1 = vector.load %arg2[%c0_1, %c0_2] : memref<16x1xf32, #tpu.memory_space<vmem>>, vector<16x1xf32>
    %2 = vector.broadcast %1 : vector<16x1xf32> to vector<16x128xf32>
    %3 = arith.mulf %0, %2 : vector<16x128xf32>
    %c0_3 = arith.constant 0 : index
    %c0_4 = arith.constant 0 : index
    %4 = vector.load %arg3[%c0_3, %c0_4] : memref<16x1xf32, #tpu.memory_space<vmem>>, vector<16x1xf32>
    %5 = vector.broadcast %4 : vector<16x1xf32> to vector<16x128xf32>
    %6 = arith.addf %3, %5 : vector<16x128xf32>
    %c0_5 = arith.constant 0 : index
    %c0_6 = arith.constant 0 : index
    %7 = vector.load %arg4[%c0_5, %c0_6] : memref<16x128xf32, #tpu.memory_space<vmem>>, vector<16x128xf32>
    %8 = arith.addf %6, %7 : vector<16x128xf32>
    %c0_7 = arith.constant 0 : index
    %c0_8 = arith.constant 0 : index
    %9 = vector.load %arg5[%c0_7, %c0_8] : memref<16x128xf32, #tpu.memory_space<vmem>>, vector<16x128xf32>
    tpu.vector_store %arg5[%c0_7, %c0_8], %8 {strides = array<i32>} : memref<16x128xf32, #tpu.memory_space<vmem>>, vector<16x128xf32>,
    return
  }
  func.func @transform_0(%arg0: i32) -> (i32, i32) {
    %c0_i32 = arith.constant 0 : i32
    %c0_i32_0 = arith.constant 0 : i32
    return %c0_i32, %arg0 : i32, i32
  }
  func.func @transform_1(%arg0: i32) -> (i32, i32) {
    %c0_i32 = arith.constant 0 : i32
    %c0_i32_0 = arith.constant 0 : i32
    %c0_i32_1 = arith.constant 0 : i32
    return %c0_i32, %c0_i32_0 : i32, i32
  }
  func.func @transform_2(%arg0: i32) -> (i32, i32) {
    %c0_i32 = arith.constant 0 : i32
    %c0_i32_0 = arith.constant 0 : i32
    %c0_i32_1 = arith.constant 0 : i32
    return %c0_i32, %c0_i32_0 : i32, i32
  }
  func.func @transform_3(%arg0: i32) -> (i32, i32) {
    %c0_i32 = arith.constant 0 : i32
    %c0_i32_0 = arith.constant 0 : i32
    return %c0_i32, %arg0 : i32, i32
  }
  func.func @transform_4(%arg0: i32) -> (i32, i32) {
    %c0_i32 = arith.constant 0 : i32
    %c0_i32_0 = arith.constant 0 : i32
    return %c0_i32, %arg0 : i32, i32
  }
}

module attributes {stable_mosaic.version = 11 : i64} {
  func.func @_mm_stats_kernel(%arg0: i32, %arg1: memref<392x128xf32, #tpu.memory_space<vmem>>, %arg2: memref<16x392xf32, #tpu.memory_space<vmem>>, %arg3: memref<16x128xf32, #tpu.memory_space<vmem>>, %arg4: memref<1x16x1xf32, #tpu.memory_space<vmem>>, %arg5: memref<1x16x1xf32, #tpu.memory_space<vmem>>) attributes {dimension_semantics = [#tpu.dimension_semantics<parallel>], iteration_bounds = array<i64: 1>, scalar_prefetch = 0 : i64, scratch_operands = 0 : i64, tpu.core_type = #tpu.core_type<tc>, window_params = [{transform_indices = @transform_0, window_bounds = array<i64: 392, 128>}, {pipeline_mode = #tpu.pipeline_mode<synchronous>, transform_indices = @transform_1, window_bounds = array<i64: 16, 392>}, {transform_indices = @transform_2, window_bounds = array<i64: 16, 128>}, {transform_indices = @transform_3, window_bounds = array<i64: 1, 16, 1>}, {transform_indices = @transform_4, window_bounds = array<i64: 1, 16, 1>}]} {
    %c0 = arith.constant 0 : index
    %c0_0 = arith.constant 0 : index
    %0 = vector.load %arg1[%c0, %c0_0] : memref<392x128xf32, #tpu.memory_space<vmem>>, vector<392x128xf32>
    %cst = arith.constant 0.000000e+00 : f32
    %1 = vector.broadcast %cst : f32 to vector<392x128xf32>
    %2 = arith.maximumf %0, %1 : vector<392x128xf32>
    %c0_1 = arith.constant 0 : index
    %c0_2 = arith.constant 0 : index
    %3 = vector.load %arg2[%c0_1, %c0_2] : memref<16x392xf32, #tpu.memory_space<vmem>>, vector<16x392xf32>
    %cst_3 = arith.constant dense<0.000000e+00> : vector<16x128xf32>
    %4 = tpu.matmul %3, %2, %cst_3 {dimension_numbers = #tpu.dot_dimension_numbers<[1], [0], [0], [1], [0, 0, 1, 1], [], []>} : vector<16x392xf32>, vector<392x128xf32>, vector<16x128xf32> -> vector<16x128xf32>
    %c0_4 = arith.constant 0 : index
    %c0_5 = arith.constant 0 : index
    %5 = vector.load %arg3[%c0_4, %c0_5] : memref<16x128xf32, #tpu.memory_space<vmem>>, vector<16x128xf32>
    tpu.vector_store %arg3[%c0_4, %c0_5], %4 {strides = array<i32>} : memref<16x128xf32, #tpu.memory_space<vmem>>, vector<16x128xf32>,
    %cst_6 = arith.constant dense<0.000000e+00> : vector<16xf32>
    %6 = vector.multi_reduction <add>, %4, %cst_6 [1] : vector<16x128xf32> to vector<16xf32>
    %7 = vector.shape_cast %6 : vector<16xf32> to vector<16x1xf32>
    %8 = vector.shape_cast %7 : vector<16x1xf32> to vector<1x16x1xf32>
    %c0_7 = arith.constant 0 : index
    %c0_8 = arith.constant 0 : index
    %c0_9 = arith.constant 0 : index
    %9 = vector.load %arg4[%c0_7, %c0_8, %c0_9] : memref<1x16x1xf32, #tpu.memory_space<vmem>>, vector<1x16x1xf32>
    tpu.vector_store %arg4[%c0_7, %c0_8, %c0_9], %8 {strides = array<i32>} : memref<1x16x1xf32, #tpu.memory_space<vmem>>, vector<1x16x1xf32>,
    %10 = arith.mulf %4, %4 : vector<16x128xf32>
    %cst_10 = arith.constant dense<0.000000e+00> : vector<16xf32>
    %11 = vector.multi_reduction <add>, %10, %cst_10 [1] : vector<16x128xf32> to vector<16xf32>
    %12 = vector.shape_cast %11 : vector<16xf32> to vector<16x1xf32>
    %13 = vector.shape_cast %12 : vector<16x1xf32> to vector<1x16x1xf32>
    %c0_11 = arith.constant 0 : index
    %c0_12 = arith.constant 0 : index
    %c0_13 = arith.constant 0 : index
    %14 = vector.load %arg5[%c0_11, %c0_12, %c0_13] : memref<1x16x1xf32, #tpu.memory_space<vmem>>, vector<1x16x1xf32>
    tpu.vector_store %arg5[%c0_11, %c0_12, %c0_13], %13 {strides = array<i32>} : memref<1x16x1xf32, #tpu.memory_space<vmem>>, vector<1x16x1xf32>,
    return
  }
  func.func @transform_0(%arg0: i32) -> (i32, i32) {
    %c0_i32 = arith.constant 0 : i32
    %c0_i32_0 = arith.constant 0 : i32
    return %c0_i32, %arg0 : i32, i32
  }
  func.func @transform_1(%arg0: i32) -> (i32, i32) {
    %c0_i32 = arith.constant 0 : i32
    %c0_i32_0 = arith.constant 0 : i32
    %c0_i32_1 = arith.constant 0 : i32
    return %c0_i32, %c0_i32_0 : i32, i32
  }
  func.func @transform_2(%arg0: i32) -> (i32, i32) {
    %c0_i32 = arith.constant 0 : i32
    %c0_i32_0 = arith.constant 0 : i32
    return %c0_i32, %arg0 : i32, i32
  }
  func.func @transform_3(%arg0: i32) -> (i32, i32, i32) {
    %c0_i32 = arith.constant 0 : i32
    %c0_i32_0 = arith.constant 0 : i32
    %c0_i32_1 = arith.constant 0 : i32
    return %arg0, %c0_i32, %c0_i32_0 : i32, i32, i32
  }
  func.func @transform_4(%arg0: i32) -> (i32, i32, i32) {
    %c0_i32 = arith.constant 0 : i32
    %c0_i32_0 = arith.constant 0 : i32
    %c0_i32_1 = arith.constant 0 : i32
    return %arg0, %c0_i32, %c0_i32_0 : i32, i32, i32
  }
}

module attributes {stable_mosaic.version = 11 : i64} {
  func.func @_mm_stats_kernel(%arg0: i32, %arg1: memref<784x128xf32, #tpu.memory_space<vmem>>, %arg2: memref<16x784xf32, #tpu.memory_space<vmem>>, %arg3: memref<16x128xf32, #tpu.memory_space<vmem>>, %arg4: memref<1x16x1xf32, #tpu.memory_space<vmem>>, %arg5: memref<1x16x1xf32, #tpu.memory_space<vmem>>) attributes {dimension_semantics = [#tpu.dimension_semantics<parallel>], iteration_bounds = array<i64: 1>, scalar_prefetch = 0 : i64, scratch_operands = 0 : i64, tpu.core_type = #tpu.core_type<tc>, window_params = [{transform_indices = @transform_0, window_bounds = array<i64: 784, 128>}, {pipeline_mode = #tpu.pipeline_mode<synchronous>, transform_indices = @transform_1, window_bounds = array<i64: 16, 784>}, {transform_indices = @transform_2, window_bounds = array<i64: 16, 128>}, {transform_indices = @transform_3, window_bounds = array<i64: 1, 16, 1>}, {transform_indices = @transform_4, window_bounds = array<i64: 1, 16, 1>}]} {
    %c0 = arith.constant 0 : index
    %c0_0 = arith.constant 0 : index
    %0 = vector.load %arg1[%c0, %c0_0] : memref<784x128xf32, #tpu.memory_space<vmem>>, vector<784x128xf32>
    %c0_1 = arith.constant 0 : index
    %c0_2 = arith.constant 0 : index
    %1 = vector.load %arg2[%c0_1, %c0_2] : memref<16x784xf32, #tpu.memory_space<vmem>>, vector<16x784xf32>
    %cst = arith.constant dense<0.000000e+00> : vector<16x128xf32>
    %2 = tpu.matmul %1, %0, %cst {dimension_numbers = #tpu.dot_dimension_numbers<[1], [0], [0], [1], [0, 0, 1, 1], [], []>} : vector<16x784xf32>, vector<784x128xf32>, vector<16x128xf32> -> vector<16x128xf32>
    %c0_3 = arith.constant 0 : index
    %c0_4 = arith.constant 0 : index
    %3 = vector.load %arg3[%c0_3, %c0_4] : memref<16x128xf32, #tpu.memory_space<vmem>>, vector<16x128xf32>
    tpu.vector_store %arg3[%c0_3, %c0_4], %2 {strides = array<i32>} : memref<16x128xf32, #tpu.memory_space<vmem>>, vector<16x128xf32>,
    %cst_5 = arith.constant dense<0.000000e+00> : vector<16xf32>
    %4 = vector.multi_reduction <add>, %2, %cst_5 [1] : vector<16x128xf32> to vector<16xf32>
    %5 = vector.shape_cast %4 : vector<16xf32> to vector<16x1xf32>
    %6 = vector.shape_cast %5 : vector<16x1xf32> to vector<1x16x1xf32>
    %c0_6 = arith.constant 0 : index
    %c0_7 = arith.constant 0 : index
    %c0_8 = arith.constant 0 : index
    %7 = vector.load %arg4[%c0_6, %c0_7, %c0_8] : memref<1x16x1xf32, #tpu.memory_space<vmem>>, vector<1x16x1xf32>
    tpu.vector_store %arg4[%c0_6, %c0_7, %c0_8], %6 {strides = array<i32>} : memref<1x16x1xf32, #tpu.memory_space<vmem>>, vector<1x16x1xf32>,
    %8 = arith.mulf %2, %2 : vector<16x128xf32>
    %cst_9 = arith.constant dense<0.000000e+00> : vector<16xf32>
    %9 = vector.multi_reduction <add>, %8, %cst_9 [1] : vector<16x128xf32> to vector<16xf32>
    %10 = vector.shape_cast %9 : vector<16xf32> to vector<16x1xf32>
    %11 = vector.shape_cast %10 : vector<16x1xf32> to vector<1x16x1xf32>
    %c0_10 = arith.constant 0 : index
    %c0_11 = arith.constant 0 : index
    %c0_12 = arith.constant 0 : index
    %12 = vector.load %arg5[%c0_10, %c0_11, %c0_12] : memref<1x16x1xf32, #tpu.memory_space<vmem>>, vector<1x16x1xf32>
    tpu.vector_store %arg5[%c0_10, %c0_11, %c0_12], %11 {strides = array<i32>} : memref<1x16x1xf32, #tpu.memory_space<vmem>>, vector<1x16x1xf32>,
    return
  }
  func.func @transform_0(%arg0: i32) -> (i32, i32) {
    %c0_i32 = arith.constant 0 : i32
    %c0_i32_0 = arith.constant 0 : i32
    return %c0_i32, %arg0 : i32, i32
  }
  func.func @transform_1(%arg0: i32) -> (i32, i32) {
    %c0_i32 = arith.constant 0 : i32
    %c0_i32_0 = arith.constant 0 : i32
    %c0_i32_1 = arith.constant 0 : i32
    return %c0_i32, %c0_i32_0 : i32, i32
  }
  func.func @transform_2(%arg0: i32) -> (i32, i32) {
    %c0_i32 = arith.constant 0 : i32
    %c0_i32_0 = arith.constant 0 : i32
    return %c0_i32, %arg0 : i32, i32
  }
  func.func @transform_3(%arg0: i32) -> (i32, i32, i32) {
    %c0_i32 = arith.constant 0 : i32
    %c0_i32_0 = arith.constant 0 : i32
    %c0_i32_1 = arith.constant 0 : i32
    return %arg0, %c0_i32, %c0_i32_0 : i32, i32, i32
  }
  func.func @transform_4(%arg0: i32) -> (i32, i32, i32) {
    %c0_i32 = arith.constant 0 : i32
    %c0_i32_0 = arith.constant 0 : i32
    %c0_i32_1 = arith.constant 0 : i32
    return %arg0, %c0_i32, %c0_i32_0 : i32, i32, i32
  }
}

module attributes {stable_mosaic.version = 11 : i64} {
  func.func @_mm_stats_kernel(%arg0: i32, %arg1: memref<400x128xf32, #tpu.memory_space<vmem>>, %arg2: memref<16x400xf32, #tpu.memory_space<vmem>>, %arg3: memref<16x128xf32, #tpu.memory_space<vmem>>, %arg4: memref<1x16x1xf32, #tpu.memory_space<vmem>>, %arg5: memref<1x16x1xf32, #tpu.memory_space<vmem>>) attributes {dimension_semantics = [#tpu.dimension_semantics<parallel>], iteration_bounds = array<i64: 1>, scalar_prefetch = 0 : i64, scratch_operands = 0 : i64, tpu.core_type = #tpu.core_type<tc>, window_params = [{transform_indices = @transform_0, window_bounds = array<i64: 400, 128>}, {pipeline_mode = #tpu.pipeline_mode<synchronous>, transform_indices = @transform_1, window_bounds = array<i64: 16, 400>}, {transform_indices = @transform_2, window_bounds = array<i64: 16, 128>}, {transform_indices = @transform_3, window_bounds = array<i64: 1, 16, 1>}, {transform_indices = @transform_4, window_bounds = array<i64: 1, 16, 1>}]} {
    %c0 = arith.constant 0 : index
    %c0_0 = arith.constant 0 : index
    %0 = vector.load %arg1[%c0, %c0_0] : memref<400x128xf32, #tpu.memory_space<vmem>>, vector<400x128xf32>
    %cst = arith.constant 0.000000e+00 : f32
    %1 = vector.broadcast %cst : f32 to vector<400x128xf32>
    %2 = arith.maximumf %0, %1 : vector<400x128xf32>
    %c0_1 = arith.constant 0 : index
    %c0_2 = arith.constant 0 : index
    %3 = vector.load %arg2[%c0_1, %c0_2] : memref<16x400xf32, #tpu.memory_space<vmem>>, vector<16x400xf32>
    %cst_3 = arith.constant dense<0.000000e+00> : vector<16x128xf32>
    %4 = tpu.matmul %3, %2, %cst_3 {dimension_numbers = #tpu.dot_dimension_numbers<[1], [0], [0], [1], [0, 0, 1, 1], [], []>} : vector<16x400xf32>, vector<400x128xf32>, vector<16x128xf32> -> vector<16x128xf32>
    %c0_4 = arith.constant 0 : index
    %c0_5 = arith.constant 0 : index
    %5 = vector.load %arg3[%c0_4, %c0_5] : memref<16x128xf32, #tpu.memory_space<vmem>>, vector<16x128xf32>
    tpu.vector_store %arg3[%c0_4, %c0_5], %4 {strides = array<i32>} : memref<16x128xf32, #tpu.memory_space<vmem>>, vector<16x128xf32>,
    %cst_6 = arith.constant dense<0.000000e+00> : vector<16xf32>
    %6 = vector.multi_reduction <add>, %4, %cst_6 [1] : vector<16x128xf32> to vector<16xf32>
    %7 = vector.shape_cast %6 : vector<16xf32> to vector<16x1xf32>
    %8 = vector.shape_cast %7 : vector<16x1xf32> to vector<1x16x1xf32>
    %c0_7 = arith.constant 0 : index
    %c0_8 = arith.constant 0 : index
    %c0_9 = arith.constant 0 : index
    %9 = vector.load %arg4[%c0_7, %c0_8, %c0_9] : memref<1x16x1xf32, #tpu.memory_space<vmem>>, vector<1x16x1xf32>
    tpu.vector_store %arg4[%c0_7, %c0_8, %c0_9], %8 {strides = array<i32>} : memref<1x16x1xf32, #tpu.memory_space<vmem>>, vector<1x16x1xf32>,
    %10 = arith.mulf %4, %4 : vector<16x128xf32>
    %cst_10 = arith.constant dense<0.000000e+00> : vector<16xf32>
    %11 = vector.multi_reduction <add>, %10, %cst_10 [1] : vector<16x128xf32> to vector<16xf32>
    %12 = vector.shape_cast %11 : vector<16xf32> to vector<16x1xf32>
    %13 = vector.shape_cast %12 : vector<16x1xf32> to vector<1x16x1xf32>
    %c0_11 = arith.constant 0 : index
    %c0_12 = arith.constant 0 : index
    %c0_13 = arith.constant 0 : index
    %14 = vector.load %arg5[%c0_11, %c0_12, %c0_13] : memref<1x16x1xf32, #tpu.memory_space<vmem>>, vector<1x16x1xf32>
    tpu.vector_store %arg5[%c0_11, %c0_12, %c0_13], %13 {strides = array<i32>} : memref<1x16x1xf32, #tpu.memory_space<vmem>>, vector<1x16x1xf32>,
    return
  }
  func.func @transform_0(%arg0: i32) -> (i32, i32) {
    %c0_i32 = arith.constant 0 : i32
    %c0_i32_0 = arith.constant 0 : i32
    return %c0_i32, %arg0 : i32, i32
  }
  func.func @transform_1(%arg0: i32) -> (i32, i32) {
    %c0_i32 = arith.constant 0 : i32
    %c0_i32_0 = arith.constant 0 : i32
    %c0_i32_1 = arith.constant 0 : i32
    return %c0_i32, %c0_i32_0 : i32, i32
  }
  func.func @transform_2(%arg0: i32) -> (i32, i32) {
    %c0_i32 = arith.constant 0 : i32
    %c0_i32_0 = arith.constant 0 : i32
    return %c0_i32, %arg0 : i32, i32
  }
  func.func @transform_3(%arg0: i32) -> (i32, i32, i32) {
    %c0_i32 = arith.constant 0 : i32
    %c0_i32_0 = arith.constant 0 : i32
    %c0_i32_1 = arith.constant 0 : i32
    return %arg0, %c0_i32, %c0_i32_0 : i32, i32, i32
  }
  func.func @transform_4(%arg0: i32) -> (i32, i32, i32) {
    %c0_i32 = arith.constant 0 : i32
    %c0_i32_0 = arith.constant 0 : i32
    %c0_i32_1 = arith.constant 0 : i32
    return %arg0, %c0_i32, %c0_i32_0 : i32, i32, i32
  }
}

module attributes {stable_mosaic.version = 11 : i64} {
  func.func @_affine2_kernel(%arg0: i32, %arg1: memref<16x128xf32, #tpu.memory_space<vmem>>, %arg2: memref<16x1xf32, #tpu.memory_space<vmem>>, %arg3: memref<16x1xf32, #tpu.memory_space<vmem>>, %arg4: memref<16x128xf32, #tpu.memory_space<vmem>>, %arg5: memref<16x1xf32, #tpu.memory_space<vmem>>, %arg6: memref<16x1xf32, #tpu.memory_space<vmem>>, %arg7: memref<16x128xf32, #tpu.memory_space<vmem>>) attributes {dimension_semantics = [#tpu.dimension_semantics<parallel>], iteration_bounds = array<i64: 1>, scalar_prefetch = 0 : i64, scratch_operands = 0 : i64, tpu.core_type = #tpu.core_type<tc>, window_params = [{transform_indices = @transform_0, window_bounds = array<i64: 16, 128>}, {pipeline_mode = #tpu.pipeline_mode<synchronous>, transform_indices = @transform_1, window_bounds = array<i64: 16, 1>}, {pipeline_mode = #tpu.pipeline_mode<synchronous>, transform_indices = @transform_2, window_bounds = array<i64: 16, 1>}, {transform_indices = @transform_3, window_bounds = array<i64: 16, 128>}, {pipeline_mode = #tpu.pipeline_mode<synchronous>, transform_indices = @transform_4, window_bounds = array<i64: 16, 1>}, {pipeline_mode = #tpu.pipeline_mode<synchronous>, transform_indices = @transform_5, window_bounds = array<i64: 16, 1>}, {transform_indices = @transform_6, window_bounds = array<i64: 16, 128>}]} {
    %c0 = arith.constant 0 : index
    %c0_0 = arith.constant 0 : index
    %0 = vector.load %arg1[%c0, %c0_0] : memref<16x128xf32, #tpu.memory_space<vmem>>, vector<16x128xf32>
    %c0_1 = arith.constant 0 : index
    %c0_2 = arith.constant 0 : index
    %1 = vector.load %arg2[%c0_1, %c0_2] : memref<16x1xf32, #tpu.memory_space<vmem>>, vector<16x1xf32>
    %2 = vector.broadcast %1 : vector<16x1xf32> to vector<16x128xf32>
    %3 = arith.mulf %0, %2 : vector<16x128xf32>
    %c0_3 = arith.constant 0 : index
    %c0_4 = arith.constant 0 : index
    %4 = vector.load %arg3[%c0_3, %c0_4] : memref<16x1xf32, #tpu.memory_space<vmem>>, vector<16x1xf32>
    %5 = vector.broadcast %4 : vector<16x1xf32> to vector<16x128xf32>
    %6 = arith.addf %3, %5 : vector<16x128xf32>
    %c0_5 = arith.constant 0 : index
    %c0_6 = arith.constant 0 : index
    %7 = vector.load %arg4[%c0_5, %c0_6] : memref<16x128xf32, #tpu.memory_space<vmem>>, vector<16x128xf32>
    %c0_7 = arith.constant 0 : index
    %c0_8 = arith.constant 0 : index
    %8 = vector.load %arg5[%c0_7, %c0_8] : memref<16x1xf32, #tpu.memory_space<vmem>>, vector<16x1xf32>
    %9 = vector.broadcast %8 : vector<16x1xf32> to vector<16x128xf32>
    %10 = arith.mulf %7, %9 : vector<16x128xf32>
    %11 = arith.addf %6, %10 : vector<16x128xf32>
    %c0_9 = arith.constant 0 : index
    %c0_10 = arith.constant 0 : index
    %12 = vector.load %arg6[%c0_9, %c0_10] : memref<16x1xf32, #tpu.memory_space<vmem>>, vector<16x1xf32>
    %13 = vector.broadcast %12 : vector<16x1xf32> to vector<16x128xf32>
    %14 = arith.addf %11, %13 : vector<16x128xf32>
    %c0_11 = arith.constant 0 : index
    %c0_12 = arith.constant 0 : index
    %15 = vector.load %arg7[%c0_11, %c0_12] : memref<16x128xf32, #tpu.memory_space<vmem>>, vector<16x128xf32>
    tpu.vector_store %arg7[%c0_11, %c0_12], %14 {strides = array<i32>} : memref<16x128xf32, #tpu.memory_space<vmem>>, vector<16x128xf32>,
    return
  }
  func.func @transform_0(%arg0: i32) -> (i32, i32) {
    %c0_i32 = arith.constant 0 : i32
    %c0_i32_0 = arith.constant 0 : i32
    return %c0_i32, %arg0 : i32, i32
  }
  func.func @transform_1(%arg0: i32) -> (i32, i32) {
    %c0_i32 = arith.constant 0 : i32
    %c0_i32_0 = arith.constant 0 : i32
    %c0_i32_1 = arith.constant 0 : i32
    return %c0_i32, %c0_i32_0 : i32, i32
  }
  func.func @transform_2(%arg0: i32) -> (i32, i32) {
    %c0_i32 = arith.constant 0 : i32
    %c0_i32_0 = arith.constant 0 : i32
    %c0_i32_1 = arith.constant 0 : i32
    return %c0_i32, %c0_i32_0 : i32, i32
  }
  func.func @transform_3(%arg0: i32) -> (i32, i32) {
    %c0_i32 = arith.constant 0 : i32
    %c0_i32_0 = arith.constant 0 : i32
    return %c0_i32, %arg0 : i32, i32
  }
  func.func @transform_4(%arg0: i32) -> (i32, i32) {
    %c0_i32 = arith.constant 0 : i32
    %c0_i32_0 = arith.constant 0 : i32
    %c0_i32_1 = arith.constant 0 : i32
    return %c0_i32, %c0_i32_0 : i32, i32
  }
  func.func @transform_5(%arg0: i32) -> (i32, i32) {
    %c0_i32 = arith.constant 0 : i32
    %c0_i32_0 = arith.constant 0 : i32
    %c0_i32_1 = arith.constant 0 : i32
    return %c0_i32, %c0_i32_0 : i32, i32
  }
  func.func @transform_6(%arg0: i32) -> (i32, i32) {
    %c0_i32 = arith.constant 0 : i32
    %c0_i32_0 = arith.constant 0 : i32
    return %c0_i32, %arg0 : i32, i32
  }
}

module attributes {stable_mosaic.version = 11 : i64} {
  func.func @_mm_stats_kernel(%arg0: i32, %arg1: memref<144x128xf32, #tpu.memory_space<vmem>>, %arg2: memref<16x144xf32, #tpu.memory_space<vmem>>, %arg3: memref<16x128xf32, #tpu.memory_space<vmem>>, %arg4: memref<1x16x1xf32, #tpu.memory_space<vmem>>, %arg5: memref<1x16x1xf32, #tpu.memory_space<vmem>>) attributes {dimension_semantics = [#tpu.dimension_semantics<parallel>], iteration_bounds = array<i64: 1>, scalar_prefetch = 0 : i64, scratch_operands = 0 : i64, tpu.core_type = #tpu.core_type<tc>, window_params = [{transform_indices = @transform_0, window_bounds = array<i64: 144, 128>}, {pipeline_mode = #tpu.pipeline_mode<synchronous>, transform_indices = @transform_1, window_bounds = array<i64: 16, 144>}, {transform_indices = @transform_2, window_bounds = array<i64: 16, 128>}, {transform_indices = @transform_3, window_bounds = array<i64: 1, 16, 1>}, {transform_indices = @transform_4, window_bounds = array<i64: 1, 16, 1>}]} {
    %c0 = arith.constant 0 : index
    %c0_0 = arith.constant 0 : index
    %0 = vector.load %arg1[%c0, %c0_0] : memref<144x128xf32, #tpu.memory_space<vmem>>, vector<144x128xf32>
    %cst = arith.constant 0.000000e+00 : f32
    %1 = vector.broadcast %cst : f32 to vector<144x128xf32>
    %2 = arith.maximumf %0, %1 : vector<144x128xf32>
    %c0_1 = arith.constant 0 : index
    %c0_2 = arith.constant 0 : index
    %3 = vector.load %arg2[%c0_1, %c0_2] : memref<16x144xf32, #tpu.memory_space<vmem>>, vector<16x144xf32>
    %cst_3 = arith.constant dense<0.000000e+00> : vector<16x128xf32>
    %4 = tpu.matmul %3, %2, %cst_3 {dimension_numbers = #tpu.dot_dimension_numbers<[1], [0], [0], [1], [0, 0, 1, 1], [], []>} : vector<16x144xf32>, vector<144x128xf32>, vector<16x128xf32> -> vector<16x128xf32>
    %c0_4 = arith.constant 0 : index
    %c0_5 = arith.constant 0 : index
    %5 = vector.load %arg3[%c0_4, %c0_5] : memref<16x128xf32, #tpu.memory_space<vmem>>, vector<16x128xf32>
    tpu.vector_store %arg3[%c0_4, %c0_5], %4 {strides = array<i32>} : memref<16x128xf32, #tpu.memory_space<vmem>>, vector<16x128xf32>,
    %cst_6 = arith.constant dense<0.000000e+00> : vector<16xf32>
    %6 = vector.multi_reduction <add>, %4, %cst_6 [1] : vector<16x128xf32> to vector<16xf32>
    %7 = vector.shape_cast %6 : vector<16xf32> to vector<16x1xf32>
    %8 = vector.shape_cast %7 : vector<16x1xf32> to vector<1x16x1xf32>
    %c0_7 = arith.constant 0 : index
    %c0_8 = arith.constant 0 : index
    %c0_9 = arith.constant 0 : index
    %9 = vector.load %arg4[%c0_7, %c0_8, %c0_9] : memref<1x16x1xf32, #tpu.memory_space<vmem>>, vector<1x16x1xf32>
    tpu.vector_store %arg4[%c0_7, %c0_8, %c0_9], %8 {strides = array<i32>} : memref<1x16x1xf32, #tpu.memory_space<vmem>>, vector<1x16x1xf32>,
    %10 = arith.mulf %4, %4 : vector<16x128xf32>
    %cst_10 = arith.constant dense<0.000000e+00> : vector<16xf32>
    %11 = vector.multi_reduction <add>, %10, %cst_10 [1] : vector<16x128xf32> to vector<16xf32>
    %12 = vector.shape_cast %11 : vector<16xf32> to vector<16x1xf32>
    %13 = vector.shape_cast %12 : vector<16x1xf32> to vector<1x16x1xf32>
    %c0_11 = arith.constant 0 : index
    %c0_12 = arith.constant 0 : index
    %c0_13 = arith.constant 0 : index
    %14 = vector.load %arg5[%c0_11, %c0_12, %c0_13] : memref<1x16x1xf32, #tpu.memory_space<vmem>>, vector<1x16x1xf32>
    tpu.vector_store %arg5[%c0_11, %c0_12, %c0_13], %13 {strides = array<i32>} : memref<1x16x1xf32, #tpu.memory_space<vmem>>, vector<1x16x1xf32>,
    return
  }
  func.func @transform_0(%arg0: i32) -> (i32, i32) {
    %c0_i32 = arith.constant 0 : i32
    %c0_i32_0 = arith.constant 0 : i32
    return %c0_i32, %arg0 : i32, i32
  }
  func.func @transform_1(%arg0: i32) -> (i32, i32) {
    %c0_i32 = arith.constant 0 : i32
    %c0_i32_0 = arith.constant 0 : i32
    %c0_i32_1 = arith.constant 0 : i32
    return %c0_i32, %c0_i32_0 : i32, i32
  }
  func.func @transform_2(%arg0: i32) -> (i32, i32) {
    %c0_i32 = arith.constant 0 : i32
    %c0_i32_0 = arith.constant 0 : i32
    return %c0_i32, %arg0 : i32, i32
  }
  func.func @transform_3(%arg0: i32) -> (i32, i32, i32) {
    %c0_i32 = arith.constant 0 : i32
    %c0_i32_0 = arith.constant 0 : i32
    %c0_i32_1 = arith.constant 0 : i32
    return %arg0, %c0_i32, %c0_i32_0 : i32, i32, i32
  }
  func.func @transform_4(%arg0: i32) -> (i32, i32, i32) {
    %c0_i32 = arith.constant 0 : i32
    %c0_i32_0 = arith.constant 0 : i32
    %c0_i32_1 = arith.constant 0 : i32
    return %arg0, %c0_i32, %c0_i32_0 : i32, i32, i32
  }
}

module attributes {stable_mosaic.version = 11 : i64} {
  func.func @_mm_stats_kernel(%arg0: i32, %arg1: memref<144x128xf32, #tpu.memory_space<vmem>>, %arg2: memref<16x144xf32, #tpu.memory_space<vmem>>, %arg3: memref<16x128xf32, #tpu.memory_space<vmem>>, %arg4: memref<1x16x1xf32, #tpu.memory_space<vmem>>, %arg5: memref<1x16x1xf32, #tpu.memory_space<vmem>>) attributes {dimension_semantics = [#tpu.dimension_semantics<parallel>], iteration_bounds = array<i64: 1>, scalar_prefetch = 0 : i64, scratch_operands = 0 : i64, tpu.core_type = #tpu.core_type<tc>, window_params = [{transform_indices = @transform_0, window_bounds = array<i64: 144, 128>}, {pipeline_mode = #tpu.pipeline_mode<synchronous>, transform_indices = @transform_1, window_bounds = array<i64: 16, 144>}, {transform_indices = @transform_2, window_bounds = array<i64: 16, 128>}, {transform_indices = @transform_3, window_bounds = array<i64: 1, 16, 1>}, {transform_indices = @transform_4, window_bounds = array<i64: 1, 16, 1>}]} {
    %c0 = arith.constant 0 : index
    %c0_0 = arith.constant 0 : index
    %0 = vector.load %arg1[%c0, %c0_0] : memref<144x128xf32, #tpu.memory_space<vmem>>, vector<144x128xf32>
    %c0_1 = arith.constant 0 : index
    %c0_2 = arith.constant 0 : index
    %1 = vector.load %arg2[%c0_1, %c0_2] : memref<16x144xf32, #tpu.memory_space<vmem>>, vector<16x144xf32>
    %cst = arith.constant dense<0.000000e+00> : vector<16x128xf32>
    %2 = tpu.matmul %1, %0, %cst {dimension_numbers = #tpu.dot_dimension_numbers<[1], [0], [0], [1], [0, 0, 1, 1], [], []>} : vector<16x144xf32>, vector<144x128xf32>, vector<16x128xf32> -> vector<16x128xf32>
    %c0_3 = arith.constant 0 : index
    %c0_4 = arith.constant 0 : index
    %3 = vector.load %arg3[%c0_3, %c0_4] : memref<16x128xf32, #tpu.memory_space<vmem>>, vector<16x128xf32>
    tpu.vector_store %arg3[%c0_3, %c0_4], %2 {strides = array<i32>} : memref<16x128xf32, #tpu.memory_space<vmem>>, vector<16x128xf32>,
    %cst_5 = arith.constant dense<0.000000e+00> : vector<16xf32>
    %4 = vector.multi_reduction <add>, %2, %cst_5 [1] : vector<16x128xf32> to vector<16xf32>
    %5 = vector.shape_cast %4 : vector<16xf32> to vector<16x1xf32>
    %6 = vector.shape_cast %5 : vector<16x1xf32> to vector<1x16x1xf32>
    %c0_6 = arith.constant 0 : index
    %c0_7 = arith.constant 0 : index
    %c0_8 = arith.constant 0 : index
    %7 = vector.load %arg4[%c0_6, %c0_7, %c0_8] : memref<1x16x1xf32, #tpu.memory_space<vmem>>, vector<1x16x1xf32>
    tpu.vector_store %arg4[%c0_6, %c0_7, %c0_8], %6 {strides = array<i32>} : memref<1x16x1xf32, #tpu.memory_space<vmem>>, vector<1x16x1xf32>,
    %8 = arith.mulf %2, %2 : vector<16x128xf32>
    %cst_9 = arith.constant dense<0.000000e+00> : vector<16xf32>
    %9 = vector.multi_reduction <add>, %8, %cst_9 [1] : vector<16x128xf32> to vector<16xf32>
    %10 = vector.shape_cast %9 : vector<16xf32> to vector<16x1xf32>
    %11 = vector.shape_cast %10 : vector<16x1xf32> to vector<1x16x1xf32>
    %c0_10 = arith.constant 0 : index
    %c0_11 = arith.constant 0 : index
    %c0_12 = arith.constant 0 : index
    %12 = vector.load %arg5[%c0_10, %c0_11, %c0_12] : memref<1x16x1xf32, #tpu.memory_space<vmem>>, vector<1x16x1xf32>
    tpu.vector_store %arg5[%c0_10, %c0_11, %c0_12], %11 {strides = array<i32>} : memref<1x16x1xf32, #tpu.memory_space<vmem>>, vector<1x16x1xf32>,
    return
  }
  func.func @transform_0(%arg0: i32) -> (i32, i32) {
    %c0_i32 = arith.constant 0 : i32
    %c0_i32_0 = arith.constant 0 : i32
    return %c0_i32, %arg0 : i32, i32
  }
  func.func @transform_1(%arg0: i32) -> (i32, i32) {
    %c0_i32 = arith.constant 0 : i32
    %c0_i32_0 = arith.constant 0 : i32
    %c0_i32_1 = arith.constant 0 : i32
    return %c0_i32, %c0_i32_0 : i32, i32
  }
  func.func @transform_2(%arg0: i32) -> (i32, i32) {
    %c0_i32 = arith.constant 0 : i32
    %c0_i32_0 = arith.constant 0 : i32
    return %c0_i32, %arg0 : i32, i32
  }
  func.func @transform_3(%arg0: i32) -> (i32, i32, i32) {
    %c0_i32 = arith.constant 0 : i32
    %c0_i32_0 = arith.constant 0 : i32
    %c0_i32_1 = arith.constant 0 : i32
    return %arg0, %c0_i32, %c0_i32_0 : i32, i32, i32
  }
  func.func @transform_4(%arg0: i32) -> (i32, i32, i32) {
    %c0_i32 = arith.constant 0 : i32
    %c0_i32_0 = arith.constant 0 : i32
    %c0_i32_1 = arith.constant 0 : i32
    return %arg0, %c0_i32, %c0_i32_0 : i32, i32, i32
  }
}

</mosaic_0001>

<llo_original>
// kernel: cell_stem0_forward.32
$region0: #{cell_stem0_forward.32}
  #allocation0 [shape = 'u32[]', space=smem, size = 0x4, offset = 0x4, fixed_abs, tag = 'smem constant byte address 0x4 - core index']
  #allocation1 [shape = 'u32[144,128]{1,0:T(1,128)}', space=vmem, size = 0x12000, scoped, tag = 'internal scratch']
  %s0 = inlined_call_operand.vmem [shape: f32[200,128], index: 0, kind: input, shape index: {}]
  %s1 = inlined_call_operand.vmem [shape: f32[16,200], index: 1, kind: input, shape index: {}]
  %s2 = inlined_call_operand.vmem [shape: f32[16,128], index: 2, kind: output, shape index: {0}]
  %s3 = inlined_call_operand.vmem [shape: f32[1,16,1], index: 3, kind: output, shape index: {1}]
  %s4 = inlined_call_operand.vmem [shape: f32[1,16,1], index: 4, kind: output, shape index: {2}]
  %5 = xla_tuple %s2, %s3, %s4
  %s6 = sld [smem:[#allocation0]]
  $region34: #{cell_stem0_forward.32} parent=0
    _
  %s8 = ssub.s32 1, %s6
  %s9 = scalar_select 0, %s8, %s6
  // Predicated region
  $region2: #{cell_stem0_forward.32} parent=0 // pred_check
    _
  $region3: #{cell_stem0_forward.32} parent=0 // pred_check_branch
    %11 = sbr.rel (0) target = $region5
  $region4: #{cell_stem0_forward.32} parent=0 // pred_region
    _
  $region5: #{cell_stem0_forward.32} parent=0 // pred_fallthru
    _
  // Predicated region
  $region6: #{cell_stem0_forward.32} parent=0 // pred_check
    _
  $region7: #{cell_stem0_forward.32} parent=0 // pred_check_branch
    %13 = sbr.rel (0) target = $region9
  $region8: #{cell_stem0_forward.32} parent=0 // pred_region
    _
  $region9: #{cell_stem0_forward.32} parent=0 // pred_fallthru
    _
  %v14 = vld [vmem:[%s0] sm:$0xff]
  %v15 = vld [vmem:[%s0 + $0x8] sm:$0xff]
  %v16 = vld [vmem:[%s0 + $0x10] sm:$0xff]
  %v17 = vld [vmem:[%s0 + $0x18] sm:$0xff]
  %v18 = vld [vmem:[%s0 + $0x20] sm:$0xff]
  %v19 = vld [vmem:[%s0 + $0x28] sm:$0xff]
  %v20 = vld [vmem:[%s0 + $0x30] sm:$0xff]
  %v21 = vld [vmem:[%s0 + $0x38] sm:$0xff]
  %v22 = vld [vmem:[%s0 + $0x40] sm:$0xff]
  %v23 = vld [vmem:[%s0 + $0x48] sm:$0xff]
  %v24 = vld [vmem:[%s0 + $0x50] sm:$0xff]
  %v25 = vld [vmem:[%s0 + $0x58] sm:$0xff]
  %v26 = vld [vmem:[%s0 + $0x60] sm:$0xff]
  %v27 = vld [vmem:[%s0 + $0x68] sm:$0xff]
  %v28 = vld [vmem:[%s0 + $0x70] sm:$0xff]
  %v29 = vld [vmem:[%s0 + $0x78] sm:$0xff]
  %v30 = vld [vmem:[%s0 + $0x80] sm:$0xff]
  %v31 = vld [vmem:[%s0 + $0x88] sm:$0xff]
  %v32 = vld [vmem:[%s0 + $0x90] sm:$0xff]
  %v33 = vld [vmem:[%s0 + $0x98] sm:$0xff]
  %v34 = vld [vmem:[%s0 + $0xa0] sm:$0xff]
  %v35 = vld [vmem:[%s0 + $0xa8] sm:$0xff]
  %v36 = vld [vmem:[%s0 + $0xb0] sm:$0xff]
  %v37 = vld [vmem:[%s0 + $0xb8] sm:$0xff]
  %v38 = vld [vmem:[%s0 + $0xc0] sm:$0xff]
  %v39 = vmax.f32 %v14, 0.0
  %v40 = vmax.f32 %v15, 0.0
  %v41 = vmax.f32 %v16, 0.0
  %v42 = vmax.f32 %v17, 0.0
  %v43 = vmax.f32 %v18, 0.0
  %v44 = vmax.f32 %v19, 0.0
  %v45 = vmax.f32 %v20, 0.0
  %v46 = vmax.f32 %v21, 0.0
  %v47 = vmax.f32 %v22, 0.0
  %v48 = vmax.f32 %v23, 0.0
  %v49 = vmax.f32 %v24, 0.0
  %v50 = vmax.f32 %v25, 0.0
  %v51 = vmax.f32 %v26, 0.0
  %v52 = vmax.f32 %v27, 0.0
  %v53 = vmax.f32 %v28, 0.0
  %v54 = vmax.f32 %v29, 0.0
  %v55 = vmax.f32 %v30, 0.0
  %v56 = vmax.f32 %v31, 0.0
  %v57 = vmax.f32 %v32, 0.0
  %v58 = vmax.f32 %v33, 0.0
  %v59 = vmax.f32 %v34, 0.0
  %v60 = vmax.f32 %v35, 0.0
  %v61 = vmax.f32 %v36, 0.0
  %v62 = vmax.f32 %v37, 0.0
  %v63 = vmax.f32 %v38, 0.0
  %v64 = vld [vmem:[%s1] sm:$0xff]
  %v65 = vld [vmem:[%s1 + $0x8] sm:$0xff]
  %v66 = vld [vmem:[%s1 + $0x10] sm:$0xff]
  %v67 = vld [vmem:[%s1 + $0x18] sm:$0xff]
  %vm68 = vcmask 588800
  %v70 = vsel %vm68, %v65, 0
  %v73 = vsel %vm68, %v67, 0
  %75 = vmatprep.subr.mxu0 0.0
  %76 = vmatpush1.msra.mxu0 %v39
  %77 = vmatprep.subr.mxu0 0.0
  %78 = vmatpush1.msra.mxu0 %v40
  %79 = vmatprep.subr.mxu0 0.0
  %80 = vmatpush1.msra.mxu0 %v41
  %81 = vmatprep.subr.mxu0 0.0
  %82 = vmatpush1.msra.mxu0 %v42
  %83 = vmatprep.subr.mxu0 0.0
  %84 = vmatpush1.msra.mxu0 %v43
  %85 = vmatprep.subr.mxu0 0.0
  %86 = vmatpush1.msra.mxu0 %v44
  %87 = vmatprep.subr.mxu0 0.0
  %88 = vmatpush1.msra.mxu0 %v45
  %89 = vmatprep.subr.mxu0 0.0
  %90 = vmatpush1.msra.mxu0 %v46
  %91 = vmatprep.subr.mxu0 0.0
  %92 = vmatpush1.msra.mxu0 %v47
  %93 = vmatprep.subr.mxu0 0.0
  %94 = vmatpush1.msra.mxu0 %v48
  %95 = vmatprep.subr.mxu0 0.0
  %96 = vmatpush1.msra.mxu0 %v49
  %97 = vmatprep.subr.mxu0 0.0
  %98 = vmatpush1.msra.mxu0 %v50
  %99 = vmatprep.subr.mxu0 0.0
  %100 = vmatpush1.msra.mxu0 %v51
  %101 = vmatprep.subr.mxu0 0.0
  %102 = vmatpush1.msra.mxu0 %v52
  %103 = vmatprep.subr.mxu0 0.0
  %104 = vmatpush1.msra.mxu0 %v53
  %105 = vmatprep.subr.mxu0 0.0
  %106 = vmatpush1.msra.mxu0 %v54
  %107 = vmatprep.subr.mxu0 0.0
  %108 = vmatpush1.msra.mxu0 %v55
  %109 = vmatprep.subr.mxu0 0.0
  %110 = vmatpush1.msra.mxu0 %v56
  %111 = vmatprep.subr.mxu0 0.0
  %112 = vmatpush1.msra.mxu0 %v57
  %113 = vmatprep.subr.mxu0 0.0
  %114 = vmatpush1.msra.mxu0 %v58
  %115 = vmatprep.subr.mxu0 0.0
  %116 = vmatpush1.msra.mxu0 %v59
  %117 = vmatprep.subr.mxu0 0.0
  %118 = vmatpush1.msra.mxu0 %v60
  %119 = vmatprep.subr.mxu0 0.0
  %120 = vmatpush1.msra.mxu0 %v61
  %121 = vmatprep.subr.mxu0 0.0
  %122 = vmatpush1.msra.mxu0 %v62
  %123 = vmatprep.subr.mxu0 0.0
  %124 = vmatpush1.msra.mxu0 %v63
  %125 = vmatprep.subr.mxu0 0.0
  %126 = vmatpush1.msra.mxu0 0.0
  %127 = vmatprep.subr.mxu0 0.0
  %128 = vmatpush1.msra.mxu0 0.0
  %129 = vmatprep.subr.mxu0 0.0
  %130 = vmatpush1.msra.mxu0 0.0
  %131 = vmatprep.subr.mxu0 0.0
  %132 = vmatpush1.msra.mxu0 0.0
  %133 = vmatprep.subr.mxu0 0.0
  %134 = vmatpush1.msra.mxu0 0.0
  %135 = vmatprep.subr.mxu0 0.0
  %136 = vmatpush1.msra.mxu0 0.0
  %137 = vmatprep.subr.mxu0 0.0
  %138 = vmatpush1.msra.mxu0 0.0
  %139 = vmatprep.mubr.f32.mxu0 %v70
  %140 = vmatmul.mubr.f32.gmra.mrb[0].mxu0 %v64
  %v141 = vpop.f32.mrb[0].mxu0
  %v142 = vadd.f32 0.0, %v141
  %v143 = vpop.f32.mrb[0].mxu0
  %144 = vmatprep.mubr.f32.mxu0 %v73
  %145 = vmatmul.mubr.f32.gmra.mrb[0].mxu0 %v66
  %v146 = vpop.f32.mrb[0].mxu0
  %v147 = vadd.f32 0.0, %v146
  %v148 = vpop.f32.mrb[0].mxu0
  %149 = vdwg.mxu0
  %150 = vst [vmem:[%s2] sm:$0xff] %v142
  %151 = vst [vmem:[%s2 + $0x8] sm:$0xff] %v147
  %152 = vadd.xlane.f32.xlu0 %v142
  %v153 = vpop.xlane.xlu0 %152
  %154 = vadd.xlane.f32.xlu0 %v147
  %v155 = vpop.xlane.xlu0 %154
  %vm156 = vcmask 7168
  %157 = vst.msk [vmem:[%s3] sm:$0xff] %vm156, %v153
  %158 = vst.msk [vmem:[%s3 + $0x8] sm:$0xff] %vm156, %v155
  %v159 = vmul.f32 %v142, %v142
  %v160 = vmul.f32 %v147, %v147
  %161 = vadd.xlane.f32.xlu0 %v159
  %v162 = vpop.xlane.xlu0 %161
  %163 = vadd.xlane.f32.xlu0 %v160
  %v164 = vpop.xlane.xlu0 %163
  %165 = vst.msk [vmem:[%s4] sm:$0xff] %vm156, %v162
  %166 = vst.msk [vmem:[%s4 + $0x8] sm:$0xff] %vm156, %v164
  // Predicated region
  $region10: #{cell_stem0_forward.32} parent=0 // pred_check
    _
  $region11: #{cell_stem0_forward.32} parent=0 // pred_check_branch
    %168 = sbr.rel (0) target = $region13
  $region12: #{cell_stem0_forward.32} parent=0 // pred_region
    _
  $region13: #{cell_stem0_forward.32} parent=0 // pred_fallthru
    _
  // Predicated region
  $region14: #{cell_stem0_forward.32} parent=0 // pred_check
    _
  $region15: #{cell_stem0_forward.32} parent=0 // pred_check_branch
    %170 = sbr.rel (0) target = $region17
  $region16: #{cell_stem0_forward.32} parent=0 // pred_region
    _
  $region17: #{cell_stem0_forward.32} parent=0 // pred_fallthru
    _
  // Predicated region
  $region18: #{cell_stem0_forward.32} parent=0 // pred_check
    _
  $region19: #{cell_stem0_forward.32} parent=0 // pred_check_branch
    %172 = sbr.rel (0) target = $region21
  $region20: #{cell_stem0_forward.32} parent=0 // pred_region
    _
  $region21: #{cell_stem0_forward.32} parent=0 // pred_fallthru
    _
  // Predicated region
  $region22: #{cell_stem0_forward.32} parent=0 // pred_check
    _
  $region23: #{cell_stem0_forward.32} parent=0 // pred_check_branch
    %174 = sbr.rel (0) target = $region25
  $region24: #{cell_stem0_forward.32} parent=0 // pred_region
    _
  $region25: #{cell_stem0_forward.32} parent=0 // pred_fallthru
    _
  // Predicated region
  $region26: #{cell_stem0_forward.32} parent=0 // pred_check
    _
  $region27: #{cell_stem0_forward.32} parent=0 // pred_check_branch
    %176 = sbr.rel (0) target = $region29
  $region28: #{cell_stem0_forward.32} parent=0 // pred_region
    _
  $region29: #{cell_stem0_forward.32} parent=0 // pred_fallthru
    _
  // Predicated region
  $region30: #{cell_stem0_forward.32} parent=0 // pred_check
    _
  $region31: #{cell_stem0_forward.32} parent=0 // pred_check_branch
    %178 = sbr.rel (0) target = $region33
  $region32: #{cell_stem0_forward.32} parent=0 // pred_region
    _
  $region33: #{cell_stem0_forward.32} parent=0 // pred_fallthru
    _

// kernel: cell_stem0_forward.33
$region0: #{cell_stem0_forward.33}
  #allocation0 [shape = 'u32[]', space=smem, size = 0x4, offset = 0x4, fixed_abs, tag = 'smem constant byte address 0x4 - core index']
  #allocation1 [shape = 'u32[144,128]{1,0:T(1,128)}', space=vmem, size = 0x12000, scoped, tag = 'internal scratch']
  %s0 = inlined_call_operand.vmem [shape: f32[16,128], index: 0, kind: input, shape index: {}]
  %s1 = inlined_call_operand.vmem [shape: f32[16,1], index: 1, kind: input, shape index: {}]
  %s2 = inlined_call_operand.vmem [shape: f32[16,1], index: 2, kind: input, shape index: {}]
  %s3 = inlined_call_operand.vmem [shape: f32[16,128], index: 3, kind: output, shape index: {}]
  %s4 = sld [smem:[#allocation0]]
  $region22: #{cell_stem0_forward.33} parent=0
    _
  %s6 = ssub.s32 1, %s4
  %s7 = scalar_select 0, %s6, %s4
  // Predicated region
  $region2: #{cell_stem0_forward.33} parent=0 // pred_check
    _
  $region3: #{cell_stem0_forward.33} parent=0 // pred_check_branch
    %9 = sbr.rel (0) target = $region5
  $region4: #{cell_stem0_forward.33} parent=0 // pred_region
    _
  $region5: #{cell_stem0_forward.33} parent=0 // pred_fallthru
    _
  // Predicated region
  $region6: #{cell_stem0_forward.33} parent=0 // pred_check
    _
  $region7: #{cell_stem0_forward.33} parent=0 // pred_check_branch
    %11 = sbr.rel (0) target = $region9
  $region8: #{cell_stem0_forward.33} parent=0 // pred_region
    _
  $region9: #{cell_stem0_forward.33} parent=0 // pred_fallthru
    _
  // Predicated region
  $region10: #{cell_stem0_forward.33} parent=0 // pred_check
    _
  $region11: #{cell_stem0_forward.33} parent=0 // pred_check_branch
    %13 = sbr.rel (0) target = $region13
  $region12: #{cell_stem0_forward.33} parent=0 // pred_region
    _
  $region13: #{cell_stem0_forward.33} parent=0 // pred_fallthru
    _
  %v14 = vld [vmem:[%s0] sm:$0xff]
  %v15 = vld [vmem:[%s0 + $0x8] sm:$0xff]
  %v16 = vld [vmem:[%s1] sm:$0xff]
  %v17 = vld [vmem:[%s1 + $0x8] sm:$0xff]
  %19 = vset.pattern.permute.xlu0 0
  %20 = vperm.xlu0 %19, %v16
  %v21 = vpop.permute.xlu0 %20
  %24 = vset.pattern.permute.xlu0 0
  %25 = vperm.xlu0 %24, %v17
  %v26 = vpop.permute.xlu0 %25
  %v28 = vmul.f32 %v14, %v21
  %v29 = vmul.f32 %v15, %v26
  %v30 = vld [vmem:[%s2] sm:$0xff]
  %v31 = vld [vmem:[%s2 + $0x8] sm:$0xff]
  %33 = vset.pattern.permute.xlu0 0
  %34 = vperm.xlu0 %33, %v30
  %v35 = vpop.permute.xlu0 %34
  %38 = vset.pattern.permute.xlu0 0
  %39 = vperm.xlu0 %38, %v31
  %v40 = vpop.permute.xlu0 %39
  %v42 = vadd.f32 %v28, %v35
  %v43 = vadd.f32 %v29, %v40
  %v44 = vmax.f32 %v42, 0.0
  %v45 = vmax.f32 %v43, 0.0
  %46 = vst [vmem:[%s3] sm:$0xff] %v44
  %47 = vst [vmem:[%s3 + $0x8] sm:$0xff] %v45
  // Predicated region
  $region14: #{cell_stem0_forward.33} parent=0 // pred_check
    _
  $region15: #{cell_stem0_forward.33} parent=0 // pred_check_branch
    %49 = sbr.rel (0) target = $region17
  $region16: #{cell_stem0_forward.33} parent=0 // pred_region
    _
  $region17: #{cell_stem0_forward.33} parent=0 // pred_fallthru
    _
  // Predicated region
  $region18: #{cell_stem0_forward.33} parent=0 // pred_check
    _
  $region19: #{cell_stem0_forward.33} parent=0 // pred_check_branch
    %51 = sbr.rel (0) target = $region21
  $region20: #{cell_stem0_forward.33} parent=0 // pred_region
    _
  $region21: #{cell_stem0_forward.33} parent=0 // pred_fallthru
    _

// kernel: cell_stem0_forward.34
$region0: #{cell_stem0_forward.34}
  #allocation0 [shape = 'u32[]', space=smem, size = 0x4, offset = 0x4, fixed_abs, tag = 'smem constant byte address 0x4 - core index']
  #allocation1 [shape = 'u32[144,128]{1,0:T(1,128)}', space=vmem, size = 0x12000, scoped, tag = 'internal scratch']
  %s0 = inlined_call_operand.vmem [shape: f32[400,128], index: 0, kind: input, shape index: {}]
  %s1 = inlined_call_operand.vmem [shape: f32[16,400], index: 1, kind: input, shape index: {}]
  %s2 = inlined_call_operand.vmem [shape: f32[16,128], index: 2, kind: output, shape index: {0}]
  %s3 = inlined_call_operand.vmem [shape: f32[1,16,1], index: 3, kind: output, shape index: {1}]
  %s4 = inlined_call_operand.vmem [shape: f32[1,16,1], index: 4, kind: output, shape index: {2}]
  %5 = xla_tuple %s2, %s3, %s4
  %s6 = sld [smem:[#allocation0]]
  $region34: #{cell_stem0_forward.34} parent=0
    _
  %s8 = ssub.s32 1, %s6
  %s9 = scalar_select 0, %s8, %s6
  // Predicated region
  $region2: #{cell_stem0_forward.34} parent=0 // pred_check
    _
  $region3: #{cell_stem0_forward.34} parent=0 // pred_check_branch
    %11 = sbr.rel (0) target = $region5
  $region4: #{cell_stem0_forward.34} parent=0 // pred_region
    _
  $region5: #{cell_stem0_forward.34} parent=0 // pred_fallthru
    _
  // Predicated region
  $region6: #{cell_stem0_forward.34} parent=0 // pred_check
    _
  $region7: #{cell_stem0_forward.34} parent=0 // pred_check_branch
    %13 = sbr.rel (0) target = $region9
  $region8: #{cell_stem0_forward.34} parent=0 // pred_region
    _
  $region9: #{cell_stem0_forward.34} parent=0 // pred_fallthru
    _
  %v14 = vld [vmem:[%s0] sm:$0xff]
  %v15 = vld [vmem:[%s0 + $0x8] sm:$0xff]
  %v16 = vld [vmem:[%s0 + $0x10] sm:$0xff]
  %v17 = vld [vmem:[%s0 + $0x18] sm:$0xff]
  %v18 = vld [vmem:[%s0 + $0x20] sm:$0xff]
  %v19 = vld [vmem:[%s0 + $0x28] sm:$0xff]
  %v20 = vld [vmem:[%s0 + $0x30] sm:$0xff]
  %v21 = vld [vmem:[%s0 + $0x38] sm:$0xff]
  %v22 = vld [vmem:[%s0 + $0x40] sm:$0xff]
  %v23 = vld [vmem:[%s0 + $0x48] sm:$0xff]
  %v24 = vld [vmem:[%s0 + $0x50] sm:$0xff]
  %v25 = vld [vmem:[%s0 + $0x58] sm:$0xff]
  %v26 = vld [vmem:[%s0 + $0x60] sm:$0xff]
  %v27 = vld [vmem:[%s0 + $0x68] sm:$0xff]
  %v28 = vld [vmem:[%s0 + $0x70] sm:$0xff]
  %v29 = vld [vmem:[%s0 + $0x78] sm:$0xff]
  %v30 = vld [vmem:[%s0 + $0x80] sm:$0xff]
  %v31 = vld [vmem:[%s0 + $0x88] sm:$0xff]
  %v32 = vld [vmem:[%s0 + $0x90] sm:$0xff]
  %v33 = vld [vmem:[%s0 + $0x98] sm:$0xff]
  %v34 = vld [vmem:[%s0 + $0xa0] sm:$0xff]
  %v35 = vld [vmem:[%s0 + $0xa8] sm:$0xff]
  %v36 = vld [vmem:[%s0 + $0xb0] sm:$0xff]
  %v37 = vld [vmem:[%s0 + $0xb8] sm:$0xff]
  %v38 = vld [vmem:[%s0 + $0xc0] sm:$0xff]
  %v39 = vld [vmem:[%s0 + $0xc8] sm:$0xff]
  %v40 = vld [vmem:[%s0 + $0xd0] sm:$0xff]
  %v41 = vld [vmem:[%s0 + $0xd8] sm:$0xff]
  %v42 = vld [vmem:[%s0 + $0xe0] sm:$0xff]
  %v43 = vld [vmem:[%s0 + $0xe8] sm:$0xff]
  %v44 = vld [vmem:[%s0 + $0xf0] sm:$0xff]
  %v45 = vld [vmem:[%s0 + $0xf8] sm:$0xff]
  %v46 = vld [vmem:[%s0 + $0x100] sm:$0xff]
  %v47 = vld [vmem:[%s0 + $0x108] sm:$0xff]
  %v48 = vld [vmem:[%s0 + $0x110] sm:$0xff]
  %v49 = vld [vmem:[%s0 + $0x118] sm:$0xff]
  %v50 = vld [vmem:[%s0 + $0x120] sm:$0xff]
  %v51 = vld [vmem:[%s0 + $0x128] sm:$0xff]
  %v52 = vld [vmem:[%s0 + $0x130] sm:$0xff]
  %v53 = vld [vmem:[%s0 + $0x138] sm:$0xff]
  %v54 = vld [vmem:[%s0 + $0x140] sm:$0xff]
  %v55 = vld [vmem:[%s0 + $0x148] sm:$0xff]
  %v56 = vld [vmem:[%s0 + $0x150] sm:$0xff]
  %v57 = vld [vmem:[%s0 + $0x158] sm:$0xff]
  %v58 = vld [vmem:[%s0 + $0x160] sm:$0xff]
  %v59 = vld [vmem:[%s0 + $0x168] sm:$0xff]
  %v60 = vld [vmem:[%s0 + $0x170] sm:$0xff]
  %v61 = vld [vmem:[%s0 + $0x178] sm:$0xff]
  %v62 = vld [vmem:[%s0 + $0x180] sm:$0xff]
  %v63 = vld [vmem:[%s0 + $0x188] sm:$0xff]
  %v64 = vld [vmem:[%s1] sm:$0xff]
  %v65 = vld [vmem:[%s1 + $0x8] sm:$0xff]
  %v66 = vld [vmem:[%s1 + $0x10] sm:$0xff]
  %v67 = vld [vmem:[%s1 + $0x18] sm:$0xff]
  %v68 = vld [vmem:[%s1 + $0x20] sm:$0xff]
  %v69 = vld [vmem:[%s1 + $0x28] sm:$0xff]
  %v70 = vld [vmem:[%s1 + $0x30] sm:$0xff]
  %v71 = vld [vmem:[%s1 + $0x38] sm:$0xff]
  %vm72 = vcmask 130048
  %v74 = vsel %vm72, %v67, 0
  %v77 = vsel %vm72, %v71, 0
  %79 = vmatprep.subr.mxu0 0.0
  %80 = vmatpush1.msra.mxu0 %v14
  %81 = vmatprep.subr.mxu0 0.0
  %82 = vmatpush1.msra.mxu0 %v15
  %83 = vmatprep.subr.mxu0 0.0
  %84 = vmatpush1.msra.mxu0 %v16
  %85 = vmatprep.subr.mxu0 0.0
  %86 = vmatpush1.msra.mxu0 %v17
  %87 = vmatprep.subr.mxu0 0.0
  %88 = vmatpush1.msra.mxu0 %v18
  %89 = vmatprep.subr.mxu0 0.0
  %90 = vmatpush1.msra.mxu0 %v19
  %91 = vmatprep.subr.mxu0 0.0
  %92 = vmatpush1.msra.mxu0 %v20
  %93 = vmatprep.subr.mxu0 0.0
  %94 = vmatpush1.msra.mxu0 %v21
  %95 = vmatprep.subr.mxu0 0.0
  %96 = vmatpush1.msra.mxu0 %v22
  %97 = vmatprep.subr.mxu0 0.0
  %98 = vmatpush1.msra.mxu0 %v23
  %99 = vmatprep.subr.mxu0 0.0
  %100 = vmatpush1.msra.mxu0 %v24
  %101 = vmatprep.subr.mxu0 0.0
  %102 = vmatpush1.msra.mxu0 %v25
  %103 = vmatprep.subr.mxu0 0.0
  %104 = vmatpush1.msra.mxu0 %v26
  %105 = vmatprep.subr.mxu0 0.0
  %106 = vmatpush1.msra.mxu0 %v27
  %107 = vmatprep.subr.mxu0 0.0
  %108 = vmatpush1.msra.mxu0 %v28
  %109 = vmatprep.subr.mxu0 0.0
  %110 = vmatpush1.msra.mxu0 %v29
  %111 = vmatprep.subr.mxu0 0.0
  %112 = vmatpush1.msra.mxu0 %v30
  %113 = vmatprep.subr.mxu0 0.0
  %114 = vmatpush1.msra.mxu0 %v31
  %115 = vmatprep.subr.mxu0 0.0
  %116 = vmatpush1.msra.mxu0 %v32
  %117 = vmatprep.subr.mxu0 0.0
  %118 = vmatpush1.msra.mxu0 %v33
  %119 = vmatprep.subr.mxu0 0.0
  %120 = vmatpush1.msra.mxu0 %v34
  %121 = vmatprep.subr.mxu0 0.0
  %122 = vmatpush1.msra.mxu0 %v35
  %123 = vmatprep.subr.mxu0 0.0
  %124 = vmatpush1.msra.mxu0 %v36
  %125 = vmatprep.subr.mxu0 0.0
  %126 = vmatpush1.msra.mxu0 %v37
  %127 = vmatprep.subr.mxu0 0.0
  %128 = vmatpush1.msra.mxu0 %v38
  %129 = vmatprep.subr.mxu0 0.0
  %130 = vmatpush1.msra.mxu0 %v39
  %131 = vmatprep.subr.mxu0 0.0
  %132 = vmatpush1.msra.mxu0 %v40
  %133 = vmatprep.subr.mxu0 0.0
  %134 = vmatpush1.msra.mxu0 %v41
  %135 = vmatprep.subr.mxu0 0.0
  %136 = vmatpush1.msra.mxu0 %v42
  %137 = vmatprep.subr.mxu0 0.0
  %138 = vmatpush1.msra.mxu0 %v43
  %139 = vmatprep.subr.mxu0 0.0
  %140 = vmatpush1.msra.mxu0 %v44
  %141 = vmatprep.subr.mxu0 0.0
  %142 = vmatpush1.msra.mxu0 %v45
  %143 = vmatprep.mubr.f32.mxu0 %v65
  %144 = vmatmul.mubr.f32.gmra.mrb[0].mxu0 %v64
  %v145 = vpop.f32.mrb[0].mxu0
  %v146 = vadd.f32 0.0, %v145
  %v147 = vpop.f32.mrb[0].mxu0
  %148 = vmatprep.mubr.f32.mxu0 %v69
  %149 = vmatmul.mubr.f32.gmra.mrb[0].mxu0 %v68
  %v150 = vpop.f32.mrb[0].mxu0
  %v151 = vadd.f32 0.0, %v150
  %v152 = vpop.f32.mrb[0].mxu0
  %153 = vdwg.mxu0
  %154 = vmatprep.subr.mxu0 0.0
  %155 = vmatpush1.msra.mxu0 %v46
  %156 = vmatprep.subr.mxu0 0.0
  %157 = vmatpush1.msra.mxu0 %v47
  %158 = vmatprep.subr.mxu0 0.0
  %159 = vmatpush1.msra.mxu0 %v48
  %160 = vmatprep.subr.mxu0 0.0
  %161 = vmatpush1.msra.mxu0 %v49
  %162 = vmatprep.subr.mxu0 0.0
  %163 = vmatpush1.msra.mxu0 %v50
  %164 = vmatprep.subr.mxu0 0.0
  %165 = vmatpush1.msra.mxu0 %v51
  %166 = vmatprep.subr.mxu0 0.0
  %167 = vmatpush1.msra.mxu0 %v52
  %168 = vmatprep.subr.mxu0 0.0
  %169 = vmatpush1.msra.mxu0 %v53
  %170 = vmatprep.subr.mxu0 0.0
  %171 = vmatpush1.msra.mxu0 %v54
  %172 = vmatprep.subr.mxu0 0.0
  %173 = vmatpush1.msra.mxu0 %v55
  %174 = vmatprep.subr.mxu0 0.0
  %175 = vmatpush1.msra.mxu0 %v56
  %176 = vmatprep.subr.mxu0 0.0
  %177 = vmatpush1.msra.mxu0 %v57
  %178 = vmatprep.subr.mxu0 0.0
  %179 = vmatpush1.msra.mxu0 %v58
  %180 = vmatprep.subr.mxu0 0.0
  %181 = vmatpush1.msra.mxu0 %v59
  %182 = vmatprep.subr.mxu0 0.0
  %183 = vmatpush1.msra.mxu0 %v60
  %184 = vmatprep.subr.mxu0 0.0
  %185 = vmatpush1.msra.mxu0 %v61
  %186 = vmatprep.subr.mxu0 0.0
  %187 = vmatpush1.msra.mxu0 %v62
  %188 = vmatprep.subr.mxu0 0.0
  %189 = vmatpush1.msra.mxu0 %v63
  %190 = vmatprep.subr.mxu0 0.0
  %191 = vmatpush1.msra.mxu0 0.0
  %192 = vmatprep.subr.mxu0 0.0
  %193 = vmatpush1.msra.mxu0 0.0
  %194 = vmatprep.subr.mxu0 0.0
  %195 = vmatpush1.msra.mxu0 0.0
  %196 = vmatprep.subr.mxu0 0.0
  %197 = vmatpush1.msra.mxu0 0.0
  %198 = vmatprep.subr.mxu0 0.0
  %199 = vmatpush1.msra.mxu0 0.0
  %200 = vmatprep.subr.mxu0 0.0
  %201 = vmatpush1.msra.mxu0 0.0
  %202 = vmatprep.subr.mxu0 0.0
  %203 = vmatpush1.msra.mxu0 0.0
  %204 = vmatprep.subr.mxu0 0.0
  %205 = vmatpush1.msra.mxu0 0.0
  %206 = vmatprep.subr.mxu0 0.0
  %207 = vmatpush1.msra.mxu0 0.0
  %208 = vmatprep.subr.mxu0 0.0
  %209 = vmatpush1.msra.mxu0 0.0
  %210 = vmatprep.subr.mxu0 0.0
  %211 = vmatpush1.msra.mxu0 0.0
  %212 = vmatprep.subr.mxu0 0.0
  %213 = vmatpush1.msra.mxu0 0.0
  %214 = vmatprep.subr.mxu0 0.0
  %215 = vmatpush1.msra.mxu0 0.0
  %216 = vmatprep.subr.mxu0 0.0
  %217 = vmatpush1.msra.mxu0 0.0
  %218 = vmatprep.mubr.f32.mxu0 %v74
  %219 = vmatmul.mubr.f32.gmra.mrb[0].mxu0 %v66
  %v220 = vpop.f32.mrb[0].mxu0
  %v221 = vadd.f32 %v146, %v220
  %v222 = vpop.f32.mrb[0].mxu0
  %223 = vmatprep.mubr.f32.mxu0 %v77
  %224 = vmatmul.mubr.f32.gmra.mrb[0].mxu0 %v70
  %v225 = vpop.f32.mrb[0].mxu0
  %v226 = vadd.f32 %v151, %v225
  %v227 = vpop.f32.mrb[0].mxu0
  %228 = vdwg.mxu0
  %229 = vst [vmem:[%s2] sm:$0xff] %v221
  %230 = vst [vmem:[%s2 + $0x8] sm:$0xff] %v226
  %231 = vadd.xlane.f32.xlu0 %v221
  %v232 = vpop.xlane.xlu0 %231
  %233 = vadd.xlane.f32.xlu0 %v226
  %v234 = vpop.xlane.xlu0 %233
  %vm235 = vcmask 7168
  %236 = vst.msk [vmem:[%s3] sm:$0xff] %vm235, %v232
  %237 = vst.msk [vmem:[%s3 + $0x8] sm:$0xff] %vm235, %v234
  %v238 = vmul.f32 %v221, %v221
  %v239 = vmul.f32 %v226, %v226
  %240 = vadd.xlane.f32.xlu0 %v238
  %v241 = vpop.xlane.xlu0 %240
  %242 = vadd.xlane.f32.xlu0 %v239
  %v243 = vpop.xlane.xlu0 %242
  %244 = vst.msk [vmem:[%s4] sm:$0xff] %vm235, %v241
  %245 = vst.msk [vmem:[%s4 + $0x8] sm:$0xff] %vm235, %v243
  // Predicated region
  $region10: #{cell_stem0_forward.34} parent=0 // pred_check
    _
  $region11: #{cell_stem0_forward.34} parent=0 // pred_check_branch
    %247 = sbr.rel (0) target = $region13
  $region12: #{cell_stem0_forward.34} parent=0 // pred_region
    _
  $region13: #{cell_stem0_forward.34} parent=0 // pred_fallthru
    _
  // Predicated region
  $region14: #{cell_stem0_forward.34} parent=0 // pred_check
    _
  $region15: #{cell_stem0_forward.34} parent=0 // pred_check_branch
    %249 = sbr.rel (0) target = $region17
  $region16: #{cell_stem0_forward.34} parent=0 // pred_region
    _
  $region17: #{cell_stem0_forward.34} parent=0 // pred_fallthru
    _
  // Predicated region
  $region18: #{cell_stem0_forward.34} parent=0 // pred_check
    _
  $region19: #{cell_stem0_forward.34} parent=0 // pred_check_branch
    %251 = sbr.rel (0) target = $region21
  $region20: #{cell_stem0_forward.34} parent=0 // pred_region
    _
  $region21: #{cell_stem0_forward.34} parent=0 // pred_fallthru
    _
  // Predicated region
  $region22: #{cell_stem0_forward.34} parent=0 // pred_check
    _
  $region23: #{cell_stem0_forward.34} parent=0 // pred_check_branch
    %253 = sbr.rel (0) target = $region25
  $region24: #{cell_stem0_forward.34} parent=0 // pred_region
    _
  $region25: #{cell_stem0_forward.34} parent=0 // pred_fallthru
    _
  // Predicated region
  $region26: #{cell_stem0_forward.34} parent=0 // pred_check
    _
  $region27: #{cell_stem0_forward.34} parent=0 // pred_check_branch
    %255 = sbr.rel (0) target = $region29
  $region28: #{cell_stem0_forward.34} parent=0 // pred_region
    _
  $region29: #{cell_stem0_forward.34} parent=0 // pred_fallthru
    _
  // Predicated region
  $region30: #{cell_stem0_forward.34} parent=0 // pred_check
    _
  $region31: #{cell_stem0_forward.34} parent=0 // pred_check_branch
    %257 = sbr.rel (0) target = $region33
  $region32: #{cell_stem0_forward.34} parent=0 // pred_region
    _
  $region33: #{cell_stem0_forward.34} parent=0 // pred_fallthru
    _

// kernel: cell_stem0_forward.21
$region0: #{cell_stem0_forward.21}
  #allocation0 [shape = 'u32[]', space=smem, size = 0x4, offset = 0x4, fixed_abs, tag = 'smem constant byte address 0x4 - core index']
  #allocation1 [shape = 'u32[144,128]{1,0:T(1,128)}', space=vmem, size = 0x12000, scoped, tag = 'internal scratch']
  %s0 = inlined_call_operand.vmem [shape: f32[8,512], index: 0, kind: input, shape index: {}]
  %s1 = inlined_call_operand.vmem [shape: f32[16,8], index: 1, kind: input, shape index: {}]
  %s2 = inlined_call_operand.vmem [shape: f32[16,512], index: 2, kind: output, shape index: {0}]
  %s3 = inlined_call_operand.vmem [shape: f32[1,16,1], index: 3, kind: output, shape index: {1}]
  %s4 = inlined_call_operand.vmem [shape: f32[1,16,1], index: 4, kind: output, shape index: {2}]
  %5 = xla_tuple %s2, %s3, %s4
  %s6 = sld [smem:[#allocation0]]
  $region34: #{cell_stem0_forward.21} parent=0
    _
  %s8 = ssub.s32 1, %s6
  %s9 = scalar_select 0, %s8, %s6
  // Predicated region
  $region2: #{cell_stem0_forward.21} parent=0 // pred_check
    _
  $region3: #{cell_stem0_forward.21} parent=0 // pred_check_branch
    %11 = sbr.rel (0) target = $region5
  $region4: #{cell_stem0_forward.21} parent=0 // pred_region
    _
  $region5: #{cell_stem0_forward.21} parent=0 // pred_fallthru
    _
  // Predicated region
  $region6: #{cell_stem0_forward.21} parent=0 // pred_check
    _
  $region7: #{cell_stem0_forward.21} parent=0 // pred_check_branch
    %13 = sbr.rel (0) target = $region9
  $region8: #{cell_stem0_forward.21} parent=0 // pred_region
    _
  $region9: #{cell_stem0_forward.21} parent=0 // pred_fallthru
    _
  %v14 = vld [vmem:[%s0] sm:$0xff]
  %v15 = vld [vmem:[%s0 + $0x8] sm:$0xff]
  %v16 = vld [vmem:[%s0 + $0x10] sm:$0xff]
  %v17 = vld [vmem:[%s0 + $0x18] sm:$0xff]
  %v18 = vmax.f32 %v14, 0.0
  %v19 = vmax.f32 %v15, 0.0
  %v20 = vmax.f32 %v16, 0.0
  %v21 = vmax.f32 %v17, 0.0
  %v22 = vld [vmem:[%s1] sm:$0xff]
  %v23 = vld [vmem:[%s1 + $0x8] sm:$0xff]
  %vm24 = vcmask 64512
  %v26 = vsel %vm24, %v22, 0
  %v29 = vsel %vm24, %v23, 0
  %31 = vmatprep.subr.mxu0 %v19
  %32 = vmatpush1.msra.mxu0 %v18
  %33 = vmatprep.subr.mxu0 0.0
  %34 = vmatpush1.msra.mxu0 0.0
  %35 = vmatprep.subr.mxu0 0.0
  %36 = vmatpush1.msra.mxu0 0.0
  %37 = vmatprep.subr.mxu0 0.0
  %38 = vmatpush1.msra.mxu0 0.0
  %39 = vmatprep.subr.mxu0 0.0
  %40 = vmatpush1.msra.mxu0 0.0
  %41 = vmatprep.subr.mxu0 0.0
  %42 = vmatpush1.msra.mxu0 0.0
  %43 = vmatprep.subr.mxu0 0.0
  %44 = vmatpush1.msra.mxu0 0.0
  %45 = vmatprep.subr.mxu0 0.0
  %46 = vmatpush1.msra.mxu0 0.0
  %47 = vmatprep.subr.mxu0 0.0
  %48 = vmatpush1.msra.mxu0 0.0
  %49 = vmatprep.subr.mxu0 0.0
  %50 = vmatpush1.msra.mxu0 0.0
  %51 = vmatprep.subr.mxu0 0.0
  %52 = vmatpush1.msra.mxu0 0.0
  %53 = vmatprep.subr.mxu0 0.0
  %54 = vmatpush1.msra.mxu0 0.0
  %55 = vmatprep.subr.mxu0 0.0
  %56 = vmatpush1.msra.mxu0 0.0
  %57 = vmatprep.subr.mxu0 0.0
  %58 = vmatpush1.msra.mxu0 0.0
  %59 = vmatprep.subr.mxu0 0.0
  %60 = vmatpush1.msra.mxu0 0.0
  %61 = vmatprep.subr.mxu0 0.0
  %62 = vmatpush1.msra.mxu0 0.0
  %63 = vmatprep.subr.mxu0 0.0
  %64 = vmatpush1.msra.mxu0 0.0
  %65 = vmatprep.subr.mxu0 0.0
  %66 = vmatpush1.msra.mxu0 0.0
  %67 = vmatprep.subr.mxu0 0.0
  %68 = vmatpush1.msra.mxu0 0.0
  %69 = vmatprep.subr.mxu0 0.0
  %70 = vmatpush1.msra.mxu0 0.0
  %71 = vmatprep.subr.mxu0 0.0
  %72 = vmatpush1.msra.mxu0 0.0
  %73 = vmatprep.subr.mxu0 0.0
  %74 = vmatpush1.msra.mxu0 0.0
  %75 = vmatprep.subr.mxu0 0.0
  %76 = vmatpush1.msra.mxu0 0.0
  %77 = vmatprep.subr.mxu0 0.0
  %78 = vmatpush1.msra.mxu0 0.0
  %79 = vmatprep.subr.mxu0 0.0
  %80 = vmatpush1.msra.mxu0 0.0
  %81 = vmatprep.subr.mxu0 0.0
  %82 = vmatpush1.msra.mxu0 0.0
  %83 = vmatprep.subr.mxu0 0.0
  %84 = vmatpush1.msra.mxu0 0.0
  %85 = vmatprep.subr.mxu0 0.0
  %86 = vmatpush1.msra.mxu0 0.0
  %87 = vmatprep.subr.mxu0 0.0
  %88 = vmatpush1.msra.mxu0 0.0
  %89 = vmatprep.subr.mxu0 0.0
  %90 = vmatpush1.msra.mxu0 0.0
  %91 = vmatprep.subr.mxu0 0.0
  %92 = vmatpush1.msra.mxu0 0.0
  %93 = vmatprep.subr.mxu0 0.0
  %94 = vmatpush1.msra.mxu0 0.0
  %95 = vmatprep.mubr.f32.mxu0 0.0
  %96 = vmatmul.mubr.f32.gmra.mrb[0].mxu0 %v26
  %v97 = vpop.f32.mrb[0].mxu0
  %v98 = vadd.f32 0.0, %v97
  %v99 = vpop.f32.mrb[0].mxu0
  %v100 = vadd.f32 0.0, %v99
  %101 = vmatprep.mubr.f32.mxu0 0.0
  %102 = vmatmul.mubr.f32.gmra.mrb[0].mxu0 %v29
  %v103 = vpop.f32.mrb[0].mxu0
  %v104 = vadd.f32 0.0, %v103
  %v105 = vpop.f32.mrb[0].mxu0
  %v106 = vadd.f32 0.0, %v105
  %107 = vdwg.mxu0
  %108 = vmatprep.subr.mxu0 %v21
  %109 = vmatpush1.msra.mxu0 %v20
  %110 = vmatprep.subr.mxu0 0.0
  %111 = vmatpush1.msra.mxu0 0.0
  %112 = vmatprep.subr.mxu0 0.0
  %113 = vmatpush1.msra.mxu0 0.0
  %114 = vmatprep.subr.mxu0 0.0
  %115 = vmatpush1.msra.mxu0 0.0
  %116 = vmatprep.subr.mxu0 0.0
  %117 = vmatpush1.msra.mxu0 0.0
  %118 = vmatprep.subr.mxu0 0.0
  %119 = vmatpush1.msra.mxu0 0.0
  %120 = vmatprep.subr.mxu0 0.0
  %121 = vmatpush1.msra.mxu0 0.0
  %122 = vmatprep.subr.mxu0 0.0
  %123 = vmatpush1.msra.mxu0 0.0
  %124 = vmatprep.subr.mxu0 0.0
  %125 = vmatpush1.msra.mxu0 0.0
  %126 = vmatprep.subr.mxu0 0.0
  %127 = vmatpush1.msra.mxu0 0.0
  %128 = vmatprep.subr.mxu0 0.0
  %129 = vmatpush1.msra.mxu0 0.0
  %130 = vmatprep.subr.mxu0 0.0
  %131 = vmatpush1.msra.mxu0 0.0
  %132 = vmatprep.subr.mxu0 0.0
  %133 = vmatpush1.msra.mxu0 0.0
  %134 = vmatprep.subr.mxu0 0.0
  %135 = vmatpush1.msra.mxu0 0.0
  %136 = vmatprep.subr.mxu0 0.0
  %137 = vmatpush1.msra.mxu0 0.0
  %138 = vmatprep.subr.mxu0 0.0
  %139 = vmatpush1.msra.mxu0 0.0
  %140 = vmatprep.subr.mxu0 0.0
  %141 = vmatpush1.msra.mxu0 0.0
  %142 = vmatprep.subr.mxu0 0.0
  %143 = vmatpush1.msra.mxu0 0.0
  %144 = vmatprep.subr.mxu0 0.0
  %145 = vmatpush1.msra.mxu0 0.0
  %146 = vmatprep.subr.mxu0 0.0
  %147 = vmatpush1.msra.mxu0 0.0
  %148 = vmatprep.subr.mxu0 0.0
  %149 = vmatpush1.msra.mxu0 0.0
  %150 = vmatprep.subr.mxu0 0.0
  %151 = vmatpush1.msra.mxu0 0.0
  %152 = vmatprep.subr.mxu0 0.0
  %153 = vmatpush1.msra.mxu0 0.0
  %154 = vmatprep.subr.mxu0 0.0
  %155 = vmatpush1.msra.mxu0 0.0
  %156 = vmatprep.subr.mxu0 0.0
  %157 = vmatpush1.msra.mxu0 0.0
  %158 = vmatprep.subr.mxu0 0.0
  %159 = vmatpush1.msra.mxu0 0.0
  %160 = vmatprep.subr.mxu0 0.0
  %161 = vmatpush1.msra.mxu0 0.0
  %162 = vmatprep.subr.mxu0 0.0
  %163 = vmatpush1.msra.mxu0 0.0
  %164 = vmatprep.subr.mxu0 0.0
  %165 = vmatpush1.msra.mxu0 0.0
  %166 = vmatprep.subr.mxu0 0.0
  %167 = vmatpush1.msra.mxu0 0.0
  %168 = vmatprep.subr.mxu0 0.0
  %169 = vmatpush1.msra.mxu0 0.0
  %170 = vmatprep.subr.mxu0 0.0
  %171 = vmatpush1.msra.mxu0 0.0
  %172 = vmatprep.mubr.f32.mxu0 0.0
  %173 = vmatmul.mubr.f32.gmra.mrb[0].mxu0 %v26
  %v174 = vpop.f32.mrb[0].mxu0
  %v175 = vadd.f32 0.0, %v174
  %v176 = vpop.f32.mrb[0].mxu0
  %v177 = vadd.f32 0.0, %v176
  %178 = vmatprep.mubr.f32.mxu0 0.0
  %179 = vmatmul.mubr.f32.gmra.mrb[0].mxu0 %v29
  %v180 = vpop.f32.mrb[0].mxu0
  %v181 = vadd.f32 0.0, %v180
  %v182 = vpop.f32.mrb[0].mxu0
  %v183 = vadd.f32 0.0, %v182
  %184 = vdwg.mxu0
  %185 = vst [vmem:[%s2] sm:$0xff] %v98
  %186 = vst [vmem:[%s2 + $0x8] sm:$0xff] %v100
  %187 = vst [vmem:[%s2 + $0x10] sm:$0xff] %v175
  %188 = vst [vmem:[%s2 + $0x18] sm:$0xff] %v177
  %189 = vst [vmem:[%s2 + $0x20] sm:$0xff] %v104
  %190 = vst [vmem:[%s2 + $0x28] sm:$0xff] %v106
  %191 = vst [vmem:[%s2 + $0x30] sm:$0xff] %v181
  %192 = vst [vmem:[%s2 + $0x38] sm:$0xff] %v183
  %v193 = vadd.f32 %v98, %v100
  %v194 = vadd.f32 %v193, %v175
  %v195 = vadd.f32 %v194, %v177
  %196 = vadd.xlane.f32.xlu0 %v195
  %v197 = vpop.xlane.xlu0 %196
  %v198 = vadd.f32 %v104, %v106
  %v199 = vadd.f32 %v198, %v181
  %v200 = vadd.f32 %v199, %v183
  %201 = vadd.xlane.f32.xlu0 %v200
  %v202 = vpop.xlane.xlu0 %201
  %vm203 = vcmask 7168
  %204 = vst.msk [vmem:[%s3] sm:$0xff] %vm203, %v197
  %205 = vst.msk [vmem:[%s3 + $0x8] sm:$0xff] %vm203, %v202
  %v206 = vmul.f32 %v98, %v98
  %v207 = vmul.f32 %v100, %v100
  %v208 = vmul.f32 %v175, %v175
  %v209 = vmul.f32 %v177, %v177
  %v210 = vmul.f32 %v104, %v104
  %v211 = vmul.f32 %v106, %v106
  %v212 = vmul.f32 %v181, %v181
  %v213 = vmul.f32 %v183, %v183
  %v214 = vadd.f32 %v206, %v207
  %v215 = vadd.f32 %v214, %v208
  %v216 = vadd.f32 %v215, %v209
  %217 = vadd.xlane.f32.xlu0 %v216
  %v218 = vpop.xlane.xlu0 %217
  %v219 = vadd.f32 %v210, %v211
  %v220 = vadd.f32 %v219, %v212
  %v221 = vadd.f32 %v220, %v213
  %222 = vadd.xlane.f32.xlu0 %v221
  %v223 = vpop.xlane.xlu0 %222
  %224 = vst.msk [vmem:[%s4] sm:$0xff] %vm203, %v218
  %225 = vst.msk [vmem:[%s4 + $0x8] sm:$0xff] %vm203, %v223
  // Predicated region
  $region10: #{cell_stem0_forward.21} parent=0 // pred_check
    _
  $region11: #{cell_stem0_forward.21} parent=0 // pred_check_branch
    %227 = sbr.rel (0) target = $region13
  $region12: #{cell_stem0_forward.21} parent=0 // pred_region
    _
  $region13: #{cell_stem0_forward.21} parent=0 // pred_fallthru
    _
  // Predicated region
  $region14: #{cell_stem0_forward.21} parent=0 // pred_check
    _
  $region15: #{cell_stem0_forward.21} parent=0 // pred_check_branch
    %229 = sbr.rel (0) target = $region17
  $region16: #{cell_stem0_forward.21} parent=0 // pred_region
    _
  $region17: #{cell_stem0_forward.21} parent=0 // pred_fallthru
    _
  // Predicated region
  $region18: #{cell_stem0_forward.21} parent=0 // pred_check
    _
  $region19: #{cell_stem0_forward.21} parent=0 // pred_check_branch
    %231 = sbr.rel (0) target = $region21
  $region20: #{cell_stem0_forward.21} parent=0 // pred_region
    _
  $region21: #{cell_stem0_forward.21} parent=0 // pred_fallthru
    _
  // Predicated region
  $region22: #{cell_stem0_forward.21} parent=0 // pred_check
    _
  $region23: #{cell_stem0_forward.21} parent=0 // pred_check_branch
    %233 = sbr.rel (0) target = $region25
  $region24: #{cell_stem0_forward.21} parent=0 // pred_region
    _
  $region25: #{cell_stem0_forward.21} parent=0 // pred_fallthru
    _
  // Predicated region
  $region26: #{cell_stem0_forward.21} parent=0 // pred_check
    _
  $region27: #{cell_stem0_forward.21} parent=0 // pred_check_branch
    %235 = sbr.rel (0) target = $region29
  $region28: #{cell_stem0_forward.21} parent=0 // pred_region
    _
  $region29: #{cell_stem0_forward.21} parent=0 // pred_fallthru
    _
  // Predicated region
  $region30: #{cell_stem0_forward.21} parent=0 // pred_check
    _
  $region31: #{cell_stem0_forward.21} parent=0 // pred_check_branch
    %237 = sbr.rel (0) target = $region33
  $region32: #{cell_stem0_forward.21} parent=0 // pred_region
    _
  $region33: #{cell_stem0_forward.21} parent=0 // pred_fallthru
    _

// kernel: cell_stem0_forward.22
$region0: #{cell_stem0_forward.22}
  #allocation0 [shape = 'u32[]', space=smem, size = 0x4, offset = 0x4, fixed_abs, tag = 'smem constant byte address 0x4 - core index']
  #allocation1 [shape = 'u32[144,128]{1,0:T(1,128)}', space=vmem, size = 0x12000, scoped, tag = 'internal scratch']
  %s0 = inlined_call_operand.vmem [shape: f32[16,512], index: 0, kind: input, shape index: {}]
  %s1 = inlined_call_operand.vmem [shape: f32[16,1], index: 1, kind: input, shape index: {}]
  %s2 = inlined_call_operand.vmem [shape: f32[16,1], index: 2, kind: input, shape index: {}]
  %s3 = inlined_call_operand.vmem [shape: f32[16,512], index: 3, kind: output, shape index: {}]
  %s4 = sld [smem:[#allocation0]]
  $region22: #{cell_stem0_forward.22} parent=0
    _
  %s6 = ssub.s32 1, %s4
  %s7 = scalar_select 0, %s6, %s4
  // Predicated region
  $region2: #{cell_stem0_forward.22} parent=0 // pred_check
    _
  $region3: #{cell_stem0_forward.22} parent=0 // pred_check_branch
    %9 = sbr.rel (0) target = $region5
  $region4: #{cell_stem0_forward.22} parent=0 // pred_region
    _
  $region5: #{cell_stem0_forward.22} parent=0 // pred_fallthru
    _
  // Predicated region
  $region6: #{cell_stem0_forward.22} parent=0 // pred_check
    _
  $region7: #{cell_stem0_forward.22} parent=0 // pred_check_branch
    %11 = sbr.rel (0) target = $region9
  $region8: #{cell_stem0_forward.22} parent=0 // pred_region
    _
  $region9: #{cell_stem0_forward.22} parent=0 // pred_fallthru
    _
  // Predicated region
  $region10: #{cell_stem0_forward.22} parent=0 // pred_check
    _
  $region11: #{cell_stem0_forward.22} parent=0 // pred_check_branch
    %13 = sbr.rel (0) target = $region13
  $region12: #{cell_stem0_forward.22} parent=0 // pred_region
    _
  $region13: #{cell_stem0_forward.22} parent=0 // pred_fallthru
    _
  %v14 = vld [vmem:[%s0] sm:$0xff]
  %v15 = vld [vmem:[%s0 + $0x8] sm:$0xff]
  %v16 = vld [vmem:[%s0 + $0x10] sm:$0xff]
  %v17 = vld [vmem:[%s0 + $0x18] sm:$0xff]
  %v18 = vld [vmem:[%s0 + $0x20] sm:$0xff]
  %v19 = vld [vmem:[%s0 + $0x28] sm:$0xff]
  %v20 = vld [vmem:[%s0 + $0x30] sm:$0xff]
  %v21 = vld [vmem:[%s0 + $0x38] sm:$0xff]
  %v22 = vld [vmem:[%s1] sm:$0xff]
  %v23 = vld [vmem:[%s1 + $0x8] sm:$0xff]
  %25 = vset.pattern.permute.xlu0 0
  %26 = vperm.xlu0 %25, %v22
  %v27 = vpop.permute.xlu0 %26
  %30 = vset.pattern.permute.xlu0 0
  %31 = vperm.xlu0 %30, %v23
  %v32 = vpop.permute.xlu0 %31
  %v34 = vmul.f32 %v14, %v27
  %v35 = vmul.f32 %v15, %v27
  %v36 = vmul.f32 %v16, %v27
  %v37 = vmul.f32 %v17, %v27
  %v38 = vmul.f32 %v18, %v32
  %v39 = vmul.f32 %v19, %v32
  %v40 = vmul.f32 %v20, %v32
  %v41 = vmul.f32 %v21, %v32
  %v42 = vld [vmem:[%s2] sm:$0xff]
  %v43 = vld [vmem:[%s2 + $0x8] sm:$0xff]
  %45 = vset.pattern.permute.xlu0 0
  %46 = vperm.xlu0 %45, %v42
  %v47 = vpop.permute.xlu0 %46
  %50 = vset.pattern.permute.xlu0 0
  %51 = vperm.xlu0 %50, %v43
  %v52 = vpop.permute.xlu0 %51
  %v54 = vadd.f32 %v34, %v47
  %v55 = vadd.f32 %v35, %v47
  %v56 = vadd.f32 %v36, %v47
  %v57 = vadd.f32 %v37, %v47
  %v58 = vadd.f32 %v38, %v52
  %v59 = vadd.f32 %v39, %v52
  %v60 = vadd.f32 %v40, %v52
  %v61 = vadd.f32 %v41, %v52
  %62 = vst [vmem:[%s3] sm:$0xff] %v54
  %63 = vst [vmem:[%s3 + $0x8] sm:$0xff] %v55
  %64 = vst [vmem:[%s3 + $0x10] sm:$0xff] %v56
  %65 = vst [vmem:[%s3 + $0x18] sm:$0xff] %v57
  %66 = vst [vmem:[%s3 + $0x20] sm:$0xff] %v58
  %67 = vst [vmem:[%s3 + $0x28] sm:$0xff] %v59
  %68 = vst [vmem:[%s3 + $0x30] sm:$0xff] %v60
  %69 = vst [vmem:[%s3 + $0x38] sm:$0xff] %v61
  // Predicated region
  $region14: #{cell_stem0_forward.22} parent=0 // pred_check
    _
  $region15: #{cell_stem0_forward.22} parent=0 // pred_check_branch
    %71 = sbr.rel (0) target = $region17
  $region16: #{cell_stem0_forward.22} parent=0 // pred_region
    _
  $region17: #{cell_stem0_forward.22} parent=0 // pred_fallthru
    _
  // Predicated region
  $region18: #{cell_stem0_forward.22} parent=0 // pred_check
    _
  $region19: #{cell_stem0_forward.22} parent=0 // pred_check_branch
    %73 = sbr.rel (0) target = $region21
  $region20: #{cell_stem0_forward.22} parent=0 // pred_region
    _
  $region21: #{cell_stem0_forward.22} parent=0 // pred_fallthru
    _

// kernel: cell_stem0_forward.37
$region0: #{cell_stem0_forward.37}
  #allocation0 [shape = 'u32[]', space=smem, size = 0x4, offset = 0x4, fixed_abs, tag = 'smem constant byte address 0x4 - core index']
  #allocation1 [shape = 'u32[144,128]{1,0:T(1,128)}', space=vmem, size = 0x12000, scoped, tag = 'internal scratch']
  %s0 = inlined_call_operand.vmem [shape: f32[16,128], index: 0, kind: input, shape index: {}]
  %s1 = inlined_call_operand.vmem [shape: f32[16,1], index: 1, kind: input, shape index: {}]
  %s2 = inlined_call_operand.vmem [shape: f32[16,1], index: 2, kind: input, shape index: {}]
  %s3 = inlined_call_operand.vmem [shape: f32[16,128], index: 3, kind: input, shape index: {}]
  %s4 = inlined_call_operand.vmem [shape: f32[16,128], index: 4, kind: output, shape index: {}]
  %s5 = sld [smem:[#allocation0]]
  $region26: #{cell_stem0_forward.37} parent=0
    _
  %s7 = ssub.s32 1, %s5
  %s8 = scalar_select 0, %s7, %s5
  // Predicated region
  $region2: #{cell_stem0_forward.37} parent=0 // pred_check
    _
  $region3: #{cell_stem0_forward.37} parent=0 // pred_check_branch
    %10 = sbr.rel (0) target = $region5
  $region4: #{cell_stem0_forward.37} parent=0 // pred_region
    _
  $region5: #{cell_stem0_forward.37} parent=0 // pred_fallthru
    _
  // Predicated region
  $region6: #{cell_stem0_forward.37} parent=0 // pred_check
    _
  $region7: #{cell_stem0_forward.37} parent=0 // pred_check_branch
    %12 = sbr.rel (0) target = $region9
  $region8: #{cell_stem0_forward.37} parent=0 // pred_region
    _
  $region9: #{cell_stem0_forward.37} parent=0 // pred_fallthru
    _
  // Predicated region
  $region10: #{cell_stem0_forward.37} parent=0 // pred_check
    _
  $region11: #{cell_stem0_forward.37} parent=0 // pred_check_branch
    %14 = sbr.rel (0) target = $region13
  $region12: #{cell_stem0_forward.37} parent=0 // pred_region
    _
  $region13: #{cell_stem0_forward.37} parent=0 // pred_fallthru
    _
  // Predicated region
  $region14: #{cell_stem0_forward.37} parent=0 // pred_check
    _
  $region15: #{cell_stem0_forward.37} parent=0 // pred_check_branch
    %16 = sbr.rel (0) target = $region17
  $region16: #{cell_stem0_forward.37} parent=0 // pred_region
    _
  $region17: #{cell_stem0_forward.37} parent=0 // pred_fallthru
    _
  %v17 = vld [vmem:[%s0] sm:$0xff]
  %v18 = vld [vmem:[%s0 + $0x8] sm:$0xff]
  %v19 = vld [vmem:[%s1] sm:$0xff]
  %v20 = vld [vmem:[%s1 + $0x8] sm:$0xff]
  %22 = vset.pattern.permute.xlu0 0
  %23 = vperm.xlu0 %22, %v19
  %v24 = vpop.permute.xlu0 %23
  %27 = vset.pattern.permute.xlu0 0
  %28 = vperm.xlu0 %27, %v20
  %v29 = vpop.permute.xlu0 %28
  %v31 = vmul.f32 %v17, %v24
  %v32 = vmul.f32 %v18, %v29
  %v33 = vld [vmem:[%s2] sm:$0xff]
  %v34 = vld [vmem:[%s2 + $0x8] sm:$0xff]
  %36 = vset.pattern.permute.xlu0 0
  %37 = vperm.xlu0 %36, %v33
  %v38 = vpop.permute.xlu0 %37
  %41 = vset.pattern.permute.xlu0 0
  %42 = vperm.xlu0 %41, %v34
  %v43 = vpop.permute.xlu0 %42
  %v45 = vadd.f32 %v31, %v38
  %v46 = vadd.f32 %v32, %v43
  %v47 = vld [vmem:[%s3] sm:$0xff]
  %v48 = vld [vmem:[%s3 + $0x8] sm:$0xff]
  %v49 = vadd.f32 %v45, %v47
  %v50 = vadd.f32 %v46, %v48
  %51 = vst [vmem:[%s4] sm:$0xff] %v49
  %52 = vst [vmem:[%s4 + $0x8] sm:$0xff] %v50
  // Predicated region
  $region18: #{cell_stem0_forward.37} parent=0 // pred_check
    _
  $region19: #{cell_stem0_forward.37} parent=0 // pred_check_branch
    %54 = sbr.rel (0) target = $region21
  $region20: #{cell_stem0_forward.37} parent=0 // pred_region
    _
  $region21: #{cell_stem0_forward.37} parent=0 // pred_fallthru
    _
  // Predicated region
  $region22: #{cell_stem0_forward.37} parent=0 // pred_check
    _
  $region23: #{cell_stem0_forward.37} parent=0 // pred_check_branch
    %56 = sbr.rel (0) target = $region25
  $region24: #{cell_stem0_forward.37} parent=0 // pred_region
    _
  $region25: #{cell_stem0_forward.37} parent=0 // pred_fallthru
    _

// kernel: cell_stem0_forward.29
$region0: #{cell_stem0_forward.29}
  #allocation0 [shape = 'u32[]', space=smem, size = 0x4, offset = 0x4, fixed_abs, tag = 'smem constant byte address 0x4 - core index']
  #allocation1 [shape = 'u32[144,128]{1,0:T(1,128)}', space=vmem, size = 0x12000, scoped, tag = 'internal scratch']
  %s0 = inlined_call_operand.vmem [shape: f32[392,128], index: 0, kind: input, shape index: {}]
  %s1 = inlined_call_operand.vmem [shape: f32[16,392], index: 1, kind: input, shape index: {}]
  %s2 = inlined_call_operand.vmem [shape: f32[16,128], index: 2, kind: output, shape index: {0}]
  %s3 = inlined_call_operand.vmem [shape: f32[1,16,1], index: 3, kind: output, shape index: {1}]
  %s4 = inlined_call_operand.vmem [shape: f32[1,16,1], index: 4, kind: output, shape index: {2}]
  %5 = xla_tuple %s2, %s3, %s4
  %s6 = sld [smem:[#allocation0]]
  $region34: #{cell_stem0_forward.29} parent=0
    _
  %s8 = ssub.s32 1, %s6
  %s9 = scalar_select 0, %s8, %s6
  // Predicated region
  $region2: #{cell_stem0_forward.29} parent=0 // pred_check
    _
  $region3: #{cell_stem0_forward.29} parent=0 // pred_check_branch
    %11 = sbr.rel (0) target = $region5
  $region4: #{cell_stem0_forward.29} parent=0 // pred_region
    _
  $region5: #{cell_stem0_forward.29} parent=0 // pred_fallthru
    _
  // Predicated region
  $region6: #{cell_stem0_forward.29} parent=0 // pred_check
    _
  $region7: #{cell_stem0_forward.29} parent=0 // pred_check_branch
    %13 = sbr.rel (0) target = $region9
  $region8: #{cell_stem0_forward.29} parent=0 // pred_region
    _
  $region9: #{cell_stem0_forward.29} parent=0 // pred_fallthru
    _
  %v14 = vld [vmem:[%s0] sm:$0xff]
  %v15 = vld [vmem:[%s0 + $0x8] sm:$0xff]
  %v16 = vld [vmem:[%s0 + $0x10] sm:$0xff]
  %v17 = vld [vmem:[%s0 + $0x18] sm:$0xff]
  %v18 = vld [vmem:[%s0 + $0x20] sm:$0xff]
  %v19 = vld [vmem:[%s0 + $0x28] sm:$0xff]
  %v20 = vld [vmem:[%s0 + $0x30] sm:$0xff]
  %v21 = vld [vmem:[%s0 + $0x38] sm:$0xff]
  %v22 = vld [vmem:[%s0 + $0x40] sm:$0xff]
  %v23 = vld [vmem:[%s0 + $0x48] sm:$0xff]
  %v24 = vld [vmem:[%s0 + $0x50] sm:$0xff]
  %v25 = vld [vmem:[%s0 + $0x58] sm:$0xff]
  %v26 = vld [vmem:[%s0 + $0x60] sm:$0xff]
  %v27 = vld [vmem:[%s0 + $0x68] sm:$0xff]
  %v28 = vld [vmem:[%s0 + $0x70] sm:$0xff]
  %v29 = vld [vmem:[%s0 + $0x78] sm:$0xff]
  %v30 = vld [vmem:[%s0 + $0x80] sm:$0xff]
  %v31 = vld [vmem:[%s0 + $0x88] sm:$0xff]
  %v32 = vld [vmem:[%s0 + $0x90] sm:$0xff]
  %v33 = vld [vmem:[%s0 + $0x98] sm:$0xff]
  %v34 = vld [vmem:[%s0 + $0xa0] sm:$0xff]
  %v35 = vld [vmem:[%s0 + $0xa8] sm:$0xff]
  %v36 = vld [vmem:[%s0 + $0xb0] sm:$0xff]
  %v37 = vld [vmem:[%s0 + $0xb8] sm:$0xff]
  %v38 = vld [vmem:[%s0 + $0xc0] sm:$0xff]
  %v39 = vld [vmem:[%s0 + $0xc8] sm:$0xff]
  %v40 = vld [vmem:[%s0 + $0xd0] sm:$0xff]
  %v41 = vld [vmem:[%s0 + $0xd8] sm:$0xff]
  %v42 = vld [vmem:[%s0 + $0xe0] sm:$0xff]
  %v43 = vld [vmem:[%s0 + $0xe8] sm:$0xff]
  %v44 = vld [vmem:[%s0 + $0xf0] sm:$0xff]
  %v45 = vld [vmem:[%s0 + $0xf8] sm:$0xff]
  %v46 = vld [vmem:[%s0 + $0x100] sm:$0xff]
  %v47 = vld [vmem:[%s0 + $0x108] sm:$0xff]
  %v48 = vld [vmem:[%s0 + $0x110] sm:$0xff]
  %v49 = vld [vmem:[%s0 + $0x118] sm:$0xff]
  %v50 = vld [vmem:[%s0 + $0x120] sm:$0xff]
  %v51 = vld [vmem:[%s0 + $0x128] sm:$0xff]
  %v52 = vld [vmem:[%s0 + $0x130] sm:$0xff]
  %v53 = vld [vmem:[%s0 + $0x138] sm:$0xff]
  %v54 = vld [vmem:[%s0 + $0x140] sm:$0xff]
  %v55 = vld [vmem:[%s0 + $0x148] sm:$0xff]
  %v56 = vld [vmem:[%s0 + $0x150] sm:$0xff]
  %v57 = vld [vmem:[%s0 + $0x158] sm:$0xff]
  %v58 = vld [vmem:[%s0 + $0x160] sm:$0xff]
  %v59 = vld [vmem:[%s0 + $0x168] sm:$0xff]
  %v60 = vld [vmem:[%s0 + $0x170] sm:$0xff]
  %v61 = vld [vmem:[%s0 + $0x178] sm:$0xff]
  %v62 = vld [vmem:[%s0 + $0x180] sm:$0xff]
  %v63 = vmax.f32 %v14, 0.0
  %v64 = vmax.f32 %v15, 0.0
  %v65 = vmax.f32 %v16, 0.0
  %v66 = vmax.f32 %v17, 0.0
  %v67 = vmax.f32 %v18, 0.0
  %v68 = vmax.f32 %v19, 0.0
  %v69 = vmax.f32 %v20, 0.0
  %v70 = vmax.f32 %v21, 0.0
  %v71 = vmax.f32 %v22, 0.0
  %v72 = vmax.f32 %v23, 0.0
  %v73 = vmax.f32 %v24, 0.0
  %v74 = vmax.f32 %v25, 0.0
  %v75 = vmax.f32 %v26, 0.0
  %v76 = vmax.f32 %v27, 0.0
  %v77 = vmax.f32 %v28, 0.0
  %v78 = vmax.f32 %v29, 0.0
  %v79 = vmax.f32 %v30, 0.0
  %v80 = vmax.f32 %v31, 0.0
  %v81 = vmax.f32 %v32, 0.0
  %v82 = vmax.f32 %v33, 0.0
  %v83 = vmax.f32 %v34, 0.0
  %v84 = vmax.f32 %v35, 0.0
  %v85 = vmax.f32 %v36, 0.0
  %v86 = vmax.f32 %v37, 0.0
  %v87 = vmax.f32 %v38, 0.0
  %v88 = vmax.f32 %v39, 0.0
  %v89 = vmax.f32 %v40, 0.0
  %v90 = vmax.f32 %v41, 0.0
  %v91 = vmax.f32 %v42, 0.0
  %v92 = vmax.f32 %v43, 0.0
  %v93 = vmax.f32 %v44, 0.0
  %v94 = vmax.f32 %v45, 0.0
  %v95 = vmax.f32 %v46, 0.0
  %v96 = vmax.f32 %v47, 0.0
  %v97 = vmax.f32 %v48, 0.0
  %v98 = vmax.f32 %v49, 0.0
  %v99 = vmax.f32 %v50, 0.0
  %v100 = vmax.f32 %v51, 0.0
  %v101 = vmax.f32 %v52, 0.0
  %v102 = vmax.f32 %v53, 0.0
  %v103 = vmax.f32 %v54, 0.0
  %v104 = vmax.f32 %v55, 0.0
  %v105 = vmax.f32 %v56, 0.0
  %v106 = vmax.f32 %v57, 0.0
  %v107 = vmax.f32 %v58, 0.0
  %v108 = vmax.f32 %v59, 0.0
  %v109 = vmax.f32 %v60, 0.0
  %v110 = vmax.f32 %v61, 0.0
  %v111 = vmax.f32 %v62, 0.0
  %v112 = vld [vmem:[%s1] sm:$0xff]
  %v113 = vld [vmem:[%s1 + $0x8] sm:$0xff]
  %v114 = vld [vmem:[%s1 + $0x10] sm:$0xff]
  %v115 = vld [vmem:[%s1 + $0x18] sm:$0xff]
  %v116 = vld [vmem:[%s1 + $0x20] sm:$0xff]
  %v117 = vld [vmem:[%s1 + $0x28] sm:$0xff]
  %v118 = vld [vmem:[%s1 + $0x30] sm:$0xff]
  %v119 = vld [vmem:[%s1 + $0x38] sm:$0xff]
  %vm120 = vcmask 64512
  %v122 = vsel %vm120, %v115, 0
  %v125 = vsel %vm120, %v119, 0
  %127 = vmatprep.subr.mxu0 0.0
  %128 = vmatpush1.msra.mxu0 %v63
  %129 = vmatprep.subr.mxu0 0.0
  %130 = vmatpush1.msra.mxu0 %v64
  %131 = vmatprep.subr.mxu0 0.0
  %132 = vmatpush1.msra.mxu0 %v65
  %133 = vmatprep.subr.mxu0 0.0
  %134 = vmatpush1.msra.mxu0 %v66
  %135 = vmatprep.subr.mxu0 0.0
  %136 = vmatpush1.msra.mxu0 %v67
  %137 = vmatprep.subr.mxu0 0.0
  %138 = vmatpush1.msra.mxu0 %v68
  %139 = vmatprep.subr.mxu0 0.0
  %140 = vmatpush1.msra.mxu0 %v69
  %141 = vmatprep.subr.mxu0 0.0
  %142 = vmatpush1.msra.mxu0 %v70
  %143 = vmatprep.subr.mxu0 0.0
  %144 = vmatpush1.msra.mxu0 %v71
  %145 = vmatprep.subr.mxu0 0.0
  %146 = vmatpush1.msra.mxu0 %v72
  %147 = vmatprep.subr.mxu0 0.0
  %148 = vmatpush1.msra.mxu0 %v73
  %149 = vmatprep.subr.mxu0 0.0
  %150 = vmatpush1.msra.mxu0 %v74
  %151 = vmatprep.subr.mxu0 0.0
  %152 = vmatpush1.msra.mxu0 %v75
  %153 = vmatprep.subr.mxu0 0.0
  %154 = vmatpush1.msra.mxu0 %v76
  %155 = vmatprep.subr.mxu0 0.0
  %156 = vmatpush1.msra.mxu0 %v77
  %157 = vmatprep.subr.mxu0 0.0
  %158 = vmatpush1.msra.mxu0 %v78
  %159 = vmatprep.subr.mxu0 0.0
  %160 = vmatpush1.msra.mxu0 %v79
  %161 = vmatprep.subr.mxu0 0.0
  %162 = vmatpush1.msra.mxu0 %v80
  %163 = vmatprep.subr.mxu0 0.0
  %164 = vmatpush1.msra.mxu0 %v81
  %165 = vmatprep.subr.mxu0 0.0
  %166 = vmatpush1.msra.mxu0 %v82
  %167 = vmatprep.subr.mxu0 0.0
  %168 = vmatpush1.msra.mxu0 %v83
  %169 = vmatprep.subr.mxu0 0.0
  %170 = vmatpush1.msra.mxu0 %v84
  %171 = vmatprep.subr.mxu0 0.0
  %172 = vmatpush1.msra.mxu0 %v85
  %173 = vmatprep.subr.mxu0 0.0
  %174 = vmatpush1.msra.mxu0 %v86
  %175 = vmatprep.subr.mxu0 0.0
  %176 = vmatpush1.msra.mxu0 %v87
  %177 = vmatprep.subr.mxu0 0.0
  %178 = vmatpush1.msra.mxu0 %v88
  %179 = vmatprep.subr.mxu0 0.0
  %180 = vmatpush1.msra.mxu0 %v89
  %181 = vmatprep.subr.mxu0 0.0
  %182 = vmatpush1.msra.mxu0 %v90
  %183 = vmatprep.subr.mxu0 0.0
  %184 = vmatpush1.msra.mxu0 %v91
  %185 = vmatprep.subr.mxu0 0.0
  %186 = vmatpush1.msra.mxu0 %v92
  %187 = vmatprep.subr.mxu0 0.0
  %188 = vmatpush1.msra.mxu0 %v93
  %189 = vmatprep.subr.mxu0 0.0
  %190 = vmatpush1.msra.mxu0 %v94
  %191 = vmatprep.mubr.f32.mxu0 %v113
  %192 = vmatmul.mubr.f32.gmra.mrb[0].mxu0 %v112
  %v193 = vpop.f32.mrb[0].mxu0
  %v194 = vadd.f32 0.0, %v193
  %v195 = vpop.f32.mrb[0].mxu0
  %196 = vmatprep.mubr.f32.mxu0 %v117
  %197 = vmatmul.mubr.f32.gmra.mrb[0].mxu0 %v116
  %v198 = vpop.f32.mrb[0].mxu0
  %v199 = vadd.f32 0.0, %v198
  %v200 = vpop.f32.mrb[0].mxu0
  %201 = vdwg.mxu0
  %202 = vmatprep.subr.mxu0 0.0
  %203 = vmatpush1.msra.mxu0 %v95
  %204 = vmatprep.subr.mxu0 0.0
  %205 = vmatpush1.msra.mxu0 %v96
  %206 = vmatprep.subr.mxu0 0.0
  %207 = vmatpush1.msra.mxu0 %v97
  %208 = vmatprep.subr.mxu0 0.0
  %209 = vmatpush1.msra.mxu0 %v98
  %210 = vmatprep.subr.mxu0 0.0
  %211 = vmatpush1.msra.mxu0 %v99
  %212 = vmatprep.subr.mxu0 0.0
  %213 = vmatpush1.msra.mxu0 %v100
  %214 = vmatprep.subr.mxu0 0.0
  %215 = vmatpush1.msra.mxu0 %v101
  %216 = vmatprep.subr.mxu0 0.0
  %217 = vmatpush1.msra.mxu0 %v102
  %218 = vmatprep.subr.mxu0 0.0
  %219 = vmatpush1.msra.mxu0 %v103
  %220 = vmatprep.subr.mxu0 0.0
  %221 = vmatpush1.msra.mxu0 %v104
  %222 = vmatprep.subr.mxu0 0.0
  %223 = vmatpush1.msra.mxu0 %v105
  %224 = vmatprep.subr.mxu0 0.0
  %225 = vmatpush1.msra.mxu0 %v106
  %226 = vmatprep.subr.mxu0 0.0
  %227 = vmatpush1.msra.mxu0 %v107
  %228 = vmatprep.subr.mxu0 0.0
  %229 = vmatpush1.msra.mxu0 %v108
  %230 = vmatprep.subr.mxu0 0.0
  %231 = vmatpush1.msra.mxu0 %v109
  %232 = vmatprep.subr.mxu0 0.0
  %233 = vmatpush1.msra.mxu0 %v110
  %234 = vmatprep.subr.mxu0 0.0
  %235 = vmatpush1.msra.mxu0 %v111
  %236 = vmatprep.subr.mxu0 0.0
  %237 = vmatpush1.msra.mxu0 0.0
  %238 = vmatprep.subr.mxu0 0.0
  %239 = vmatpush1.msra.mxu0 0.0
  %240 = vmatprep.subr.mxu0 0.0
  %241 = vmatpush1.msra.mxu0 0.0
  %242 = vmatprep.subr.mxu0 0.0
  %243 = vmatpush1.msra.mxu0 0.0
  %244 = vmatprep.subr.mxu0 0.0
  %245 = vmatpush1.msra.mxu0 0.0
  %246 = vmatprep.subr.mxu0 0.0
  %247 = vmatpush1.msra.mxu0 0.0
  %248 = vmatprep.subr.mxu0 0.0
  %249 = vmatpush1.msra.mxu0 0.0
  %250 = vmatprep.subr.mxu0 0.0
  %251 = vmatpush1.msra.mxu0 0.0
  %252 = vmatprep.subr.mxu0 0.0
  %253 = vmatpush1.msra.mxu0 0.0
  %254 = vmatprep.subr.mxu0 0.0
  %255 = vmatpush1.msra.mxu0 0.0
  %256 = vmatprep.subr.mxu0 0.0
  %257 = vmatpush1.msra.mxu0 0.0
  %258 = vmatprep.subr.mxu0 0.0
  %259 = vmatpush1.msra.mxu0 0.0
  %260 = vmatprep.subr.mxu0 0.0
  %261 = vmatpush1.msra.mxu0 0.0
  %262 = vmatprep.subr.mxu0 0.0
  %263 = vmatpush1.msra.mxu0 0.0
  %264 = vmatprep.subr.mxu0 0.0
  %265 = vmatpush1.msra.mxu0 0.0
  %266 = vmatprep.mubr.f32.mxu0 %v122
  %267 = vmatmul.mubr.f32.gmra.mrb[0].mxu0 %v114
  %v268 = vpop.f32.mrb[0].mxu0
  %v269 = vadd.f32 %v194, %v268
  %v270 = vpop.f32.mrb[0].mxu0
  %271 = vmatprep.mubr.f32.mxu0 %v125
  %272 = vmatmul.mubr.f32.gmra.mrb[0].mxu0 %v118
  %v273 = vpop.f32.mrb[0].mxu0
  %v274 = vadd.f32 %v199, %v273
  %v275 = vpop.f32.mrb[0].mxu0
  %276 = vdwg.mxu0
  %277 = vst [vmem:[%s2] sm:$0xff] %v269
  %278 = vst [vmem:[%s2 + $0x8] sm:$0xff] %v274
  %279 = vadd.xlane.f32.xlu0 %v269
  %v280 = vpop.xlane.xlu0 %279
  %281 = vadd.xlane.f32.xlu0 %v274
  %v282 = vpop.xlane.xlu0 %281
  %vm283 = vcmask 7168
  %284 = vst.msk [vmem:[%s3] sm:$0xff] %vm283, %v280
  %285 = vst.msk [vmem:[%s3 + $0x8] sm:$0xff] %vm283, %v282
  %v286 = vmul.f32 %v269, %v269
  %v287 = vmul.f32 %v274, %v274
  %288 = vadd.xlane.f32.xlu0 %v286
  %v289 = vpop.xlane.xlu0 %288
  %290 = vadd.xlane.f32.xlu0 %v287
  %v291 = vpop.xlane.xlu0 %290
  %292 = vst.msk [vmem:[%s4] sm:$0xff] %vm283, %v289
  %293 = vst.msk [vmem:[%s4 + $0x8] sm:$0xff] %vm283, %v291
  // Predicated region
  $region10: #{cell_stem0_forward.29} parent=0 // pred_check
    _
  $region11: #{cell_stem0_forward.29} parent=0 // pred_check_branch
    %295 = sbr.rel (0) target = $region13
  $region12: #{cell_stem0_forward.29} parent=0 // pred_region
    _
  $region13: #{cell_stem0_forward.29} parent=0 // pred_fallthru
    _
  // Predicated region
  $region14: #{cell_stem0_forward.29} parent=0 // pred_check
    _
  $region15: #{cell_stem0_forward.29} parent=0 // pred_check_branch
    %297 = sbr.rel (0) target = $region17
  $region16: #{cell_stem0_forward.29} parent=0 // pred_region
    _
  $region17: #{cell_stem0_forward.29} parent=0 // pred_fallthru
    _
  // Predicated region
  $region18: #{cell_stem0_forward.29} parent=0 // pred_check
    _
  $region19: #{cell_stem0_forward.29} parent=0 // pred_check_branch
    %299 = sbr.rel (0) target = $region21
  $region20: #{cell_stem0_forward.29} parent=0 // pred_region
    _
  $region21: #{cell_stem0_forward.29} parent=0 // pred_fallthru
    _
  // Predicated region
  $region22: #{cell_stem0_forward.29} parent=0 // pred_check
    _
  $region23: #{cell_stem0_forward.29} parent=0 // pred_check_branch
    %301 = sbr.rel (0) target = $region25
  $region24: #{cell_stem0_forward.29} parent=0 // pred_region
    _
  $region25: #{cell_stem0_forward.29} parent=0 // pred_fallthru
    _
  // Predicated region
  $region26: #{cell_stem0_forward.29} parent=0 // pred_check
    _
  $region27: #{cell_stem0_forward.29} parent=0 // pred_check_branch
    %303 = sbr.rel (0) target = $region29
  $region28: #{cell_stem0_forward.29} parent=0 // pred_region
    _
  $region29: #{cell_stem0_forward.29} parent=0 // pred_fallthru
    _
  // Predicated region
  $region30: #{cell_stem0_forward.29} parent=0 // pred_check
    _
  $region31: #{cell_stem0_forward.29} parent=0 // pred_check_branch
    %305 = sbr.rel (0) target = $region33
  $region32: #{cell_stem0_forward.29} parent=0 // pred_region
    _
  $region33: #{cell_stem0_forward.29} parent=0 // pred_fallthru
    _

// kernel: cell_stem0_forward.31
$region0: #{cell_stem0_forward.31}
  #allocation0 [shape = 'u32[]', space=smem, size = 0x4, offset = 0x4, fixed_abs, tag = 'smem constant byte address 0x4 - core index']
  #allocation1 [shape = 'u32[144,128]{1,0:T(1,128)}', space=vmem, size = 0x12000, scoped, tag = 'internal scratch']
  %s0 = inlined_call_operand.vmem [shape: f32[784,128], index: 0, kind: input, shape index: {}]
  %s1 = inlined_call_operand.vmem [shape: f32[16,784], index: 1, kind: input, shape index: {}]
  %s2 = inlined_call_operand.vmem [shape: f32[16,128], index: 2, kind: output, shape index: {0}]
  %s3 = inlined_call_operand.vmem [shape: f32[1,16,1], index: 3, kind: output, shape index: {1}]
  %s4 = inlined_call_operand.vmem [shape: f32[1,16,1], index: 4, kind: output, shape index: {2}]
  %5 = xla_tuple %s2, %s3, %s4
  %s6 = sld [smem:[#allocation0]]
  $region34: #{cell_stem0_forward.31} parent=0
    _
  %s8 = ssub.s32 1, %s6
  %s9 = scalar_select 0, %s8, %s6
  // Predicated region
  $region2: #{cell_stem0_forward.31} parent=0 // pred_check
    _
  $region3: #{cell_stem0_forward.31} parent=0 // pred_check_branch
    %11 = sbr.rel (0) target = $region5
  $region4: #{cell_stem0_forward.31} parent=0 // pred_region
    _
  $region5: #{cell_stem0_forward.31} parent=0 // pred_fallthru
    _
  // Predicated region
  $region6: #{cell_stem0_forward.31} parent=0 // pred_check
    _
  $region7: #{cell_stem0_forward.31} parent=0 // pred_check_branch
    %13 = sbr.rel (0) target = $region9
  $region8: #{cell_stem0_forward.31} parent=0 // pred_region
    _
  $region9: #{cell_stem0_forward.31} parent=0 // pred_fallthru
    _
  %v14 = vld [vmem:[%s0] sm:$0xff]
  %v15 = vld [vmem:[%s0 + $0x8] sm:$0xff]
  %v16 = vld [vmem:[%s0 + $0x10] sm:$0xff]
  %v17 = vld [vmem:[%s0 + $0x18] sm:$0xff]
  %v18 = vld [vmem:[%s0 + $0x20] sm:$0xff]
  %v19 = vld [vmem:[%s0 + $0x28] sm:$0xff]
  %v20 = vld [vmem:[%s0 + $0x30] sm:$0xff]
  %v21 = vld [vmem:[%s0 + $0x38] sm:$0xff]
  %v22 = vld [vmem:[%s0 + $0x40] sm:$0xff]
  %v23 = vld [vmem:[%s0 + $0x48] sm:$0xff]
  %v24 = vld [vmem:[%s0 + $0x50] sm:$0xff]
  %v25 = vld [vmem:[%s0 + $0x58] sm:$0xff]
  %v26 = vld [vmem:[%s0 + $0x60] sm:$0xff]
  %v27 = vld [vmem:[%s0 + $0x68] sm:$0xff]
  %v28 = vld [vmem:[%s0 + $0x70] sm:$0xff]
  %v29 = vld [vmem:[%s0 + $0x78] sm:$0xff]
  %v30 = vld [vmem:[%s0 + $0x80] sm:$0xff]
  %v31 = vld [vmem:[%s0 + $0x88] sm:$0xff]
  %v32 = vld [vmem:[%s0 + $0x90] sm:$0xff]
  %v33 = vld [vmem:[%s0 + $0x98] sm:$0xff]
  %v34 = vld [vmem:[%s0 + $0xa0] sm:$0xff]
  %v35 = vld [vmem:[%s0 + $0xa8] sm:$0xff]
  %v36 = vld [vmem:[%s0 + $0xb0] sm:$0xff]
  %v37 = vld [vmem:[%s0 + $0xb8] sm:$0xff]
  %v38 = vld [vmem:[%s0 + $0xc0] sm:$0xff]
  %v39 = vld [vmem:[%s0 + $0xc8] sm:$0xff]
  %v40 = vld [vmem:[%s0 + $0xd0] sm:$0xff]
  %v41 = vld [vmem:[%s0 + $0xd8] sm:$0xff]
  %v42 = vld [vmem:[%s0 + $0xe0] sm:$0xff]
  %v43 = vld [vmem:[%s0 + $0xe8] sm:$0xff]
  %v44 = vld [vmem:[%s0 + $0xf0] sm:$0xff]
  %v45 = vld [vmem:[%s0 + $0xf8] sm:$0xff]
  %v46 = vld [vmem:[%s0 + $0x100] sm:$0xff]
  %v47 = vld [vmem:[%s0 + $0x108] sm:$0xff]
  %v48 = vld [vmem:[%s0 + $0x110] sm:$0xff]
  %v49 = vld [vmem:[%s0 + $0x118] sm:$0xff]
  %v50 = vld [vmem:[%s0 + $0x120] sm:$0xff]
  %v51 = vld [vmem:[%s0 + $0x128] sm:$0xff]
  %v52 = vld [vmem:[%s0 + $0x130] sm:$0xff]
  %v53 = vld [vmem:[%s0 + $0x138] sm:$0xff]
  %v54 = vld [vmem:[%s0 + $0x140] sm:$0xff]
  %v55 = vld [vmem:[%s0 + $0x148] sm:$0xff]
  %v56 = vld [vmem:[%s0 + $0x150] sm:$0xff]
  %v57 = vld [vmem:[%s0 + $0x158] sm:$0xff]
  %v58 = vld [vmem:[%s0 + $0x160] sm:$0xff]
  %v59 = vld [vmem:[%s0 + $0x168] sm:$0xff]
  %v60 = vld [vmem:[%s0 + $0x170] sm:$0xff]
  %v61 = vld [vmem:[%s0 + $0x178] sm:$0xff]
  %v62 = vld [vmem:[%s0 + $0x180] sm:$0xff]
  %v63 = vld [vmem:[%s0 + $0x188] sm:$0xff]
  %v64 = vld [vmem:[%s0 + $0x190] sm:$0xff]
  %v65 = vld [vmem:[%s0 + $0x198] sm:$0xff]
  %v66 = vld [vmem:[%s0 + $0x1a0] sm:$0xff]
  %v67 = vld [vmem:[%s0 + $0x1a8] sm:$0xff]
  %v68 = vld [vmem:[%s0 + $0x1b0] sm:$0xff]
  %v69 = vld [vmem:[%s0 + $0x1b8] sm:$0xff]
  %v70 = vld [vmem:[%s0 + $0x1c0] sm:$0xff]
  %v71 = vld [vmem:[%s0 + $0x1c8] sm:$0xff]
  %v72 = vld [vmem:[%s0 + $0x1d0] sm:$0xff]
  %v73 = vld [vmem:[%s0 + $0x1d8] sm:$0xff]
  %v74 = vld [vmem:[%s0 + $0x1e0] sm:$0xff]
  %v75 = vld [vmem:[%s0 + $0x1e8] sm:$0xff]
  %v76 = vld [vmem:[%s0 + $0x1f0] sm:$0xff]
  %v77 = vld [vmem:[%s0 + $0x1f8] sm:$0xff]
  %v78 = vld [vmem:[%s0 + $0x200] sm:$0xff]
  %v79 = vld [vmem:[%s0 + $0x208] sm:$0xff]
  %v80 = vld [vmem:[%s0 + $0x210] sm:$0xff]
  %v81 = vld [vmem:[%s0 + $0x218] sm:$0xff]
  %v82 = vld [vmem:[%s0 + $0x220] sm:$0xff]
  %v83 = vld [vmem:[%s0 + $0x228] sm:$0xff]
  %v84 = vld [vmem:[%s0 + $0x230] sm:$0xff]
  %v85 = vld [vmem:[%s0 + $0x238] sm:$0xff]
  %v86 = vld [vmem:[%s0 + $0x240] sm:$0xff]
  %v87 = vld [vmem:[%s0 + $0x248] sm:$0xff]
  %v88 = vld [vmem:[%s0 + $0x250] sm:$0xff]
  %v89 = vld [vmem:[%s0 + $0x258] sm:$0xff]
  %v90 = vld [vmem:[%s0 + $0x260] sm:$0xff]
  %v91 = vld [vmem:[%s0 + $0x268] sm:$0xff]
  %v92 = vld [vmem:[%s0 + $0x270] sm:$0xff]
  %v93 = vld [vmem:[%s0 + $0x278] sm:$0xff]
  %v94 = vld [vmem:[%s0 + $0x280] sm:$0xff]
  %v95 = vld [vmem:[%s0 + $0x288] sm:$0xff]
  %v96 = vld [vmem:[%s0 + $0x290] sm:$0xff]
  %v97 = vld [vmem:[%s0 + $0x298] sm:$0xff]
  %v98 = vld [vmem:[%s0 + $0x2a0] sm:$0xff]
  %v99 = vld [vmem:[%s0 + $0x2a8] sm:$0xff]
  %v100 = vld [vmem:[%s0 + $0x2b0] sm:$0xff]
  %v101 = vld [vmem:[%s0 + $0x2b8] sm:$0xff]
  %v102 = vld [vmem:[%s0 + $0x2c0] sm:$0xff]
  %v103 = vld [vmem:[%s0 + $0x2c8] sm:$0xff]
  %v104 = vld [vmem:[%s0 + $0x2d0] sm:$0xff]
  %v105 = vld [vmem:[%s0 + $0x2d8] sm:$0xff]
  %v106 = vld [vmem:[%s0 + $0x2e0] sm:$0xff]
  %v107 = vld [vmem:[%s0 + $0x2e8] sm:$0xff]
  %v108 = vld [vmem:[%s0 + $0x2f0] sm:$0xff]
  %v109 = vld [vmem:[%s0 + $0x2f8] sm:$0xff]
  %v110 = vld [vmem:[%s0 + $0x300] sm:$0xff]
  %v111 = vld [vmem:[%s0 + $0x308] sm:$0xff]
  %v112 = vld [vmem:[%s1] sm:$0xff]
  %v113 = vld [vmem:[%s1 + $0x8] sm:$0xff]
  %v114 = vld [vmem:[%s1 + $0x10] sm:$0xff]
  %v115 = vld [vmem:[%s1 + $0x18] sm:$0xff]
  %v116 = vld [vmem:[%s1 + $0x20] sm:$0xff]
  %v117 = vld [vmem:[%s1 + $0x28] sm:$0xff]
  %v118 = vld [vmem:[%s1 + $0x30] sm:$0xff]
  %v119 = vld [vmem:[%s1 + $0x38] sm:$0xff]
  %v120 = vld [vmem:[%s1 + $0x40] sm:$0xff]
  %v121 = vld [vmem:[%s1 + $0x48] sm:$0xff]
  %v122 = vld [vmem:[%s1 + $0x50] sm:$0xff]
  %v123 = vld [vmem:[%s1 + $0x58] sm:$0xff]
  %v124 = vld [vmem:[%s1 + $0x60] sm:$0xff]
  %v125 = vld [vmem:[%s1 + $0x68] sm:$0xff]
  %vm126 = vcmask 130048
  %v128 = vsel %vm126, %v118, 0
  %v131 = vsel %vm126, %v125, 0
  %133 = vmatprep.subr.mxu0 0.0
  %134 = vmatpush1.msra.mxu0 %v14
  %135 = vmatprep.subr.mxu0 0.0
  %136 = vmatpush1.msra.mxu0 %v15
  %137 = vmatprep.subr.mxu0 0.0
  %138 = vmatpush1.msra.mxu0 %v16
  %139 = vmatprep.subr.mxu0 0.0
  %140 = vmatpush1.msra.mxu0 %v17
  %141 = vmatprep.subr.mxu0 0.0
  %142 = vmatpush1.msra.mxu0 %v18
  %143 = vmatprep.subr.mxu0 0.0
  %144 = vmatpush1.msra.mxu0 %v19
  %145 = vmatprep.subr.mxu0 0.0
  %146 = vmatpush1.msra.mxu0 %v20
  %147 = vmatprep.subr.mxu0 0.0
  %148 = vmatpush1.msra.mxu0 %v21
  %149 = vmatprep.subr.mxu0 0.0
  %150 = vmatpush1.msra.mxu0 %v22
  %151 = vmatprep.subr.mxu0 0.0
  %152 = vmatpush1.msra.mxu0 %v23
  %153 = vmatprep.subr.mxu0 0.0
  %154 = vmatpush1.msra.mxu0 %v24
  %155 = vmatprep.subr.mxu0 0.0
  %156 = vmatpush1.msra.mxu0 %v25
  %157 = vmatprep.subr.mxu0 0.0
  %158 = vmatpush1.msra.mxu0 %v26
  %159 = vmatprep.subr.mxu0 0.0
  %160 = vmatpush1.msra.mxu0 %v27
  %161 = vmatprep.subr.mxu0 0.0
  %162 = vmatpush1.msra.mxu0 %v28
  %163 = vmatprep.subr.mxu0 0.0
  %164 = vmatpush1.msra.mxu0 %v29
  %165 = vmatprep.subr.mxu0 0.0
  %166 = vmatpush1.msra.mxu0 %v30
  %167 = vmatprep.subr.mxu0 0.0
  %168 = vmatpush1.msra.mxu0 %v31
  %169 = vmatprep.subr.mxu0 0.0
  %170 = vmatpush1.msra.mxu0 %v32
  %171 = vmatprep.subr.mxu0 0.0
  %172 = vmatpush1.msra.mxu0 %v33
  %173 = vmatprep.subr.mxu0 0.0
  %174 = vmatpush1.msra.mxu0 %v34
  %175 = vmatprep.subr.mxu0 0.0
  %176 = vmatpush1.msra.mxu0 %v35
  %177 = vmatprep.subr.mxu0 0.0
  %178 = vmatpush1.msra.mxu0 %v36
  %179 = vmatprep.subr.mxu0 0.0
  %180 = vmatpush1.msra.mxu0 %v37
  %181 = vmatprep.subr.mxu0 0.0
  %182 = vmatpush1.msra.mxu0 %v38
  %183 = vmatprep.subr.mxu0 0.0
  %184 = vmatpush1.msra.mxu0 %v39
  %185 = vmatprep.subr.mxu0 0.0
  %186 = vmatpush1.msra.mxu0 %v40
  %187 = vmatprep.subr.mxu0 0.0
  %188 = vmatpush1.msra.mxu0 %v41
  %189 = vmatprep.subr.mxu0 0.0
  %190 = vmatpush1.msra.mxu0 %v42
  %191 = vmatprep.subr.mxu0 0.0
  %192 = vmatpush1.msra.mxu0 %v43
  %193 = vmatprep.subr.mxu0 0.0
  %194 = vmatpush1.msra.mxu0 %v44
  %195 = vmatprep.subr.mxu0 0.0
  %196 = vmatpush1.msra.mxu0 %v45
  %197 = vmatprep.mubr.f32.mxu0 %v113
  %198 = vmatmul.mubr.f32.gmra.mrb[0].mxu0 %v112
  %v199 = vpop.f32.mrb[0].mxu0
  %v200 = vadd.f32 0.0, %v199
  %v201 = vpop.f32.mrb[0].mxu0
  %202 = vmatprep.mubr.f32.mxu0 %v120
  %203 = vmatmul.mubr.f32.gmra.mrb[0].mxu0 %v119
  %v204 = vpop.f32.mrb[0].mxu0
  %v205 = vadd.f32 0.0, %v204
  %v206 = vpop.f32.mrb[0].mxu0
  %207 = vdwg.mxu0
  %208 = vmatprep.subr.mxu0 0.0
  %209 = vmatpush1.msra.mxu0 %v46
  %210 = vmatprep.subr.mxu0 0.0
  %211 = vmatpush1.msra.mxu0 %v47
  %212 = vmatprep.subr.mxu0 0.0
  %213 = vmatpush1.msra.mxu0 %v48
  %214 = vmatprep.subr.mxu0 0.0
  %215 = vmatpush1.msra.mxu0 %v49
  %216 = vmatprep.subr.mxu0 0.0
  %217 = vmatpush1.msra.mxu0 %v50
  %218 = vmatprep.subr.mxu0 0.0
  %219 = vmatpush1.msra.mxu0 %v51
  %220 = vmatprep.subr.mxu0 0.0
  %221 = vmatpush1.msra.mxu0 %v52
  %222 = vmatprep.subr.mxu0 0.0
  %223 = vmatpush1.msra.mxu0 %v53
  %224 = vmatprep.subr.mxu0 0.0
  %225 = vmatpush1.msra.mxu0 %v54
  %226 = vmatprep.subr.mxu0 0.0
  %227 = vmatpush1.msra.mxu0 %v55
  %228 = vmatprep.subr.mxu0 0.0
  %229 = vmatpush1.msra.mxu0 %v56
  %230 = vmatprep.subr.mxu0 0.0
  %231 = vmatpush1.msra.mxu0 %v57
  %232 = vmatprep.subr.mxu0 0.0
  %233 = vmatpush1.msra.mxu0 %v58
  %234 = vmatprep.subr.mxu0 0.0
  %235 = vmatpush1.msra.mxu0 %v59
  %236 = vmatprep.subr.mxu0 0.0
  %237 = vmatpush1.msra.mxu0 %v60
  %238 = vmatprep.subr.mxu0 0.0
  %239 = vmatpush1.msra.mxu0 %v61
  %240 = vmatprep.subr.mxu0 0.0
  %241 = vmatpush1.msra.mxu0 %v62
  %242 = vmatprep.subr.mxu0 0.0
  %243 = vmatpush1.msra.mxu0 %v63
  %244 = vmatprep.subr.mxu0 0.0
  %245 = vmatpush1.msra.mxu0 %v64
  %246 = vmatprep.subr.mxu0 0.0
  %247 = vmatpush1.msra.mxu0 %v65
  %248 = vmatprep.subr.mxu0 0.0
  %249 = vmatpush1.msra.mxu0 %v66
  %250 = vmatprep.subr.mxu0 0.0
  %251 = vmatpush1.msra.mxu0 %v67
  %252 = vmatprep.subr.mxu0 0.0
  %253 = vmatpush1.msra.mxu0 %v68
  %254 = vmatprep.subr.mxu0 0.0
  %255 = vmatpush1.msra.mxu0 %v69
  %256 = vmatprep.subr.mxu0 0.0
  %257 = vmatpush1.msra.mxu0 %v70
  %258 = vmatprep.subr.mxu0 0.0
  %259 = vmatpush1.msra.mxu0 %v71
  %260 = vmatprep.subr.mxu0 0.0
  %261 = vmatpush1.msra.mxu0 %v72
  %262 = vmatprep.subr.mxu0 0.0
  %263 = vmatpush1.msra.mxu0 %v73
  %264 = vmatprep.subr.mxu0 0.0
  %265 = vmatpush1.msra.mxu0 %v74
  %266 = vmatprep.subr.mxu0 0.0
  %267 = vmatpush1.msra.mxu0 %v75
  %268 = vmatprep.subr.mxu0 0.0
  %269 = vmatpush1.msra.mxu0 %v76
  %270 = vmatprep.subr.mxu0 0.0
  %271 = vmatpush1.msra.mxu0 %v77
  %272 = vmatprep.mubr.f32.mxu0 %v115
  %273 = vmatmul.mubr.f32.gmra.mrb[0].mxu0 %v114
  %v274 = vpop.f32.mrb[0].mxu0
  %v275 = vadd.f32 %v200, %v274
  %v276 = vpop.f32.mrb[0].mxu0
  %277 = vmatprep.mubr.f32.mxu0 %v122
  %278 = vmatmul.mubr.f32.gmra.mrb[0].mxu0 %v121
  %v279 = vpop.f32.mrb[0].mxu0
  %v280 = vadd.f32 %v205, %v279
  %v281 = vpop.f32.mrb[0].mxu0
  %282 = vdwg.mxu0
  %283 = vmatprep.subr.mxu0 0.0
  %284 = vmatpush1.msra.mxu0 %v78
  %285 = vmatprep.subr.mxu0 0.0
  %286 = vmatpush1.msra.mxu0 %v79
  %287 = vmatprep.subr.mxu0 0.0
  %288 = vmatpush1.msra.mxu0 %v80
  %289 = vmatprep.subr.mxu0 0.0
  %290 = vmatpush1.msra.mxu0 %v81
  %291 = vmatprep.subr.mxu0 0.0
  %292 = vmatpush1.msra.mxu0 %v82
  %293 = vmatprep.subr.mxu0 0.0
  %294 = vmatpush1.msra.mxu0 %v83
  %295 = vmatprep.subr.mxu0 0.0
  %296 = vmatpush1.msra.mxu0 %v84
  %297 = vmatprep.subr.mxu0 0.0
  %298 = vmatpush1.msra.mxu0 %v85
  %299 = vmatprep.subr.mxu0 0.0
  %300 = vmatpush1.msra.mxu0 %v86
  %301 = vmatprep.subr.mxu0 0.0
  %302 = vmatpush1.msra.mxu0 %v87
  %303 = vmatprep.subr.mxu0 0.0
  %304 = vmatpush1.msra.mxu0 %v88
  %305 = vmatprep.subr.mxu0 0.0
  %306 = vmatpush1.msra.mxu0 %v89
  %307 = vmatprep.subr.mxu0 0.0
  %308 = vmatpush1.msra.mxu0 %v90
  %309 = vmatprep.subr.mxu0 0.0
  %310 = vmatpush1.msra.mxu0 %v91
  %311 = vmatprep.subr.mxu0 0.0
  %312 = vmatpush1.msra.mxu0 %v92
  %313 = vmatprep.subr.mxu0 0.0
  %314 = vmatpush1.msra.mxu0 %v93
  %315 = vmatprep.subr.mxu0 0.0
  %316 = vmatpush1.msra.mxu0 %v94
  %317 = vmatprep.subr.mxu0 0.0
  %318 = vmatpush1.msra.mxu0 %v95
  %319 = vmatprep.subr.mxu0 0.0
  %320 = vmatpush1.msra.mxu0 %v96
  %321 = vmatprep.subr.mxu0 0.0
  %322 = vmatpush1.msra.mxu0 %v97
  %323 = vmatprep.subr.mxu0 0.0
  %324 = vmatpush1.msra.mxu0 %v98
  %325 = vmatprep.subr.mxu0 0.0
  %326 = vmatpush1.msra.mxu0 %v99
  %327 = vmatprep.subr.mxu0 0.0
  %328 = vmatpush1.msra.mxu0 %v100
  %329 = vmatprep.subr.mxu0 0.0
  %330 = vmatpush1.msra.mxu0 %v101
  %331 = vmatprep.subr.mxu0 0.0
  %332 = vmatpush1.msra.mxu0 %v102
  %333 = vmatprep.subr.mxu0 0.0
  %334 = vmatpush1.msra.mxu0 %v103
  %335 = vmatprep.subr.mxu0 0.0
  %336 = vmatpush1.msra.mxu0 %v104
  %337 = vmatprep.subr.mxu0 0.0
  %338 = vmatpush1.msra.mxu0 %v105
  %339 = vmatprep.subr.mxu0 0.0
  %340 = vmatpush1.msra.mxu0 %v106
  %341 = vmatprep.subr.mxu0 0.0
  %342 = vmatpush1.msra.mxu0 %v107
  %343 = vmatprep.subr.mxu0 0.0
  %344 = vmatpush1.msra.mxu0 %v108
  %345 = vmatprep.subr.mxu0 0.0
  %346 = vmatpush1.msra.mxu0 %v109
  %347 = vmatprep.mubr.f32.mxu0 %v117
  %348 = vmatmul.mubr.f32.gmra.mrb[0].mxu0 %v116
  %v349 = vpop.f32.mrb[0].mxu0
  %v350 = vadd.f32 %v275, %v349
  %v351 = vpop.f32.mrb[0].mxu0
  %352 = vmatprep.mubr.f32.mxu0 %v124
  %353 = vmatmul.mubr.f32.gmra.mrb[0].mxu0 %v123
  %v354 = vpop.f32.mrb[0].mxu0
  %v355 = vadd.f32 %v280, %v354
  %v356 = vpop.f32.mrb[0].mxu0
  %357 = vdwg.mxu0
  %358 = vmatprep.subr.mxu0 0.0
  %359 = vmatpush1.msra.mxu0 %v110
  %360 = vmatprep.subr.mxu0 0.0
  %361 = vmatpush1.msra.mxu0 %v111
  %362 = vmatprep.subr.mxu0 0.0
  %363 = vmatpush1.msra.mxu0 0.0
  %364 = vmatprep.subr.mxu0 0.0
  %365 = vmatpush1.msra.mxu0 0.0
  %366 = vmatprep.subr.mxu0 0.0
  %367 = vmatpush1.msra.mxu0 0.0
  %368 = vmatprep.subr.mxu0 0.0
  %369 = vmatpush1.msra.mxu0 0.0
  %370 = vmatprep.subr.mxu0 0.0
  %371 = vmatpush1.msra.mxu0 0.0
  %372 = vmatprep.subr.mxu0 0.0
  %373 = vmatpush1.msra.mxu0 0.0
  %374 = vmatprep.subr.mxu0 0.0
  %375 = vmatpush1.msra.mxu0 0.0
  %376 = vmatprep.subr.mxu0 0.0
  %377 = vmatpush1.msra.mxu0 0.0
  %378 = vmatprep.subr.mxu0 0.0
  %379 = vmatpush1.msra.mxu0 0.0
  %380 = vmatprep.subr.mxu0 0.0
  %381 = vmatpush1.msra.mxu0 0.0
  %382 = vmatprep.subr.mxu0 0.0
  %383 = vmatpush1.msra.mxu0 0.0
  %384 = vmatprep.subr.mxu0 0.0
  %385 = vmatpush1.msra.mxu0 0.0
  %386 = vmatprep.subr.mxu0 0.0
  %387 = vmatpush1.msra.mxu0 0.0
  %388 = vmatprep.subr.mxu0 0.0
  %389 = vmatpush1.msra.mxu0 0.0
  %390 = vmatprep.subr.mxu0 0.0
  %391 = vmatpush1.msra.mxu0 0.0
  %392 = vmatprep.subr.mxu0 0.0
  %393 = vmatpush1.msra.mxu0 0.0
  %394 = vmatprep.subr.mxu0 0.0
  %395 = vmatpush1.msra.mxu0 0.0
  %396 = vmatprep.subr.mxu0 0.0
  %397 = vmatpush1.msra.mxu0 0.0
  %398 = vmatprep.subr.mxu0 0.0
  %399 = vmatpush1.msra.mxu0 0.0
  %400 = vmatprep.subr.mxu0 0.0
  %401 = vmatpush1.msra.mxu0 0.0
  %402 = vmatprep.subr.mxu0 0.0
  %403 = vmatpush1.msra.mxu0 0.0
  %404 = vmatprep.subr.mxu0 0.0
  %405 = vmatpush1.msra.mxu0 0.0
  %406 = vmatprep.subr.mxu0 0.0
  %407 = vmatpush1.msra.mxu0 0.0
  %408 = vmatprep.subr.mxu0 0.0
  %409 = vmatpush1.msra.mxu0 0.0
  %410 = vmatprep.subr.mxu0 0.0
  %411 = vmatpush1.msra.mxu0 0.0
  %412 = vmatprep.subr.mxu0 0.0
  %413 = vmatpush1.msra.mxu0 0.0
  %414 = vmatprep.subr.mxu0 0.0
  %415 = vmatpush1.msra.mxu0 0.0
  %416 = vmatprep.subr.mxu0 0.0
  %417 = vmatpush1.msra.mxu0 0.0
  %418 = vmatprep.subr.mxu0 0.0
  %419 = vmatpush1.msra.mxu0 0.0
  %420 = vmatprep.subr.mxu0 0.0
  %421 = vmatpush1.msra.mxu0 0.0
  %422 = vmatprep.mubr.f32.mxu0 0.0
  %423 = vmatmul.mubr.f32.gmra.mrb[0].mxu0 %v128
  %v424 = vpop.f32.mrb[0].mxu0
  %v425 = vadd.f32 %v350, %v424
  %v426 = vpop.f32.mrb[0].mxu0
  %427 = vmatprep.mubr.f32.mxu0 0.0
  %428 = vmatmul.mubr.f32.gmra.mrb[0].mxu0 %v131
  %v429 = vpop.f32.mrb[0].mxu0
  %v430 = vadd.f32 %v355, %v429
  %v431 = vpop.f32.mrb[0].mxu0
  %432 = vdwg.mxu0
  %433 = vst [vmem:[%s2] sm:$0xff] %v425
  %434 = vst [vmem:[%s2 + $0x8] sm:$0xff] %v430
  %435 = vadd.xlane.f32.xlu0 %v425
  %v436 = vpop.xlane.xlu0 %435
  %437 = vadd.xlane.f32.xlu0 %v430
  %v438 = vpop.xlane.xlu0 %437
  %vm439 = vcmask 7168
  %440 = vst.msk [vmem:[%s3] sm:$0xff] %vm439, %v436
  %441 = vst.msk [vmem:[%s3 + $0x8] sm:$0xff] %vm439, %v438
  %v442 = vmul.f32 %v425, %v425
  %v443 = vmul.f32 %v430, %v430
  %444 = vadd.xlane.f32.xlu0 %v442
  %v445 = vpop.xlane.xlu0 %444
  %446 = vadd.xlane.f32.xlu0 %v443
  %v447 = vpop.xlane.xlu0 %446
  %448 = vst.msk [vmem:[%s4] sm:$0xff] %vm439, %v445
  %449 = vst.msk [vmem:[%s4 + $0x8] sm:$0xff] %vm439, %v447
  // Predicated region
  $region10: #{cell_stem0_forward.31} parent=0 // pred_check
    _
  $region11: #{cell_stem0_forward.31} parent=0 // pred_check_branch
    %451 = sbr.rel (0) target = $region13
  $region12: #{cell_stem0_forward.31} parent=0 // pred_region
    _
  $region13: #{cell_stem0_forward.31} parent=0 // pred_fallthru
    _
  // Predicated region
  $region14: #{cell_stem0_forward.31} parent=0 // pred_check
    _
  $region15: #{cell_stem0_forward.31} parent=0 // pred_check_branch
    %453 = sbr.rel (0) target = $region17
  $region16: #{cell_stem0_forward.31} parent=0 // pred_region
    _
  $region17: #{cell_stem0_forward.31} parent=0 // pred_fallthru
    _
  // Predicated region
  $region18: #{cell_stem0_forward.31} parent=0 // pred_check
    _
  $region19: #{cell_stem0_forward.31} parent=0 // pred_check_branch
    %455 = sbr.rel (0) target = $region21
  $region20: #{cell_stem0_forward.31} parent=0 // pred_region
    _
  $region21: #{cell_stem0_forward.31} parent=0 // pred_fallthru
    _
  // Predicated region
  $region22: #{cell_stem0_forward.31} parent=0 // pred_check
    _
  $region23: #{cell_stem0_forward.31} parent=0 // pred_check_branch
    %457 = sbr.rel (0) target = $region25
  $region24: #{cell_stem0_forward.31} parent=0 // pred_region
    _
  $region25: #{cell_stem0_forward.31} parent=0 // pred_fallthru
    _
  // Predicated region
  $region26: #{cell_stem0_forward.31} parent=0 // pred_check
    _
  $region27: #{cell_stem0_forward.31} parent=0 // pred_check_branch
    %459 = sbr.rel (0) target = $region29
  $region28: #{cell_stem0_forward.31} parent=0 // pred_region
    _
  $region29: #{cell_stem0_forward.31} parent=0 // pred_fallthru
    _
  // Predicated region
  $region30: #{cell_stem0_forward.31} parent=0 // pred_check
    _
  $region31: #{cell_stem0_forward.31} parent=0 // pred_check_branch
    %461 = sbr.rel (0) target = $region33
  $region32: #{cell_stem0_forward.31} parent=0 // pred_region
    _
  $region33: #{cell_stem0_forward.31} parent=0 // pred_fallthru
    _

// kernel: cell_stem0_forward.23
$region0: #{cell_stem0_forward.23}
  #allocation0 [shape = 'u32[]', space=smem, size = 0x4, offset = 0x4, fixed_abs, tag = 'smem constant byte address 0x4 - core index']
  #allocation1 [shape = 'u32[144,128]{1,0:T(1,128)}', space=vmem, size = 0x12000, scoped, tag = 'internal scratch']
  %s0 = inlined_call_operand.vmem [shape: f32[400,128], index: 0, kind: input, shape index: {}]
  %s1 = inlined_call_operand.vmem [shape: f32[16,400], index: 1, kind: input, shape index: {}]
  %s2 = inlined_call_operand.vmem [shape: f32[16,128], index: 2, kind: output, shape index: {0}]
  %s3 = inlined_call_operand.vmem [shape: f32[1,16,1], index: 3, kind: output, shape index: {1}]
  %s4 = inlined_call_operand.vmem [shape: f32[1,16,1], index: 4, kind: output, shape index: {2}]
  %5 = xla_tuple %s2, %s3, %s4
  %s6 = sld [smem:[#allocation0]]
  $region34: #{cell_stem0_forward.23} parent=0
    _
  %s8 = ssub.s32 1, %s6
  %s9 = scalar_select 0, %s8, %s6
  // Predicated region
  $region2: #{cell_stem0_forward.23} parent=0 // pred_check
    _
  $region3: #{cell_stem0_forward.23} parent=0 // pred_check_branch
    %11 = sbr.rel (0) target = $region5
  $region4: #{cell_stem0_forward.23} parent=0 // pred_region
    _
  $region5: #{cell_stem0_forward.23} parent=0 // pred_fallthru
    _
  // Predicated region
  $region6: #{cell_stem0_forward.23} parent=0 // pred_check
    _
  $region7: #{cell_stem0_forward.23} parent=0 // pred_check_branch
    %13 = sbr.rel (0) target = $region9
  $region8: #{cell_stem0_forward.23} parent=0 // pred_region
    _
  $region9: #{cell_stem0_forward.23} parent=0 // pred_fallthru
    _
  %v14 = vld [vmem:[%s0] sm:$0xff]
  %v15 = vld [vmem:[%s0 + $0x8] sm:$0xff]
  %v16 = vld [vmem:[%s0 + $0x10] sm:$0xff]
  %v17 = vld [vmem:[%s0 + $0x18] sm:$0xff]
  %v18 = vld [vmem:[%s0 + $0x20] sm:$0xff]
  %v19 = vld [vmem:[%s0 + $0x28] sm:$0xff]
  %v20 = vld [vmem:[%s0 + $0x30] sm:$0xff]
  %v21 = vld [vmem:[%s0 + $0x38] sm:$0xff]
  %v22 = vld [vmem:[%s0 + $0x40] sm:$0xff]
  %v23 = vld [vmem:[%s0 + $0x48] sm:$0xff]
  %v24 = vld [vmem:[%s0 + $0x50] sm:$0xff]
  %v25 = vld [vmem:[%s0 + $0x58] sm:$0xff]
  %v26 = vld [vmem:[%s0 + $0x60] sm:$0xff]
  %v27 = vld [vmem:[%s0 + $0x68] sm:$0xff]
  %v28 = vld [vmem:[%s0 + $0x70] sm:$0xff]
  %v29 = vld [vmem:[%s0 + $0x78] sm:$0xff]
  %v30 = vld [vmem:[%s0 + $0x80] sm:$0xff]
  %v31 = vld [vmem:[%s0 + $0x88] sm:$0xff]
  %v32 = vld [vmem:[%s0 + $0x90] sm:$0xff]
  %v33 = vld [vmem:[%s0 + $0x98] sm:$0xff]
  %v34 = vld [vmem:[%s0 + $0xa0] sm:$0xff]
  %v35 = vld [vmem:[%s0 + $0xa8] sm:$0xff]
  %v36 = vld [vmem:[%s0 + $0xb0] sm:$0xff]
  %v37 = vld [vmem:[%s0 + $0xb8] sm:$0xff]
  %v38 = vld [vmem:[%s0 + $0xc0] sm:$0xff]
  %v39 = vld [vmem:[%s0 + $0xc8] sm:$0xff]
  %v40 = vld [vmem:[%s0 + $0xd0] sm:$0xff]
  %v41 = vld [vmem:[%s0 + $0xd8] sm:$0xff]
  %v42 = vld [vmem:[%s0 + $0xe0] sm:$0xff]
  %v43 = vld [vmem:[%s0 + $0xe8] sm:$0xff]
  %v44 = vld [vmem:[%s0 + $0xf0] sm:$0xff]
  %v45 = vld [vmem:[%s0 + $0xf8] sm:$0xff]
  %v46 = vld [vmem:[%s0 + $0x100] sm:$0xff]
  %v47 = vld [vmem:[%s0 + $0x108] sm:$0xff]
  %v48 = vld [vmem:[%s0 + $0x110] sm:$0xff]
  %v49 = vld [vmem:[%s0 + $0x118] sm:$0xff]
  %v50 = vld [vmem:[%s0 + $0x120] sm:$0xff]
  %v51 = vld [vmem:[%s0 + $0x128] sm:$0xff]
  %v52 = vld [vmem:[%s0 + $0x130] sm:$0xff]
  %v53 = vld [vmem:[%s0 + $0x138] sm:$0xff]
  %v54 = vld [vmem:[%s0 + $0x140] sm:$0xff]
  %v55 = vld [vmem:[%s0 + $0x148] sm:$0xff]
  %v56 = vld [vmem:[%s0 + $0x150] sm:$0xff]
  %v57 = vld [vmem:[%s0 + $0x158] sm:$0xff]
  %v58 = vld [vmem:[%s0 + $0x160] sm:$0xff]
  %v59 = vld [vmem:[%s0 + $0x168] sm:$0xff]
  %v60 = vld [vmem:[%s0 + $0x170] sm:$0xff]
  %v61 = vld [vmem:[%s0 + $0x178] sm:$0xff]
  %v62 = vld [vmem:[%s0 + $0x180] sm:$0xff]
  %v63 = vld [vmem:[%s0 + $0x188] sm:$0xff]
  %v64 = vmax.f32 %v14, 0.0
  %v65 = vmax.f32 %v15, 0.0
  %v66 = vmax.f32 %v16, 0.0
  %v67 = vmax.f32 %v17, 0.0
  %v68 = vmax.f32 %v18, 0.0
  %v69 = vmax.f32 %v19, 0.0
  %v70 = vmax.f32 %v20, 0.0
  %v71 = vmax.f32 %v21, 0.0
  %v72 = vmax.f32 %v22, 0.0
  %v73 = vmax.f32 %v23, 0.0
  %v74 = vmax.f32 %v24, 0.0
  %v75 = vmax.f32 %v25, 0.0
  %v76 = vmax.f32 %v26, 0.0
  %v77 = vmax.f32 %v27, 0.0
  %v78 = vmax.f32 %v28, 0.0
  %v79 = vmax.f32 %v29, 0.0
  %v80 = vmax.f32 %v30, 0.0
  %v81 = vmax.f32 %v31, 0.0
  %v82 = vmax.f32 %v32, 0.0
  %v83 = vmax.f32 %v33, 0.0
  %v84 = vmax.f32 %v34, 0.0
  %v85 = vmax.f32 %v35, 0.0
  %v86 = vmax.f32 %v36, 0.0
  %v87 = vmax.f32 %v37, 0.0
  %v88 = vmax.f32 %v38, 0.0
  %v89 = vmax.f32 %v39, 0.0
  %v90 = vmax.f32 %v40, 0.0
  %v91 = vmax.f32 %v41, 0.0
  %v92 = vmax.f32 %v42, 0.0
  %v93 = vmax.f32 %v43, 0.0
  %v94 = vmax.f32 %v44, 0.0
  %v95 = vmax.f32 %v45, 0.0
  %v96 = vmax.f32 %v46, 0.0
  %v97 = vmax.f32 %v47, 0.0
  %v98 = vmax.f32 %v48, 0.0
  %v99 = vmax.f32 %v49, 0.0
  %v100 = vmax.f32 %v50, 0.0
  %v101 = vmax.f32 %v51, 0.0
  %v102 = vmax.f32 %v52, 0.0
  %v103 = vmax.f32 %v53, 0.0
  %v104 = vmax.f32 %v54, 0.0
  %v105 = vmax.f32 %v55, 0.0
  %v106 = vmax.f32 %v56, 0.0
  %v107 = vmax.f32 %v57, 0.0
  %v108 = vmax.f32 %v58, 0.0
  %v109 = vmax.f32 %v59, 0.0
  %v110 = vmax.f32 %v60, 0.0
  %v111 = vmax.f32 %v61, 0.0
  %v112 = vmax.f32 %v62, 0.0
  %v113 = vmax.f32 %v63, 0.0
  %v114 = vld [vmem:[%s1] sm:$0xff]
  %v115 = vld [vmem:[%s1 + $0x8] sm:$0xff]
  %v116 = vld [vmem:[%s1 + $0x10] sm:$0xff]
  %v117 = vld [vmem:[%s1 + $0x18] sm:$0xff]
  %v118 = vld [vmem:[%s1 + $0x20] sm:$0xff]
  %v119 = vld [vmem:[%s1 + $0x28] sm:$0xff]
  %v120 = vld [vmem:[%s1 + $0x30] sm:$0xff]
  %v121 = vld [vmem:[%s1 + $0x38] sm:$0xff]
  %vm122 = vcmask 130048
  %v124 = vsel %vm122, %v117, 0
  %v127 = vsel %vm122, %v121, 0
  %129 = vmatprep.subr.mxu0 0.0
  %130 = vmatpush1.msra.mxu0 %v64
  %131 = vmatprep.subr.mxu0 0.0
  %132 = vmatpush1.msra.mxu0 %v65
  %133 = vmatprep.subr.mxu0 0.0
  %134 = vmatpush1.msra.mxu0 %v66
  %135 = vmatprep.subr.mxu0 0.0
  %136 = vmatpush1.msra.mxu0 %v67
  %137 = vmatprep.subr.mxu0 0.0
  %138 = vmatpush1.msra.mxu0 %v68
  %139 = vmatprep.subr.mxu0 0.0
  %140 = vmatpush1.msra.mxu0 %v69
  %141 = vmatprep.subr.mxu0 0.0
  %142 = vmatpush1.msra.mxu0 %v70
  %143 = vmatprep.subr.mxu0 0.0
  %144 = vmatpush1.msra.mxu0 %v71
  %145 = vmatprep.subr.mxu0 0.0
  %146 = vmatpush1.msra.mxu0 %v72
  %147 = vmatprep.subr.mxu0 0.0
  %148 = vmatpush1.msra.mxu0 %v73
  %149 = vmatprep.subr.mxu0 0.0
  %150 = vmatpush1.msra.mxu0 %v74
  %151 = vmatprep.subr.mxu0 0.0
  %152 = vmatpush1.msra.mxu0 %v75
  %153 = vmatprep.subr.mxu0 0.0
  %154 = vmatpush1.msra.mxu0 %v76
  %155 = vmatprep.subr.mxu0 0.0
  %156 = vmatpush1.msra.mxu0 %v77
  %157 = vmatprep.subr.mxu0 0.0
  %158 = vmatpush1.msra.mxu0 %v78
  %159 = vmatprep.subr.mxu0 0.0
  %160 = vmatpush1.msra.mxu0 %v79
  %161 = vmatprep.subr.mxu0 0.0
  %162 = vmatpush1.msra.mxu0 %v80
  %163 = vmatprep.subr.mxu0 0.0
  %164 = vmatpush1.msra.mxu0 %v81
  %165 = vmatprep.subr.mxu0 0.0
  %166 = vmatpush1.msra.mxu0 %v82
  %167 = vmatprep.subr.mxu0 0.0
  %168 = vmatpush1.msra.mxu0 %v83
  %169 = vmatprep.subr.mxu0 0.0
  %170 = vmatpush1.msra.mxu0 %v84
  %171 = vmatprep.subr.mxu0 0.0
  %172 = vmatpush1.msra.mxu0 %v85
  %173 = vmatprep.subr.mxu0 0.0
  %174 = vmatpush1.msra.mxu0 %v86
  %175 = vmatprep.subr.mxu0 0.0
  %176 = vmatpush1.msra.mxu0 %v87
  %177 = vmatprep.subr.mxu0 0.0
  %178 = vmatpush1.msra.mxu0 %v88
  %179 = vmatprep.subr.mxu0 0.0
  %180 = vmatpush1.msra.mxu0 %v89
  %181 = vmatprep.subr.mxu0 0.0
  %182 = vmatpush1.msra.mxu0 %v90
  %183 = vmatprep.subr.mxu0 0.0
  %184 = vmatpush1.msra.mxu0 %v91
  %185 = vmatprep.subr.mxu0 0.0
  %186 = vmatpush1.msra.mxu0 %v92
  %187 = vmatprep.subr.mxu0 0.0
  %188 = vmatpush1.msra.mxu0 %v93
  %189 = vmatprep.subr.mxu0 0.0
  %190 = vmatpush1.msra.mxu0 %v94
  %191 = vmatprep.subr.mxu0 0.0
  %192 = vmatpush1.msra.mxu0 %v95
  %193 = vmatprep.mubr.f32.mxu0 %v115
  %194 = vmatmul.mubr.f32.gmra.mrb[0].mxu0 %v114
  %v195 = vpop.f32.mrb[0].mxu0
  %v196 = vadd.f32 0.0, %v195
  %v197 = vpop.f32.mrb[0].mxu0
  %198 = vmatprep.mubr.f32.mxu0 %v119
  %199 = vmatmul.mubr.f32.gmra.mrb[0].mxu0 %v118
  %v200 = vpop.f32.mrb[0].mxu0
  %v201 = vadd.f32 0.0, %v200
  %v202 = vpop.f32.mrb[0].mxu0
  %203 = vdwg.mxu0
  %204 = vmatprep.subr.mxu0 0.0
  %205 = vmatpush1.msra.mxu0 %v96
  %206 = vmatprep.subr.mxu0 0.0
  %207 = vmatpush1.msra.mxu0 %v97
  %208 = vmatprep.subr.mxu0 0.0
  %209 = vmatpush1.msra.mxu0 %v98
  %210 = vmatprep.subr.mxu0 0.0
  %211 = vmatpush1.msra.mxu0 %v99
  %212 = vmatprep.subr.mxu0 0.0
  %213 = vmatpush1.msra.mxu0 %v100
  %214 = vmatprep.subr.mxu0 0.0
  %215 = vmatpush1.msra.mxu0 %v101
  %216 = vmatprep.subr.mxu0 0.0
  %217 = vmatpush1.msra.mxu0 %v102
  %218 = vmatprep.subr.mxu0 0.0
  %219 = vmatpush1.msra.mxu0 %v103
  %220 = vmatprep.subr.mxu0 0.0
  %221 = vmatpush1.msra.mxu0 %v104
  %222 = vmatprep.subr.mxu0 0.0
  %223 = vmatpush1.msra.mxu0 %v105
  %224 = vmatprep.subr.mxu0 0.0
  %225 = vmatpush1.msra.mxu0 %v106
  %226 = vmatprep.subr.mxu0 0.0
  %227 = vmatpush1.msra.mxu0 %v107
  %228 = vmatprep.subr.mxu0 0.0
  %229 = vmatpush1.msra.mxu0 %v108
  %230 = vmatprep.subr.mxu0 0.0
  %231 = vmatpush1.msra.mxu0 %v109
  %232 = vmatprep.subr.mxu0 0.0
  %233 = vmatpush1.msra.mxu0 %v110
  %234 = vmatprep.subr.mxu0 0.0
  %235 = vmatpush1.msra.mxu0 %v111
  %236 = vmatprep.subr.mxu0 0.0
  %237 = vmatpush1.msra.mxu0 %v112
  %238 = vmatprep.subr.mxu0 0.0
  %239 = vmatpush1.msra.mxu0 %v113
  %240 = vmatprep.subr.mxu0 0.0
  %241 = vmatpush1.msra.mxu0 0.0
  %242 = vmatprep.subr.mxu0 0.0
  %243 = vmatpush1.msra.mxu0 0.0
  %244 = vmatprep.subr.mxu0 0.0
  %245 = vmatpush1.msra.mxu0 0.0
  %246 = vmatprep.subr.mxu0 0.0
  %247 = vmatpush1.msra.mxu0 0.0
  %248 = vmatprep.subr.mxu0 0.0
  %249 = vmatpush1.msra.mxu0 0.0
  %250 = vmatprep.subr.mxu0 0.0
  %251 = vmatpush1.msra.mxu0 0.0
  %252 = vmatprep.subr.mxu0 0.0
  %253 = vmatpush1.msra.mxu0 0.0
  %254 = vmatprep.subr.mxu0 0.0
  %255 = vmatpush1.msra.mxu0 0.0
  %256 = vmatprep.subr.mxu0 0.0
  %257 = vmatpush1.msra.mxu0 0.0
  %258 = vmatprep.subr.mxu0 0.0
  %259 = vmatpush1.msra.mxu0 0.0
  %260 = vmatprep.subr.mxu0 0.0
  %261 = vmatpush1.msra.mxu0 0.0
  %262 = vmatprep.subr.mxu0 0.0
  %263 = vmatpush1.msra.mxu0 0.0
  %264 = vmatprep.subr.mxu0 0.0
  %265 = vmatpush1.msra.mxu0 0.0
  %266 = vmatprep.subr.mxu0 0.0
  %267 = vmatpush1.msra.mxu0 0.0
  %268 = vmatprep.mubr.f32.mxu0 %v124
  %269 = vmatmul.mubr.f32.gmra.mrb[0].mxu0 %v116
  %v270 = vpop.f32.mrb[0].mxu0
  %v271 = vadd.f32 %v196, %v270
  %v272 = vpop.f32.mrb[0].mxu0
  %273 = vmatprep.mubr.f32.mxu0 %v127
  %274 = vmatmul.mubr.f32.gmra.mrb[0].mxu0 %v120
  %v275 = vpop.f32.mrb[0].mxu0
  %v276 = vadd.f32 %v201, %v275
  %v277 = vpop.f32.mrb[0].mxu0
  %278 = vdwg.mxu0
  %279 = vst [vmem:[%s2] sm:$0xff] %v271
  %280 = vst [vmem:[%s2 + $0x8] sm:$0xff] %v276
  %281 = vadd.xlane.f32.xlu0 %v271
  %v282 = vpop.xlane.xlu0 %281
  %283 = vadd.xlane.f32.xlu0 %v276
  %v284 = vpop.xlane.xlu0 %283
  %vm285 = vcmask 7168
  %286 = vst.msk [vmem:[%s3] sm:$0xff] %vm285, %v282
  %287 = vst.msk [vmem:[%s3 + $0x8] sm:$0xff] %vm285, %v284
  %v288 = vmul.f32 %v271, %v271
  %v289 = vmul.f32 %v276, %v276
  %290 = vadd.xlane.f32.xlu0 %v288
  %v291 = vpop.xlane.xlu0 %290
  %292 = vadd.xlane.f32.xlu0 %v289
  %v293 = vpop.xlane.xlu0 %292
  %294 = vst.msk [vmem:[%s4] sm:$0xff] %vm285, %v291
  %295 = vst.msk [vmem:[%s4 + $0x8] sm:$0xff] %vm285, %v293
  // Predicated region
  $region10: #{cell_stem0_forward.23} parent=0 // pred_check
    _
  $region11: #{cell_stem0_forward.23} parent=0 // pred_check_branch
    %297 = sbr.rel (0) target = $region13
  $region12: #{cell_stem0_forward.23} parent=0 // pred_region
    _
  $region13: #{cell_stem0_forward.23} parent=0 // pred_fallthru
    _
  // Predicated region
  $region14: #{cell_stem0_forward.23} parent=0 // pred_check
    _
  $region15: #{cell_stem0_forward.23} parent=0 // pred_check_branch
    %299 = sbr.rel (0) target = $region17
  $region16: #{cell_stem0_forward.23} parent=0 // pred_region
    _
  $region17: #{cell_stem0_forward.23} parent=0 // pred_fallthru
    _
  // Predicated region
  $region18: #{cell_stem0_forward.23} parent=0 // pred_check
    _
  $region19: #{cell_stem0_forward.23} parent=0 // pred_check_branch
    %301 = sbr.rel (0) target = $region21
  $region20: #{cell_stem0_forward.23} parent=0 // pred_region
    _
  $region21: #{cell_stem0_forward.23} parent=0 // pred_fallthru
    _
  // Predicated region
  $region22: #{cell_stem0_forward.23} parent=0 // pred_check
    _
  $region23: #{cell_stem0_forward.23} parent=0 // pred_check_branch
    %303 = sbr.rel (0) target = $region25
  $region24: #{cell_stem0_forward.23} parent=0 // pred_region
    _
  $region25: #{cell_stem0_forward.23} parent=0 // pred_fallthru
    _
  // Predicated region
  $region26: #{cell_stem0_forward.23} parent=0 // pred_check
    _
  $region27: #{cell_stem0_forward.23} parent=0 // pred_check_branch
    %305 = sbr.rel (0) target = $region29
  $region28: #{cell_stem0_forward.23} parent=0 // pred_region
    _
  $region29: #{cell_stem0_forward.23} parent=0 // pred_fallthru
    _
  // Predicated region
  $region30: #{cell_stem0_forward.23} parent=0 // pred_check
    _
  $region31: #{cell_stem0_forward.23} parent=0 // pred_check_branch
    %307 = sbr.rel (0) target = $region33
  $region32: #{cell_stem0_forward.23} parent=0 // pred_region
    _
  $region33: #{cell_stem0_forward.23} parent=0 // pred_fallthru
    _

// kernel: cell_stem0_forward.35
$region0: #{cell_stem0_forward.35}
  #allocation0 [shape = 'u32[]', space=smem, size = 0x4, offset = 0x4, fixed_abs, tag = 'smem constant byte address 0x4 - core index']
  #allocation1 [shape = 'u32[144,128]{1,0:T(1,128)}', space=vmem, size = 0x12000, scoped, tag = 'internal scratch']
  %s0 = inlined_call_operand.vmem [shape: f32[16,128], index: 0, kind: input, shape index: {}]
  %s1 = inlined_call_operand.vmem [shape: f32[16,1], index: 1, kind: input, shape index: {}]
  %s2 = inlined_call_operand.vmem [shape: f32[16,1], index: 2, kind: input, shape index: {}]
  %s3 = inlined_call_operand.vmem [shape: f32[16,128], index: 3, kind: input, shape index: {}]
  %s4 = inlined_call_operand.vmem [shape: f32[16,1], index: 4, kind: input, shape index: {}]
  %s5 = inlined_call_operand.vmem [shape: f32[16,1], index: 5, kind: input, shape index: {}]
  %s6 = inlined_call_operand.vmem [shape: f32[16,128], index: 6, kind: output, shape index: {}]
  %s7 = sld [smem:[#allocation0]]
  $region34: #{cell_stem0_forward.35} parent=0
    _
  %s9 = ssub.s32 1, %s7
  %s10 = scalar_select 0, %s9, %s7
  // Predicated region
  $region2: #{cell_stem0_forward.35} parent=0 // pred_check
    _
  $region3: #{cell_stem0_forward.35} parent=0 // pred_check_branch
    %12 = sbr.rel (0) target = $region5
  $region4: #{cell_stem0_forward.35} parent=0 // pred_region
    _
  $region5: #{cell_stem0_forward.35} parent=0 // pred_fallthru
    _
  // Predicated region
  $region6: #{cell_stem0_forward.35} parent=0 // pred_check
    _
  $region7: #{cell_stem0_forward.35} parent=0 // pred_check_branch
    %14 = sbr.rel (0) target = $region9
  $region8: #{cell_stem0_forward.35} parent=0 // pred_region
    _
  $region9: #{cell_stem0_forward.35} parent=0 // pred_fallthru
    _
  // Predicated region
  $region10: #{cell_stem0_forward.35} parent=0 // pred_check
    _
  $region11: #{cell_stem0_forward.35} parent=0 // pred_check_branch
    %16 = sbr.rel (0) target = $region13
  $region12: #{cell_stem0_forward.35} parent=0 // pred_region
    _
  $region13: #{cell_stem0_forward.35} parent=0 // pred_fallthru
    _
  // Predicated region
  $region14: #{cell_stem0_forward.35} parent=0 // pred_check
    _
  $region15: #{cell_stem0_forward.35} parent=0 // pred_check_branch
    %18 = sbr.rel (0) target = $region17
  $region16: #{cell_stem0_forward.35} parent=0 // pred_region
    _
  $region17: #{cell_stem0_forward.35} parent=0 // pred_fallthru
    _
  // Predicated region
  $region18: #{cell_stem0_forward.35} parent=0 // pred_check
    _
  $region19: #{cell_stem0_forward.35} parent=0 // pred_check_branch
    %20 = sbr.rel (0) target = $region21
  $region20: #{cell_stem0_forward.35} parent=0 // pred_region
    _
  $region21: #{cell_stem0_forward.35} parent=0 // pred_fallthru
    _
  // Predicated region
  $region22: #{cell_stem0_forward.35} parent=0 // pred_check
    _
  $region23: #{cell_stem0_forward.35} parent=0 // pred_check_branch
    %22 = sbr.rel (0) target = $region25
  $region24: #{cell_stem0_forward.35} parent=0 // pred_region
    _
  $region25: #{cell_stem0_forward.35} parent=0 // pred_fallthru
    _
  %v23 = vld [vmem:[%s0] sm:$0xff]
  %v24 = vld [vmem:[%s0 + $0x8] sm:$0xff]
  %v25 = vld [vmem:[%s1] sm:$0xff]
  %v26 = vld [vmem:[%s1 + $0x8] sm:$0xff]
  %28 = vset.pattern.permute.xlu0 0
  %29 = vperm.xlu0 %28, %v25
  %v30 = vpop.permute.xlu0 %29
  %33 = vset.pattern.permute.xlu0 0
  %34 = vperm.xlu0 %33, %v26
  %v35 = vpop.permute.xlu0 %34
  %v37 = vmul.f32 %v23, %v30
  %v38 = vmul.f32 %v24, %v35
  %v39 = vld [vmem:[%s2] sm:$0xff]
  %v40 = vld [vmem:[%s2 + $0x8] sm:$0xff]
  %42 = vset.pattern.permute.xlu0 0
  %43 = vperm.xlu0 %42, %v39
  %v44 = vpop.permute.xlu0 %43
  %47 = vset.pattern.permute.xlu0 0
  %48 = vperm.xlu0 %47, %v40
  %v49 = vpop.permute.xlu0 %48
  %v51 = vadd.f32 %v37, %v44
  %v52 = vadd.f32 %v38, %v49
  %v53 = vld [vmem:[%s3] sm:$0xff]
  %v54 = vld [vmem:[%s3 + $0x8] sm:$0xff]
  %v55 = vld [vmem:[%s4] sm:$0xff]
  %v56 = vld [vmem:[%s4 + $0x8] sm:$0xff]
  %58 = vset.pattern.permute.xlu0 0
  %59 = vperm.xlu0 %58, %v55
  %v60 = vpop.permute.xlu0 %59
  %63 = vset.pattern.permute.xlu0 0
  %64 = vperm.xlu0 %63, %v56
  %v65 = vpop.permute.xlu0 %64
  %v67 = vmul.f32 %v53, %v60
  %v68 = vmul.f32 %v54, %v65
  %v69 = vadd.f32 %v51, %v67
  %v70 = vadd.f32 %v52, %v68
  %v71 = vld [vmem:[%s5] sm:$0xff]
  %v72 = vld [vmem:[%s5 + $0x8] sm:$0xff]
  %74 = vset.pattern.permute.xlu0 0
  %75 = vperm.xlu0 %74, %v71
  %v76 = vpop.permute.xlu0 %75
  %79 = vset.pattern.permute.xlu0 0
  %80 = vperm.xlu0 %79, %v72
  %v81 = vpop.permute.xlu0 %80
  %v83 = vadd.f32 %v69, %v76
  %v84 = vadd.f32 %v70, %v81
  %85 = vst [vmem:[%s6] sm:$0xff] %v83
  %86 = vst [vmem:[%s6 + $0x8] sm:$0xff] %v84
  // Predicated region
  $region26: #{cell_stem0_forward.35} parent=0 // pred_check
    _
  $region27: #{cell_stem0_forward.35} parent=0 // pred_check_branch
    %88 = sbr.rel (0) target = $region29
  $region28: #{cell_stem0_forward.35} parent=0 // pred_region
    _
  $region29: #{cell_stem0_forward.35} parent=0 // pred_fallthru
    _
  // Predicated region
  $region30: #{cell_stem0_forward.35} parent=0 // pred_check
    _
  $region31: #{cell_stem0_forward.35} parent=0 // pred_check_branch
    %90 = sbr.rel (0) target = $region33
  $region32: #{cell_stem0_forward.35} parent=0 // pred_region
    _
  $region33: #{cell_stem0_forward.35} parent=0 // pred_fallthru
    _

// kernel: cell_stem0_forward.38
$region0: #{cell_stem0_forward.38}
  #allocation0 [shape = 'u32[]', space=smem, size = 0x4, offset = 0x4, fixed_abs, tag = 'smem constant byte address 0x4 - core index']
  #allocation1 [shape = 'u32[144,128]{1,0:T(1,128)}', space=vmem, size = 0x12000, scoped, tag = 'internal scratch']
  %s0 = inlined_call_operand.vmem [shape: f32[144,128], index: 0, kind: input, shape index: {}]
  %s1 = inlined_call_operand.vmem [shape: f32[16,144], index: 1, kind: input, shape index: {}]
  %s2 = inlined_call_operand.vmem [shape: f32[16,128], index: 2, kind: output, shape index: {0}]
  %s3 = inlined_call_operand.vmem [shape: f32[1,16,1], index: 3, kind: output, shape index: {1}]
  %s4 = inlined_call_operand.vmem [shape: f32[1,16,1], index: 4, kind: output, shape index: {2}]
  %5 = xla_tuple %s2, %s3, %s4
  %s6 = sld [smem:[#allocation0]]
  $region34: #{cell_stem0_forward.38} parent=0
    _
  %s8 = ssub.s32 1, %s6
  %s9 = scalar_select 0, %s8, %s6
  // Predicated region
  $region2: #{cell_stem0_forward.38} parent=0 // pred_check
    _
  $region3: #{cell_stem0_forward.38} parent=0 // pred_check_branch
    %11 = sbr.rel (0) target = $region5
  $region4: #{cell_stem0_forward.38} parent=0 // pred_region
    _
  $region5: #{cell_stem0_forward.38} parent=0 // pred_fallthru
    _
  // Predicated region
  $region6: #{cell_stem0_forward.38} parent=0 // pred_check
    _
  $region7: #{cell_stem0_forward.38} parent=0 // pred_check_branch
    %13 = sbr.rel (0) target = $region9
  $region8: #{cell_stem0_forward.38} parent=0 // pred_region
    _
  $region9: #{cell_stem0_forward.38} parent=0 // pred_fallthru
    _
  %v14 = vld [vmem:[%s0] sm:$0xff]
  %v15 = vld [vmem:[%s0 + $0x8] sm:$0xff]
  %v16 = vld [vmem:[%s0 + $0x10] sm:$0xff]
  %v17 = vld [vmem:[%s0 + $0x18] sm:$0xff]
  %v18 = vld [vmem:[%s0 + $0x20] sm:$0xff]
  %v19 = vld [vmem:[%s0 + $0x28] sm:$0xff]
  %v20 = vld [vmem:[%s0 + $0x30] sm:$0xff]
  %v21 = vld [vmem:[%s0 + $0x38] sm:$0xff]
  %v22 = vld [vmem:[%s0 + $0x40] sm:$0xff]
  %v23 = vld [vmem:[%s0 + $0x48] sm:$0xff]
  %v24 = vld [vmem:[%s0 + $0x50] sm:$0xff]
  %v25 = vld [vmem:[%s0 + $0x58] sm:$0xff]
  %v26 = vld [vmem:[%s0 + $0x60] sm:$0xff]
  %v27 = vld [vmem:[%s0 + $0x68] sm:$0xff]
  %v28 = vld [vmem:[%s0 + $0x70] sm:$0xff]
  %v29 = vld [vmem:[%s0 + $0x78] sm:$0xff]
  %v30 = vld [vmem:[%s0 + $0x80] sm:$0xff]
  %v31 = vld [vmem:[%s0 + $0x88] sm:$0xff]
  %v32 = vmax.f32 %v14, 0.0
  %v33 = vmax.f32 %v15, 0.0
  %v34 = vmax.f32 %v16, 0.0
  %v35 = vmax.f32 %v17, 0.0
  %v36 = vmax.f32 %v18, 0.0
  %v37 = vmax.f32 %v19, 0.0
  %v38 = vmax.f32 %v20, 0.0
  %v39 = vmax.f32 %v21, 0.0
  %v40 = vmax.f32 %v22, 0.0
  %v41 = vmax.f32 %v23, 0.0
  %v42 = vmax.f32 %v24, 0.0
  %v43 = vmax.f32 %v25, 0.0
  %v44 = vmax.f32 %v26, 0.0
  %v45 = vmax.f32 %v27, 0.0
  %v46 = vmax.f32 %v28, 0.0
  %v47 = vmax.f32 %v29, 0.0
  %v48 = vmax.f32 %v30, 0.0
  %v49 = vmax.f32 %v31, 0.0
  %v50 = vld [vmem:[%s1] sm:$0xff]
  %v51 = vld [vmem:[%s1 + $0x8] sm:$0xff]
  %v52 = vld [vmem:[%s1 + $0x10] sm:$0xff]
  %v53 = vld [vmem:[%s1 + $0x18] sm:$0xff]
  %vm54 = vcmask 130048
  %v56 = vsel %vm54, %v51, 0
  %v59 = vsel %vm54, %v53, 0
  %61 = vmatprep.subr.mxu0 0.0
  %62 = vmatpush1.msra.mxu0 %v32
  %63 = vmatprep.subr.mxu0 0.0
  %64 = vmatpush1.msra.mxu0 %v33
  %65 = vmatprep.subr.mxu0 0.0
  %66 = vmatpush1.msra.mxu0 %v34
  %67 = vmatprep.subr.mxu0 0.0
  %68 = vmatpush1.msra.mxu0 %v35
  %69 = vmatprep.subr.mxu0 0.0
  %70 = vmatpush1.msra.mxu0 %v36
  %71 = vmatprep.subr.mxu0 0.0
  %72 = vmatpush1.msra.mxu0 %v37
  %73 = vmatprep.subr.mxu0 0.0
  %74 = vmatpush1.msra.mxu0 %v38
  %75 = vmatprep.subr.mxu0 0.0
  %76 = vmatpush1.msra.mxu0 %v39
  %77 = vmatprep.subr.mxu0 0.0
  %78 = vmatpush1.msra.mxu0 %v40
  %79 = vmatprep.subr.mxu0 0.0
  %80 = vmatpush1.msra.mxu0 %v41
  %81 = vmatprep.subr.mxu0 0.0
  %82 = vmatpush1.msra.mxu0 %v42
  %83 = vmatprep.subr.mxu0 0.0
  %84 = vmatpush1.msra.mxu0 %v43
  %85 = vmatprep.subr.mxu0 0.0
  %86 = vmatpush1.msra.mxu0 %v44
  %87 = vmatprep.subr.mxu0 0.0
  %88 = vmatpush1.msra.mxu0 %v45
  %89 = vmatprep.subr.mxu0 0.0
  %90 = vmatpush1.msra.mxu0 %v46
  %91 = vmatprep.subr.mxu0 0.0
  %92 = vmatpush1.msra.mxu0 %v47
  %93 = vmatprep.subr.mxu0 0.0
  %94 = vmatpush1.msra.mxu0 %v48
  %95 = vmatprep.subr.mxu0 0.0
  %96 = vmatpush1.msra.mxu0 %v49
  %97 = vmatprep.subr.mxu0 0.0
  %98 = vmatpush1.msra.mxu0 0.0
  %99 = vmatprep.subr.mxu0 0.0
  %100 = vmatpush1.msra.mxu0 0.0
  %101 = vmatprep.subr.mxu0 0.0
  %102 = vmatpush1.msra.mxu0 0.0
  %103 = vmatprep.subr.mxu0 0.0
  %104 = vmatpush1.msra.mxu0 0.0
  %105 = vmatprep.subr.mxu0 0.0
  %106 = vmatpush1.msra.mxu0 0.0
  %107 = vmatprep.subr.mxu0 0.0
  %108 = vmatpush1.msra.mxu0 0.0
  %109 = vmatprep.subr.mxu0 0.0
  %110 = vmatpush1.msra.mxu0 0.0
  %111 = vmatprep.subr.mxu0 0.0
  %112 = vmatpush1.msra.mxu0 0.0
  %113 = vmatprep.subr.mxu0 0.0
  %114 = vmatpush1.msra.mxu0 0.0
  %115 = vmatprep.subr.mxu0 0.0
  %116 = vmatpush1.msra.mxu0 0.0
  %117 = vmatprep.subr.mxu0 0.0
  %118 = vmatpush1.msra.mxu0 0.0
  %119 = vmatprep.subr.mxu0 0.0
  %120 = vmatpush1.msra.mxu0 0.0
  %121 = vmatprep.subr.mxu0 0.0
  %122 = vmatpush1.msra.mxu0 0.0
  %123 = vmatprep.subr.mxu0 0.0
  %124 = vmatpush1.msra.mxu0 0.0
  %125 = vmatprep.mubr.f32.mxu0 %v56
  %126 = vmatmul.mubr.f32.gmra.mrb[0].mxu0 %v50
  %v127 = vpop.f32.mrb[0].mxu0
  %v128 = vadd.f32 0.0, %v127
  %v129 = vpop.f32.mrb[0].mxu0
  %130 = vmatprep.mubr.f32.mxu0 %v59
  %131 = vmatmul.mubr.f32.gmra.mrb[0].mxu0 %v52
  %v132 = vpop.f32.mrb[0].mxu0
  %v133 = vadd.f32 0.0, %v132
  %v134 = vpop.f32.mrb[0].mxu0
  %135 = vdwg.mxu0
  %136 = vst [vmem:[%s2] sm:$0xff] %v128
  %137 = vst [vmem:[%s2 + $0x8] sm:$0xff] %v133
  %138 = vadd.xlane.f32.xlu0 %v128
  %v139 = vpop.xlane.xlu0 %138
  %140 = vadd.xlane.f32.xlu0 %v133
  %v141 = vpop.xlane.xlu0 %140
  %vm142 = vcmask 7168
  %143 = vst.msk [vmem:[%s3] sm:$0xff] %vm142, %v139
  %144 = vst.msk [vmem:[%s3 + $0x8] sm:$0xff] %vm142, %v141
  %v145 = vmul.f32 %v128, %v128
  %v146 = vmul.f32 %v133, %v133
  %147 = vadd.xlane.f32.xlu0 %v145
  %v148 = vpop.xlane.xlu0 %147
  %149 = vadd.xlane.f32.xlu0 %v146
  %v150 = vpop.xlane.xlu0 %149
  %151 = vst.msk [vmem:[%s4] sm:$0xff] %vm142, %v148
  %152 = vst.msk [vmem:[%s4 + $0x8] sm:$0xff] %vm142, %v150
  // Predicated region
  $region10: #{cell_stem0_forward.38} parent=0 // pred_check
    _
  $region11: #{cell_stem0_forward.38} parent=0 // pred_check_branch
    %154 = sbr.rel (0) target = $region13
  $region12: #{cell_stem0_forward.38} parent=0 // pred_region
    _
  $region13: #{cell_stem0_forward.38} parent=0 // pred_fallthru
    _
  // Predicated region
  $region14: #{cell_stem0_forward.38} parent=0 // pred_check
    _
  $region15: #{cell_stem0_forward.38} parent=0 // pred_check_branch
    %156 = sbr.rel (0) target = $region17
  $region16: #{cell_stem0_forward.38} parent=0 // pred_region
    _
  $region17: #{cell_stem0_forward.38} parent=0 // pred_fallthru
    _
  // Predicated region
  $region18: #{cell_stem0_forward.38} parent=0 // pred_check
    _
  $region19: #{cell_stem0_forward.38} parent=0 // pred_check_branch
    %158 = sbr.rel (0) target = $region21
  $region20: #{cell_stem0_forward.38} parent=0 // pred_region
    _
  $region21: #{cell_stem0_forward.38} parent=0 // pred_fallthru
    _
  // Predicated region
  $region22: #{cell_stem0_forward.38} parent=0 // pred_check
    _
  $region23: #{cell_stem0_forward.38} parent=0 // pred_check_branch
    %160 = sbr.rel (0) target = $region25
  $region24: #{cell_stem0_forward.38} parent=0 // pred_region
    _
  $region25: #{cell_stem0_forward.38} parent=0 // pred_fallthru
    _
  // Predicated region
  $region26: #{cell_stem0_forward.38} parent=0 // pred_check
    _
  $region27: #{cell_stem0_forward.38} parent=0 // pred_check_branch
    %162 = sbr.rel (0) target = $region29
  $region28: #{cell_stem0_forward.38} parent=0 // pred_region
    _
  $region29: #{cell_stem0_forward.38} parent=0 // pred_fallthru
    _
  // Predicated region
  $region30: #{cell_stem0_forward.38} parent=0 // pred_check
    _
  $region31: #{cell_stem0_forward.38} parent=0 // pred_check_branch
    %164 = sbr.rel (0) target = $region33
  $region32: #{cell_stem0_forward.38} parent=0 // pred_region
    _
  $region33: #{cell_stem0_forward.38} parent=0 // pred_fallthru
    _

// kernel: cell_stem0_forward.40
$region0: #{cell_stem0_forward.40}
  #allocation0 [shape = 'u32[]', space=smem, size = 0x4, offset = 0x4, fixed_abs, tag = 'smem constant byte address 0x4 - core index']
  #allocation1 [shape = 'u32[144,128]{1,0:T(1,128)}', space=vmem, size = 0x12000, scoped, tag = 'internal scratch']
  %s0 = inlined_call_operand.vmem [shape: f32[144,128], index: 0, kind: input, shape index: {}]
  %s1 = inlined_call_operand.vmem [shape: f32[16,144], index: 1, kind: input, shape index: {}]
  %s2 = inlined_call_operand.vmem [shape: f32[16,128], index: 2, kind: output, shape index: {0}]
  %s3 = inlined_call_operand.vmem [shape: f32[1,16,1], index: 3, kind: output, shape index: {1}]
  %s4 = inlined_call_operand.vmem [shape: f32[1,16,1], index: 4, kind: output, shape index: {2}]
  %5 = xla_tuple %s2, %s3, %s4
  %s6 = sld [smem:[#allocation0]]
  $region34: #{cell_stem0_forward.40} parent=0
    _
  %s8 = ssub.s32 1, %s6
  %s9 = scalar_select 0, %s8, %s6
  // Predicated region
  $region2: #{cell_stem0_forward.40} parent=0 // pred_check
    _
  $region3: #{cell_stem0_forward.40} parent=0 // pred_check_branch
    %11 = sbr.rel (0) target = $region5
  $region4: #{cell_stem0_forward.40} parent=0 // pred_region
    _
  $region5: #{cell_stem0_forward.40} parent=0 // pred_fallthru
    _
  // Predicated region
  $region6: #{cell_stem0_forward.40} parent=0 // pred_check
    _
  $region7: #{cell_stem0_forward.40} parent=0 // pred_check_branch
    %13 = sbr.rel (0) target = $region9
  $region8: #{cell_stem0_forward.40} parent=0 // pred_region
    _
  $region9: #{cell_stem0_forward.40} parent=0 // pred_fallthru
    _
  %v14 = vld [vmem:[%s0] sm:$0xff]
  %v15 = vld [vmem:[%s0 + $0x8] sm:$0xff]
  %v16 = vld [vmem:[%s0 + $0x10] sm:$0xff]
  %v17 = vld [vmem:[%s0 + $0x18] sm:$0xff]
  %v18 = vld [vmem:[%s0 + $0x20] sm:$0xff]
  %v19 = vld [vmem:[%s0 + $0x28] sm:$0xff]
  %v20 = vld [vmem:[%s0 + $0x30] sm:$0xff]
  %v21 = vld [vmem:[%s0 + $0x38] sm:$0xff]
  %v22 = vld [vmem:[%s0 + $0x40] sm:$0xff]
  %v23 = vld [vmem:[%s0 + $0x48] sm:$0xff]
  %v24 = vld [vmem:[%s0 + $0x50] sm:$0xff]
  %v25 = vld [vmem:[%s0 + $0x58] sm:$0xff]
  %v26 = vld [vmem:[%s0 + $0x60] sm:$0xff]
  %v27 = vld [vmem:[%s0 + $0x68] sm:$0xff]
  %v28 = vld [vmem:[%s0 + $0x70] sm:$0xff]
  %v29 = vld [vmem:[%s0 + $0x78] sm:$0xff]
  %v30 = vld [vmem:[%s0 + $0x80] sm:$0xff]
  %v31 = vld [vmem:[%s0 + $0x88] sm:$0xff]
  %v32 = vld [vmem:[%s1] sm:$0xff]
  %v33 = vld [vmem:[%s1 + $0x8] sm:$0xff]
  %v34 = vld [vmem:[%s1 + $0x10] sm:$0xff]
  %v35 = vld [vmem:[%s1 + $0x18] sm:$0xff]
  %vm36 = vcmask 130048
  %v38 = vsel %vm36, %v33, 0
  %v41 = vsel %vm36, %v35, 0
  %43 = vmatprep.subr.mxu0 0.0
  %44 = vmatpush1.msra.mxu0 %v14
  %45 = vmatprep.subr.mxu0 0.0
  %46 = vmatpush1.msra.mxu0 %v15
  %47 = vmatprep.subr.mxu0 0.0
  %48 = vmatpush1.msra.mxu0 %v16
  %49 = vmatprep.subr.mxu0 0.0
  %50 = vmatpush1.msra.mxu0 %v17
  %51 = vmatprep.subr.mxu0 0.0
  %52 = vmatpush1.msra.mxu0 %v18
  %53 = vmatprep.subr.mxu0 0.0
  %54 = vmatpush1.msra.mxu0 %v19
  %55 = vmatprep.subr.mxu0 0.0
  %56 = vmatpush1.msra.mxu0 %v20
  %57 = vmatprep.subr.mxu0 0.0
  %58 = vmatpush1.msra.mxu0 %v21
  %59 = vmatprep.subr.mxu0 0.0
  %60 = vmatpush1.msra.mxu0 %v22
  %61 = vmatprep.subr.mxu0 0.0
  %62 = vmatpush1.msra.mxu0 %v23
  %63 = vmatprep.subr.mxu0 0.0
  %64 = vmatpush1.msra.mxu0 %v24
  %65 = vmatprep.subr.mxu0 0.0
  %66 = vmatpush1.msra.mxu0 %v25
  %67 = vmatprep.subr.mxu0 0.0
  %68 = vmatpush1.msra.mxu0 %v26
  %69 = vmatprep.subr.mxu0 0.0
  %70 = vmatpush1.msra.mxu0 %v27
  %71 = vmatprep.subr.mxu0 0.0
  %72 = vmatpush1.msra.mxu0 %v28
  %73 = vmatprep.subr.mxu0 0.0
  %74 = vmatpush1.msra.mxu0 %v29
  %75 = vmatprep.subr.mxu0 0.0
  %76 = vmatpush1.msra.mxu0 %v30
  %77 = vmatprep.subr.mxu0 0.0
  %78 = vmatpush1.msra.mxu0 %v31
  %79 = vmatprep.subr.mxu0 0.0
  %80 = vmatpush1.msra.mxu0 0.0
  %81 = vmatprep.subr.mxu0 0.0
  %82 = vmatpush1.msra.mxu0 0.0
  %83 = vmatprep.subr.mxu0 0.0
  %84 = vmatpush1.msra.mxu0 0.0
  %85 = vmatprep.subr.mxu0 0.0
  %86 = vmatpush1.msra.mxu0 0.0
  %87 = vmatprep.subr.mxu0 0.0
  %88 = vmatpush1.msra.mxu0 0.0
  %89 = vmatprep.subr.mxu0 0.0
  %90 = vmatpush1.msra.mxu0 0.0
  %91 = vmatprep.subr.mxu0 0.0
  %92 = vmatpush1.msra.mxu0 0.0
  %93 = vmatprep.subr.mxu0 0.0
  %94 = vmatpush1.msra.mxu0 0.0
  %95 = vmatprep.subr.mxu0 0.0
  %96 = vmatpush1.msra.mxu0 0.0
  %97 = vmatprep.subr.mxu0 0.0
  %98 = vmatpush1.msra.mxu0 0.0
  %99 = vmatprep.subr.mxu0 0.0
  %100 = vmatpush1.msra.mxu0 0.0
  %101 = vmatprep.subr.mxu0 0.0
  %102 = vmatpush1.msra.mxu0 0.0
  %103 = vmatprep.subr.mxu0 0.0
  %104 = vmatpush1.msra.mxu0 0.0
  %105 = vmatprep.subr.mxu0 0.0
  %106 = vmatpush1.msra.mxu0 0.0
  %107 = vmatprep.mubr.f32.mxu0 %v38
  %108 = vmatmul.mubr.f32.gmra.mrb[0].mxu0 %v32
  %v109 = vpop.f32.mrb[0].mxu0
  %v110 = vadd.f32 0.0, %v109
  %v111 = vpop.f32.mrb[0].mxu0
  %112 = vmatprep.mubr.f32.mxu0 %v41
  %113 = vmatmul.mubr.f32.gmra.mrb[0].mxu0 %v34
  %v114 = vpop.f32.mrb[0].mxu0
  %v115 = vadd.f32 0.0, %v114
  %v116 = vpop.f32.mrb[0].mxu0
  %117 = vdwg.mxu0
  %118 = vst [vmem:[%s2] sm:$0xff] %v110
  %119 = vst [vmem:[%s2 + $0x8] sm:$0xff] %v115
  %120 = vadd.xlane.f32.xlu0 %v110
  %v121 = vpop.xlane.xlu0 %120
  %122 = vadd.xlane.f32.xlu0 %v115
  %v123 = vpop.xlane.xlu0 %122
  %vm124 = vcmask 7168
  %125 = vst.msk [vmem:[%s3] sm:$0xff] %vm124, %v121
  %126 = vst.msk [vmem:[%s3 + $0x8] sm:$0xff] %vm124, %v123
  %v127 = vmul.f32 %v110, %v110
  %v128 = vmul.f32 %v115, %v115
  %129 = vadd.xlane.f32.xlu0 %v127
  %v130 = vpop.xlane.xlu0 %129
  %131 = vadd.xlane.f32.xlu0 %v128
  %v132 = vpop.xlane.xlu0 %131
  %133 = vst.msk [vmem:[%s4] sm:$0xff] %vm124, %v130
  %134 = vst.msk [vmem:[%s4 + $0x8] sm:$0xff] %vm124, %v132
  // Predicated region
  $region10: #{cell_stem0_forward.40} parent=0 // pred_check
    _
  $region11: #{cell_stem0_forward.40} parent=0 // pred_check_branch
    %136 = sbr.rel (0) target = $region13
  $region12: #{cell_stem0_forward.40} parent=0 // pred_region
    _
  $region13: #{cell_stem0_forward.40} parent=0 // pred_fallthru
    _
  // Predicated region
  $region14: #{cell_stem0_forward.40} parent=0 // pred_check
    _
  $region15: #{cell_stem0_forward.40} parent=0 // pred_check_branch
    %138 = sbr.rel (0) target = $region17
  $region16: #{cell_stem0_forward.40} parent=0 // pred_region
    _
  $region17: #{cell_stem0_forward.40} parent=0 // pred_fallthru
    _
  // Predicated region
  $region18: #{cell_stem0_forward.40} parent=0 // pred_check
    _
  $region19: #{cell_stem0_forward.40} parent=0 // pred_check_branch
    %140 = sbr.rel (0) target = $region21
  $region20: #{cell_stem0_forward.40} parent=0 // pred_region
    _
  $region21: #{cell_stem0_forward.40} parent=0 // pred_fallthru
    _
  // Predicated region
  $region22: #{cell_stem0_forward.40} parent=0 // pred_check
    _
  $region23: #{cell_stem0_forward.40} parent=0 // pred_check_branch
    %142 = sbr.rel (0) target = $region25
  $region24: #{cell_stem0_forward.40} parent=0 // pred_region
    _
  $region25: #{cell_stem0_forward.40} parent=0 // pred_fallthru
    _
  // Predicated region
  $region26: #{cell_stem0_forward.40} parent=0 // pred_check
    _
  $region27: #{cell_stem0_forward.40} parent=0 // pred_check_branch
    %144 = sbr.rel (0) target = $region29
  $region28: #{cell_stem0_forward.40} parent=0 // pred_region
    _
  $region29: #{cell_stem0_forward.40} parent=0 // pred_fallthru
    _
  // Predicated region
  $region30: #{cell_stem0_forward.40} parent=0 // pred_check
    _
  $region31: #{cell_stem0_forward.40} parent=0 // pred_check_branch
    %146 = sbr.rel (0) target = $region33
  $region32: #{cell_stem0_forward.40} parent=0 // pred_region
    _
  $region33: #{cell_stem0_forward.40} parent=0 // pred_fallthru
    _

</llo_original>
